<compile_context>
chip_gen: v7x
topology: tpu7x:2x2x1
jax: 0.10.0
libtpu: 0.0.40
codegen_flags: <defaults>
</compile_context>

<pallas_src>
import functools
import math

import jax
import jax.numpy as jnp
from jax.experimental import pallas as pl
from jax.experimental.pallas import tpu as pltpu

_ROW_TILE = 256        # activation rows per block
_COL_TILE = 1024       # output-feature columns per block (multiple of 256)
_K_TILE = 1024         # reduction (input-feature) chunk per block (multiple of 256)
_FF_TILE = 512         # feed-forward hidden chunk per grid step (fused FFN kernel)
_LN_EPS = 1e-5         # PyTorch LayerNorm default
_VMEM_LIMIT = 32 * 1024 * 1024


def _round_up(x, m):
    return (x + m - 1) // m * m


def _bf16(v):
    # Trace-time no-op when already bf16 (activations/weights arrive bf16).
    return v if v.dtype == jnp.bfloat16 else v.astype(jnp.bfloat16)


# --------------------------- fused linear kernel ---------------------------- #

def _make_linear_kernel(fuse_relu, fuse_residual, fuse_ln, eps):
    """matmul (+bias) [+ReLU] [+residual] [+LayerNorm], f32 accumulation."""

    def kernel(*refs):
        x_ref, w_ref, b_ref = refs[:3]
        i = 3
        res_ref = g_ref = bt_ref = None
        if fuse_residual:
            res_ref = refs[i]
            i += 1
        if fuse_ln:
            g_ref, bt_ref = refs[i], refs[i + 1]
            i += 2
        o_ref, acc_ref = refs[i], refs[i + 1]

        @pl.when(pl.program_id(2) == 0)
        def _init():
            acc_ref[...] = jnp.zeros_like(acc_ref)

        acc_ref[...] += jnp.dot(_bf16(x_ref[...]), _bf16(w_ref[...]),
                                preferred_element_type=jnp.float32)

        @pl.when(pl.program_id(2) == pl.num_programs(2) - 1)
        def _finalize():
            y = acc_ref[...] + b_ref[...].astype(jnp.float32)
            if fuse_relu:
                y = jnp.maximum(y, 0.0)
            if fuse_residual:
                y = y + res_ref[...].astype(jnp.float32)
            if fuse_ln:
                mu = jnp.mean(y, axis=-1, keepdims=True)
                var = jnp.mean(jnp.square(y - mu), axis=-1, keepdims=True)
                y = (y - mu) * jax.lax.rsqrt(var + eps)
                y = (y * g_ref[...].astype(jnp.float32)
                     + bt_ref[...].astype(jnp.float32))
            o_ref[...] = y.astype(o_ref.dtype)

    return kernel


def fused_linear(x, w, b, *, activation=None, residual=None, ln_scale=None,
                 ln_bias=None, eps=_LN_EPS, out_dtype=jnp.bfloat16):
    """y = x @ w + b, optionally fused with ReLU / residual add / LayerNorm.

    x: (N, K) bf16/f32, w: (K, Out) bf16, b: (Out,) f32.  Shapes must already be
    tile-friendly (rows padded by the caller, weights padded at init) -- no per-call
    padding copies here.  LayerNorm (post-norm) needs the full Out dim per block.
    """
    n, k_dim = x.shape
    k_dim2, out = w.shape
    assert k_dim == k_dim2
    fuse_relu = activation == "relu"
    fuse_residual = residual is not None
    fuse_ln = ln_scale is not None
    if fuse_residual:
        assert residual.shape == (n, out)

    tr = n if n <= _ROW_TILE else _ROW_TILE
    assert n % tr == 0, (n, tr)
    if fuse_ln:
        tc = out                      # LN needs the whole feature row
        # NOTE(v7x): for large embed dims (>=4096) halve tr here to stay within
        # the 64 MiB per-TC VMEM; irrelevant at demo sizes.
    else:
        tc = out if out <= _COL_TILE else _COL_TILE
    assert out % tc == 0, (out, tc)
    tk = k_dim if k_dim <= _K_TILE else _K_TILE
    assert k_dim % tk == 0, (k_dim, tk)

    inputs = [x, w, b.reshape(1, out)]
    in_specs = [
        pl.BlockSpec((tr, tk), lambda i, j, k: (i, k)),
        pl.BlockSpec((tk, tc), lambda i, j, k: (k, j)),
        pl.BlockSpec((1, tc), lambda i, j, k: (0, j)),
    ]
    if fuse_residual:
        inputs.append(residual)
        in_specs.append(pl.BlockSpec((tr, tc), lambda i, j, k: (i, j)))
    if fuse_ln:
        inputs += [ln_scale.reshape(1, out), ln_bias.reshape(1, out)]
        in_specs += [pl.BlockSpec((1, tc), lambda i, j, k: (0, j)),
                     pl.BlockSpec((1, tc), lambda i, j, k: (0, j))]

    grid = (n // tr, out // tc, k_dim // tk)
    kernel = _make_linear_kernel(fuse_relu, fuse_residual, fuse_ln, eps)

    return pl.pallas_call(
        kernel,
        grid_spec=pltpu.PrefetchScalarGridSpec(
            num_scalar_prefetch=0,
            grid=grid,
            in_specs=in_specs,
            out_specs=pl.BlockSpec((tr, tc), lambda i, j, k: (i, j)),
            scratch_shapes=[pltpu.VMEM((tr, tc), jnp.float32)]),
        out_shape=jax.ShapeDtypeStruct((n, out), out_dtype),
        compiler_params=pltpu.CompilerParams(
            dimension_semantics=("parallel", "parallel", "arbitrary"),
            vmem_limit_bytes=_VMEM_LIMIT),
    )(*inputs)


# ------------------------- fused feed-forward kernel ------------------------ #

def _ffn_kernel(x_ref, w1_ref, b1_ref, w2_ref, b2_ref, g_ref, bt_ref,
                o_ref, acc_ref, *, eps):
    """LN(x + (relu(x @ W1 + b1) @ W2 + b2)); hidden dim tiled on grid axis 1.

    The (tr, tf) hidden chunk lives only in registers/VMEM -- the (N, F) hidden
    activation is never written to HBM.
    """
    @pl.when(pl.program_id(1) == 0)
    def _init():
        acc_ref[...] = jnp.zeros_like(acc_ref)

    hidden = jnp.dot(_bf16(x_ref[...]), _bf16(w1_ref[...]),
                     preferred_element_type=jnp.float32)
    hidden = jnp.maximum(hidden + b1_ref[...].astype(jnp.float32), 0.0)
    acc_ref[...] += jnp.dot(hidden.astype(jnp.bfloat16), _bf16(w2_ref[...]),
                            preferred_element_type=jnp.float32)

    @pl.when(pl.program_id(1) == pl.num_programs(1) - 1)
    def _finalize():
        y = (acc_ref[...] + b2_ref[...].astype(jnp.float32)
             + x_ref[...].astype(jnp.float32))          # residual = FFN input
        mu = jnp.mean(y, axis=-1, keepdims=True)
        var = jnp.mean(jnp.square(y - mu), axis=-1, keepdims=True)
        y = (y - mu) * jax.lax.rsqrt(var + eps)
        y = y * g_ref[...].astype(jnp.float32) + bt_ref[...].astype(jnp.float32)
        o_ref[...] = y.astype(o_ref.dtype)


def fused_ffn(x, w1, b1, w2, b2, ln_scale, ln_bias, *, eps=_LN_EPS,
              out_dtype=jnp.bfloat16):
    """x: (N, E) bf16; W1: (E, F); W2: (F, E).  Returns LN2 output, (N, E)."""
    n, e = x.shape
    e2, f = w1.shape
    assert e2 == e and w2.shape == (f, e)

    tr = n if n <= _ROW_TILE else _ROW_TILE
    assert n % tr == 0, (n, tr)
    tf = f if f <= _FF_TILE else _FF_TILE
    assert f % tf == 0, (f, tf)

    grid = (n // tr, f // tf)
    return pl.pallas_call(
        functools.partial(_ffn_kernel, eps=eps),
        grid_spec=pltpu.PrefetchScalarGridSpec(
            num_scalar_prefetch=0,
            grid=grid,
            in_specs=[
                pl.BlockSpec((tr, e), lambda i, j: (i, 0)),   # x (resident over j)
                pl.BlockSpec((e, tf), lambda i, j: (0, j)),   # W1 column chunk
                pl.BlockSpec((1, tf), lambda i, j: (0, j)),   # b1 chunk
                pl.BlockSpec((tf, e), lambda i, j: (j, 0)),   # W2 row chunk
                pl.BlockSpec((1, e), lambda i, j: (0, 0)),    # b2
                pl.BlockSpec((1, e), lambda i, j: (0, 0)),    # LN gamma
                pl.BlockSpec((1, e), lambda i, j: (0, 0)),    # LN beta
            ],
            out_specs=pl.BlockSpec((tr, e), lambda i, j: (i, 0)),
            scratch_shapes=[pltpu.VMEM((tr, e), jnp.float32)]),
        out_shape=jax.ShapeDtypeStruct((n, e), out_dtype),
        compiler_params=pltpu.CompilerParams(
            dimension_semantics=("parallel", "arbitrary"),
            vmem_limit_bytes=_VMEM_LIMIT),
    )(x, w1, b1.reshape(1, f), w2, b2.reshape(1, e),
      ln_scale.reshape(1, e), ln_bias.reshape(1, e))


# ------------------------------ attention kernel ---------------------------- #

def _mha_kernel(q_ref, k_ref, v_ref, o_ref, *, scale, num_heads):
    # refs are (S, H, D) slices for one batch element; heads are read per-head
    # from the refs (no whole-tensor load), outputs are concatenated and stored
    # once as a lane-dense (S, E) block.
    outs = []
    for hi in range(num_heads):
        # fold 1/sqrt(D) into q (S x D work instead of S x S)
        qh = (q_ref[:, hi, :].astype(jnp.float32) * scale).astype(jnp.bfloat16)
        kh = _bf16(k_ref[:, hi, :])
        vh = _bf16(v_ref[:, hi, :])
        # QK^T via dot_general contraction on D (no explicit transpose copy).
        s = jax.lax.dot_general(qh, kh, (((1,), (1,)), ((), ())),
                                preferred_element_type=jnp.float32)
        m = jnp.max(s, axis=-1, keepdims=True)
        p = jnp.exp(s - m)
        denom = jnp.sum(p, axis=-1, keepdims=True)
        p = p * pl.reciprocal(denom, approx=True)        # EUP reciprocal
        outs.append(jax.lax.dot_general(p.astype(jnp.bfloat16), vh,
                                        (((1,), (0,)), ((), ())),
                                        preferred_element_type=jnp.float32))
    o_ref[...] = jnp.concatenate(outs, axis=-1).astype(o_ref.dtype)


def attention(qkv, *, num_heads, out_dtype=jnp.bfloat16):
    """qkv: (B, S, 3, H, D) bf16 -> attention output (B, S, H*D) bf16.

    Q/K/V are read straight from the in_proj output layout via squeezed
    BlockSpecs -- no HBM-level transpose between kernels.
    """
    b, s, _, nh, d = qkv.shape
    assert nh == num_heads
    e = nh * d
    scale = 1.0 / math.sqrt(d)

    def qkv_spec(which):
        return pl.BlockSpec((None, s, None, nh, d),
                            lambda bi, _w=which: (bi, 0, _w, 0, 0))

    return pl.pallas_call(
        functools.partial(_mha_kernel, scale=scale, num_heads=nh),
        grid=(b,),
        in_specs=[qkv_spec(0), qkv_spec(1), qkv_spec(2)],
        out_specs=pl.BlockSpec((None, s, e), lambda bi: (bi, 0, 0)),
        out_shape=jax.ShapeDtypeStruct((b, s, e), out_dtype),
        compiler_params=pltpu.CompilerParams(
            dimension_semantics=("parallel",),
            vmem_limit_bytes=_VMEM_LIMIT),
    )(qkv, qkv, qkv)


# --------------------------- parameters & forward --------------------------- #

def _dense_init(key, fan_in, fan_out, pad_out=None, w_dtype=jnp.bfloat16):
    """PyTorch nn.Linear-style uniform init; weight stored (in, out), bf16 for MXU.

    pad_out pre-pads the output features at init time (lane-dense classifier)."""
    kw, kb = jax.random.split(key)
    bound = 1.0 / math.sqrt(fan_in)
    w = jax.random.uniform(kw, (fan_in, fan_out), jnp.float32, -bound, bound)
    b = jax.random.uniform(kb, (fan_out,), jnp.float32, -bound, bound)
    if pad_out is not None and pad_out > fan_out:
        w = jnp.pad(w, ((0, 0), (0, pad_out - fan_out)))
        b = jnp.pad(b, (0, pad_out - fan_out))
    return w.astype(w_dtype), b


def init_params(key, input_dim, embed_dim, num_classes, num_layers,
                dim_feedforward=2048):
    keys = jax.random.split(key, 2 + num_layers)
    params = {
        "embed": _dense_init(keys[0], input_dim, embed_dim),
        "classifier": _dense_init(keys[1], embed_dim, num_classes,
                                  pad_out=_round_up(num_classes, 128)),
        "layers": [],
    }
    for li in range(num_layers):
        lk = jax.random.split(keys[2 + li], 4)
        in_w, in_b = _dense_init(lk[0], embed_dim, 3 * embed_dim)
        out_w, out_b = _dense_init(lk[1], embed_dim, embed_dim)
        l1_w, l1_b = _dense_init(lk[2], embed_dim, dim_feedforward)
        l2_w, l2_b = _dense_init(lk[3], dim_feedforward, embed_dim)
        params["layers"].append({
            "in_proj_w": in_w, "in_proj_b": in_b,
            "out_proj_w": out_w, "out_proj_b": out_b,
            "ln1_g": jnp.ones((embed_dim,), jnp.float32),
            "ln1_b": jnp.zeros((embed_dim,), jnp.float32),
            "lin1_w": l1_w, "lin1_b": l1_b,
            "lin2_w": l2_w, "lin2_b": l2_b,
            "ln2_g": jnp.ones((embed_dim,), jnp.float32),
            "ln2_b": jnp.zeros((embed_dim,), jnp.float32),
        })
    return params


def transformer_forward(params, x, *, num_heads, num_classes):
    # x: (S, B, input_dim)  (seq-major, torch batch_first=False convention)
    s, b, in_dim = x.shape
    e = params["embed"][0].shape[1]
    d = e // num_heads

    # Internal layout is batch-major; pad the batch once so the flattened row
    # count divides the row tile.  All padding/slicing is hoisted out of the
    # per-layer loop.
    b_pad = b
    if b_pad * s > _ROW_TILE:
        while (b_pad * s) % _ROW_TILE:
            b_pad += 1
    xb = jnp.transpose(x, (1, 0, 2))
    if b_pad != b:
        xb = jnp.pad(xb, ((0, b_pad - b), (0, 0), (0, 0)))
    n = b_pad * s

    h = fused_linear(xb.reshape(n, in_dim), *params["embed"])          # (N, E) bf16

    for lp in params["layers"]:
        # ---- self attention ----
        qkv = fused_linear(h, lp["in_proj_w"], lp["in_proj_b"])        # (N, 3E) bf16
        attn = attention(qkv.reshape(b_pad, s, 3, num_heads, d),
                         num_heads=num_heads)                          # (B, S, E) bf16
        # out_proj + residual add + LayerNorm fused (post-norm)
        h = fused_linear(attn.reshape(n, e), lp["out_proj_w"], lp["out_proj_b"],
                         residual=h, ln_scale=lp["ln1_g"], ln_bias=lp["ln1_b"])
        # ---- feed-forward: lin1 + ReLU + lin2 + residual + LN in ONE kernel ----
        h = fused_ffn(h, lp["lin1_w"], lp["lin1_b"], lp["lin2_w"], lp["lin2_b"],
                      lp["ln2_g"], lp["ln2_b"])

    # classifier: weights pre-padded to 128 lanes at init; final output in f32
    out = fused_linear(h, *params["classifier"], out_dtype=jnp.float32)
    out = out.reshape(b_pad, s, -1)[:b, :, :num_classes]
    return jnp.transpose(out, (1, 0, 2))                               # (S, B, C)


# ----------------------------------- main ----------------------------------- #

if __name__ == "__main__":
    # Small, module-consistent shapes.
    input_dim, embed_dim, num_classes = 16, 32, 10
    num_heads, num_encoder_layers = 4, 2          # constructor args; FFN default 2048
    seq_len, batch = 8, 2

    key = jax.random.PRNGKey(0)
    pkey, xkey = jax.random.split(key)
    params = init_params(pkey, input_dim, embed_dim, num_classes,
                         num_encoder_layers, dim_feedforward=2048)
    x = jax.random.normal(xkey, (seq_len, batch, input_dim), jnp.float32)

    fwd = jax.jit(functools.partial(transformer_forward,
                                    num_heads=num_heads, num_classes=num_classes))
    out = fwd(params, x)
    jax.block_until_ready(out)

    assert out.shape == (seq_len, batch, num_classes), out.shape
    assert bool(jnp.all(jnp.isfinite(out)))
    print("KERNEL_OK")
</pallas_src>

<mosaic_0001>
module attributes {stable_mosaic.version = 11 : i64} {
  func.func @kernel(%arg0: i32, %arg1: i32, %arg2: i32, %arg3: memref<16x32xbf16, #tpu.memory_space<vmem>>, %arg4: memref<32x96xbf16, #tpu.memory_space<vmem>>, %arg5: memref<1x96xf32, #tpu.memory_space<vmem>>, %arg6: memref<16x96xbf16, #tpu.memory_space<vmem>>, %arg7: memref<16x96xf32, #tpu.memory_space<vmem>>) attributes {dimension_semantics = [#tpu.dimension_semantics<parallel>, #tpu.dimension_semantics<parallel>, #tpu.dimension_semantics<arbitrary>], iteration_bounds = array<i64: 1, 1, 1>, scalar_prefetch = 0 : i64, scratch_operands = 1 : i64, tpu.core_type = #tpu.core_type<tc>, window_params = [{transform_indices = @transform_0, window_bounds = array<i64: 16, 32>}, {transform_indices = @transform_1, window_bounds = array<i64: 32, 96>}, {transform_indices = @transform_2, window_bounds = array<i64: 1, 96>}, {transform_indices = @transform_3, window_bounds = array<i64: 16, 96>}]} {
    %c0_i32 = arith.constant 0 : i32
    %0 = arith.cmpi eq, %arg2, %c0_i32 : i32
    %1 = arith.extui %0 : i1 to i32
    %c0_i32_0 = arith.constant 0 : i32
    %2 = arith.cmpi ne, %1, %c0_i32_0 : i32
    scf.if %2 {
      %cst_10 = arith.constant 0.000000e+00 : f32
      %12 = vector.broadcast %cst_10 : f32 to vector<16x96xf32>
      %c0_11 = arith.constant 0 : index
      %c0_12 = arith.constant 0 : index
      %13 = vector.load %arg7[%c0_11, %c0_12] : memref<16x96xf32, #tpu.memory_space<vmem>>, vector<16x96xf32>
      tpu.vector_store %arg7[%c0_11, %c0_12], %12 {strides = array<i32>} : memref<16x96xf32, #tpu.memory_space<vmem>>, vector<16x96xf32>,
    } else {
    }
    %c0 = arith.constant 0 : index
    %c0_1 = arith.constant 0 : index
    %3 = vector.load %arg7[%c0, %c0_1] : memref<16x96xf32, #tpu.memory_space<vmem>>, vector<16x96xf32>
    %c0_2 = arith.constant 0 : index
    %c0_3 = arith.constant 0 : index
    %4 = vector.load %arg3[%c0_2, %c0_3] : memref<16x32xbf16, #tpu.memory_space<vmem>>, vector<16x32xbf16>
    %c0_4 = arith.constant 0 : index
    %c0_5 = arith.constant 0 : index
    %5 = vector.load %arg4[%c0_4, %c0_5] : memref<32x96xbf16, #tpu.memory_space<vmem>>, vector<32x96xbf16>
    %cst = arith.constant dense<0.000000e+00> : vector<16x96xf32>
    %6 = tpu.matmul %4, %5, %cst {dimension_numbers = #tpu.dot_dimension_numbers<[1], [0], [0], [1], [0, 0, 1, 1], [], []>} : vector<16x32xbf16>, vector<32x96xbf16>, vector<16x96xf32> -> vector<16x96xf32>
    %7 = arith.addf %3, %6 : vector<16x96xf32>
    %c0_6 = arith.constant 0 : index
    %c0_7 = arith.constant 0 : index
    %8 = vector.load %arg7[%c0_6, %c0_7] : memref<16x96xf32, #tpu.memory_space<vmem>>, vector<16x96xf32>
    tpu.vector_store %arg7[%c0_6, %c0_7], %7 {strides = array<i32>} : memref<16x96xf32, #tpu.memory_space<vmem>>, vector<16x96xf32>,
    %c0_i32_8 = arith.constant 0 : i32
    %9 = arith.cmpi eq, %arg2, %c0_i32_8 : i32
    %10 = arith.extui %9 : i1 to i32
    %c0_i32_9 = arith.constant 0 : i32
    %11 = arith.cmpi ne, %10, %c0_i32_9 : i32
    scf.if %11 {
      %c0_10 = arith.constant 0 : index
      %c0_11 = arith.constant 0 : index
      %12 = vector.load %arg7[%c0_10, %c0_11] : memref<16x96xf32, #tpu.memory_space<vmem>>, vector<16x96xf32>
      %c0_12 = arith.constant 0 : index
      %c0_13 = arith.constant 0 : index
      %13 = vector.load %arg5[%c0_12, %c0_13] : memref<1x96xf32, #tpu.memory_space<vmem>>, vector<1x96xf32>
      %14 = vector.broadcast %13 : vector<1x96xf32> to vector<16x96xf32>
      %15 = arith.addf %12, %14 : vector<16x96xf32>
      %16 = arith.truncf %15 : vector<16x96xf32> to vector<16x96xbf16>
      %c0_14 = arith.constant 0 : index
      %c0_15 = arith.constant 0 : index
      %17 = vector.load %arg6[%c0_14, %c0_15] : memref<16x96xbf16, #tpu.memory_space<vmem>>, vector<16x96xbf16>
      tpu.vector_store %arg6[%c0_14, %c0_15], %16 {strides = array<i32>} : memref<16x96xbf16, #tpu.memory_space<vmem>>, vector<16x96xbf16>,
    } else {
    }
    return
  }
  func.func @transform_0(%arg0: i32, %arg1: i32, %arg2: i32) -> (i32, i32) {
    %c0_i32 = arith.constant 0 : i32
    return %arg0, %arg2 : i32, i32
  }
  func.func @transform_1(%arg0: i32, %arg1: i32, %arg2: i32) -> (i32, i32) {
    %c0_i32 = arith.constant 0 : i32
    return %arg2, %arg1 : i32, i32
  }
  func.func @transform_2(%arg0: i32, %arg1: i32, %arg2: i32) -> (i32, i32) {
    %c0_i32 = arith.constant 0 : i32
    %c0_i32_0 = arith.constant 0 : i32
    return %c0_i32, %arg1 : i32, i32
  }
  func.func @transform_3(%arg0: i32, %arg1: i32, %arg2: i32) -> (i32, i32) {
    %c0_i32 = arith.constant 0 : i32
    return %arg0, %arg1 : i32, i32
  }
}

module attributes {stable_mosaic.version = 11 : i64} {
  func.func @kernel(%arg0: i32, %arg1: i32, %arg2: i32, %arg3: memref<16x16xf32, #tpu.memory_space<vmem>>, %arg4: memref<16x32xbf16, #tpu.memory_space<vmem>>, %arg5: memref<1x32xf32, #tpu.memory_space<vmem>>, %arg6: memref<16x32xbf16, #tpu.memory_space<vmem>>, %arg7: memref<16x32xf32, #tpu.memory_space<vmem>>) attributes {dimension_semantics = [#tpu.dimension_semantics<parallel>, #tpu.dimension_semantics<parallel>, #tpu.dimension_semantics<arbitrary>], iteration_bounds = array<i64: 1, 1, 1>, scalar_prefetch = 0 : i64, scratch_operands = 1 : i64, tpu.core_type = #tpu.core_type<tc>, window_params = [{transform_indices = @transform_0, window_bounds = array<i64: 16, 16>}, {transform_indices = @transform_1, window_bounds = array<i64: 16, 32>}, {transform_indices = @transform_2, window_bounds = array<i64: 1, 32>}, {transform_indices = @transform_3, window_bounds = array<i64: 16, 32>}]} {
    %c0_i32 = arith.constant 0 : i32
    %0 = arith.cmpi eq, %arg2, %c0_i32 : i32
    %1 = arith.extui %0 : i1 to i32
    %c0_i32_0 = arith.constant 0 : i32
    %2 = arith.cmpi ne, %1, %c0_i32_0 : i32
    scf.if %2 {
      %cst_10 = arith.constant 0.000000e+00 : f32
      %13 = vector.broadcast %cst_10 : f32 to vector<16x32xf32>
      %c0_11 = arith.constant 0 : index
      %c0_12 = arith.constant 0 : index
      %14 = vector.load %arg7[%c0_11, %c0_12] : memref<16x32xf32, #tpu.memory_space<vmem>>, vector<16x32xf32>
      tpu.vector_store %arg7[%c0_11, %c0_12], %13 {strides = array<i32>} : memref<16x32xf32, #tpu.memory_space<vmem>>, vector<16x32xf32>,
    } else {
    }
    %c0 = arith.constant 0 : index
    %c0_1 = arith.constant 0 : index
    %3 = vector.load %arg7[%c0, %c0_1] : memref<16x32xf32, #tpu.memory_space<vmem>>, vector<16x32xf32>
    %c0_2 = arith.constant 0 : index
    %c0_3 = arith.constant 0 : index
    %4 = vector.load %arg3[%c0_2, %c0_3] : memref<16x16xf32, #tpu.memory_space<vmem>>, vector<16x16xf32>
    %5 = arith.truncf %4 : vector<16x16xf32> to vector<16x16xbf16>
    %c0_4 = arith.constant 0 : index
    %c0_5 = arith.constant 0 : index
    %6 = vector.load %arg4[%c0_4, %c0_5] : memref<16x32xbf16, #tpu.memory_space<vmem>>, vector<16x32xbf16>
    %cst = arith.constant dense<0.000000e+00> : vector<16x32xf32>
    %7 = tpu.matmul %5, %6, %cst {dimension_numbers = #tpu.dot_dimension_numbers<[1], [0], [0], [1], [0, 0, 1, 1], [], []>} : vector<16x16xbf16>, vector<16x32xbf16>, vector<16x32xf32> -> vector<16x32xf32>
    %8 = arith.addf %3, %7 : vector<16x32xf32>
    %c0_6 = arith.constant 0 : index
    %c0_7 = arith.constant 0 : index
    %9 = vector.load %arg7[%c0_6, %c0_7] : memref<16x32xf32, #tpu.memory_space<vmem>>, vector<16x32xf32>
    tpu.vector_store %arg7[%c0_6, %c0_7], %8 {strides = array<i32>} : memref<16x32xf32, #tpu.memory_space<vmem>>, vector<16x32xf32>,
    %c0_i32_8 = arith.constant 0 : i32
    %10 = arith.cmpi eq, %arg2, %c0_i32_8 : i32
    %11 = arith.extui %10 : i1 to i32
    %c0_i32_9 = arith.constant 0 : i32
    %12 = arith.cmpi ne, %11, %c0_i32_9 : i32
    scf.if %12 {
      %c0_10 = arith.constant 0 : index
      %c0_11 = arith.constant 0 : index
      %13 = vector.load %arg7[%c0_10, %c0_11] : memref<16x32xf32, #tpu.memory_space<vmem>>, vector<16x32xf32>
      %c0_12 = arith.constant 0 : index
      %c0_13 = arith.constant 0 : index
      %14 = vector.load %arg5[%c0_12, %c0_13] : memref<1x32xf32, #tpu.memory_space<vmem>>, vector<1x32xf32>
      %15 = vector.broadcast %14 : vector<1x32xf32> to vector<16x32xf32>
      %16 = arith.addf %13, %15 : vector<16x32xf32>
      %17 = arith.truncf %16 : vector<16x32xf32> to vector<16x32xbf16>
      %c0_14 = arith.constant 0 : index
      %c0_15 = arith.constant 0 : index
      %18 = vector.load %arg6[%c0_14, %c0_15] : memref<16x32xbf16, #tpu.memory_space<vmem>>, vector<16x32xbf16>
      tpu.vector_store %arg6[%c0_14, %c0_15], %17 {strides = array<i32>} : memref<16x32xbf16, #tpu.memory_space<vmem>>, vector<16x32xbf16>,
    } else {
    }
    return
  }
  func.func @transform_0(%arg0: i32, %arg1: i32, %arg2: i32) -> (i32, i32) {
    %c0_i32 = arith.constant 0 : i32
    return %arg0, %arg2 : i32, i32
  }
  func.func @transform_1(%arg0: i32, %arg1: i32, %arg2: i32) -> (i32, i32) {
    %c0_i32 = arith.constant 0 : i32
    return %arg2, %arg1 : i32, i32
  }
  func.func @transform_2(%arg0: i32, %arg1: i32, %arg2: i32) -> (i32, i32) {
    %c0_i32 = arith.constant 0 : i32
    %c0_i32_0 = arith.constant 0 : i32
    return %c0_i32, %arg1 : i32, i32
  }
  func.func @transform_3(%arg0: i32, %arg1: i32, %arg2: i32) -> (i32, i32) {
    %c0_i32 = arith.constant 0 : i32
    return %arg0, %arg1 : i32, i32
  }
}

module attributes {stable_mosaic.version = 11 : i64} {
  func.func @kernel(%arg0: i32, %arg1: i32, %arg2: i32, %arg3: memref<16x32xbf16, #tpu.memory_space<vmem>>, %arg4: memref<32x32xbf16, #tpu.memory_space<vmem>>, %arg5: memref<1x32xf32, #tpu.memory_space<vmem>>, %arg6: memref<16x32xbf16, #tpu.memory_space<vmem>>, %arg7: memref<1x32xf32, #tpu.memory_space<vmem>>, %arg8: memref<1x32xf32, #tpu.memory_space<vmem>>, %arg9: memref<16x32xbf16, #tpu.memory_space<vmem>>, %arg10: memref<16x32xf32, #tpu.memory_space<vmem>>) attributes {dimension_semantics = [#tpu.dimension_semantics<parallel>, #tpu.dimension_semantics<parallel>, #tpu.dimension_semantics<arbitrary>], iteration_bounds = array<i64: 1, 1, 1>, scalar_prefetch = 0 : i64, scratch_operands = 1 : i64, tpu.core_type = #tpu.core_type<tc>, window_params = [{transform_indices = @transform_0, window_bounds = array<i64: 16, 32>}, {transform_indices = @transform_1, window_bounds = array<i64: 32, 32>}, {transform_indices = @transform_2, window_bounds = array<i64: 1, 32>}, {transform_indices = @transform_3, window_bounds = array<i64: 16, 32>}, {transform_indices = @transform_4, window_bounds = array<i64: 1, 32>}, {transform_indices = @transform_5, window_bounds = array<i64: 1, 32>}, {transform_indices = @transform_6, window_bounds = array<i64: 16, 32>}]} {
    %c0_i32 = arith.constant 0 : i32
    %0 = arith.cmpi eq, %arg2, %c0_i32 : i32
    %1 = arith.extui %0 : i1 to i32
    %c0_i32_0 = arith.constant 0 : i32
    %2 = arith.cmpi ne, %1, %c0_i32_0 : i32
    scf.if %2 {
      %cst_10 = arith.constant 0.000000e+00 : f32
      %12 = vector.broadcast %cst_10 : f32 to vector<16x32xf32>
      %c0_11 = arith.constant 0 : index
      %c0_12 = arith.constant 0 : index
      %13 = vector.load %arg10[%c0_11, %c0_12] : memref<16x32xf32, #tpu.memory_space<vmem>>, vector<16x32xf32>
      tpu.vector_store %arg10[%c0_11, %c0_12], %12 {strides = array<i32>} : memref<16x32xf32, #tpu.memory_space<vmem>>, vector<16x32xf32>,
    } else {
    }
    %c0 = arith.constant 0 : index
    %c0_1 = arith.constant 0 : index
    %3 = vector.load %arg10[%c0, %c0_1] : memref<16x32xf32, #tpu.memory_space<vmem>>, vector<16x32xf32>
    %c0_2 = arith.constant 0 : index
    %c0_3 = arith.constant 0 : index
    %4 = vector.load %arg3[%c0_2, %c0_3] : memref<16x32xbf16, #tpu.memory_space<vmem>>, vector<16x32xbf16>
    %c0_4 = arith.constant 0 : index
    %c0_5 = arith.constant 0 : index
    %5 = vector.load %arg4[%c0_4, %c0_5] : memref<32x32xbf16, #tpu.memory_space<vmem>>, vector<32x32xbf16>
    %cst = arith.constant dense<0.000000e+00> : vector<16x32xf32>
    %6 = tpu.matmul %4, %5, %cst {dimension_numbers = #tpu.dot_dimension_numbers<[1], [0], [0], [1], [0, 0, 1, 1], [], []>} : vector<16x32xbf16>, vector<32x32xbf16>, vector<16x32xf32> -> vector<16x32xf32>
    %7 = arith.addf %3, %6 : vector<16x32xf32>
    %c0_6 = arith.constant 0 : index
    %c0_7 = arith.constant 0 : index
    %8 = vector.load %arg10[%c0_6, %c0_7] : memref<16x32xf32, #tpu.memory_space<vmem>>, vector<16x32xf32>
    tpu.vector_store %arg10[%c0_6, %c0_7], %7 {strides = array<i32>} : memref<16x32xf32, #tpu.memory_space<vmem>>, vector<16x32xf32>,
    %c0_i32_8 = arith.constant 0 : i32
    %9 = arith.cmpi eq, %arg2, %c0_i32_8 : i32
    %10 = arith.extui %9 : i1 to i32
    %c0_i32_9 = arith.constant 0 : i32
    %11 = arith.cmpi ne, %10, %c0_i32_9 : i32
    scf.if %11 {
      %c0_10 = arith.constant 0 : index
      %c0_11 = arith.constant 0 : index
      %12 = vector.load %arg10[%c0_10, %c0_11] : memref<16x32xf32, #tpu.memory_space<vmem>>, vector<16x32xf32>
      %c0_12 = arith.constant 0 : index
      %c0_13 = arith.constant 0 : index
      %13 = vector.load %arg5[%c0_12, %c0_13] : memref<1x32xf32, #tpu.memory_space<vmem>>, vector<1x32xf32>
      %14 = vector.broadcast %13 : vector<1x32xf32> to vector<16x32xf32>
      %15 = arith.addf %12, %14 : vector<16x32xf32>
      %c0_14 = arith.constant 0 : index
      %c0_15 = arith.constant 0 : index
      %16 = vector.load %arg6[%c0_14, %c0_15] : memref<16x32xbf16, #tpu.memory_space<vmem>>, vector<16x32xbf16>
      %17 = arith.extf %16 : vector<16x32xbf16> to vector<16x32xf32>
      %18 = arith.addf %15, %17 : vector<16x32xf32>
      %cst_16 = arith.constant dense<0.000000e+00> : vector<16xf32>
      %19 = vector.multi_reduction <add>, %18, %cst_16 [1] : vector<16x32xf32> to vector<16xf32>
      %20 = vector.shape_cast %19 : vector<16xf32> to vector<16x1xf32>
      %cst_17 = arith.constant 3.200000e+01 : f32
      %21 = vector.broadcast %cst_17 : f32 to vector<16x1xf32>
      %22 = arith.divf %20, %21 : vector<16x1xf32>
      %23 = vector.broadcast %22 : vector<16x1xf32> to vector<16x32xf32>
      %24 = arith.subf %18, %23 : vector<16x32xf32>
      %25 = arith.mulf %24, %24 : vector<16x32xf32>
      %cst_18 = arith.constant dense<0.000000e+00> : vector<16xf32>
      %26 = vector.multi_reduction <add>, %25, %cst_18 [1] : vector<16x32xf32> to vector<16xf32>
      %27 = vector.shape_cast %26 : vector<16xf32> to vector<16x1xf32>
      %cst_19 = arith.constant 3.200000e+01 : f32
      %28 = vector.broadcast %cst_19 : f32 to vector<16x1xf32>
      %29 = arith.divf %27, %28 : vector<16x1xf32>
      %30 = vector.broadcast %22 : vector<16x1xf32> to vector<16x32xf32>
      %31 = arith.subf %18, %30 : vector<16x32xf32>
      %cst_20 = arith.constant 9.99999974E-6 : f32
      %32 = vector.broadcast %cst_20 : f32 to vector<16x1xf32>
      %33 = arith.addf %29, %32 : vector<16x1xf32>
      %34 = math.rsqrt %33 : vector<16x1xf32>
      %35 = vector.broadcast %34 : vector<16x1xf32> to vector<16x32xf32>
      %36 = arith.mulf %31, %35 : vector<16x32xf32>
      %c0_21 = arith.constant 0 : index
      %c0_22 = arith.constant 0 : index
      %37 = vector.load %arg7[%c0_21, %c0_22] : memref<1x32xf32, #tpu.memory_space<vmem>>, vector<1x32xf32>
      %38 = vector.broadcast %37 : vector<1x32xf32> to vector<16x32xf32>
      %39 = arith.mulf %36, %38 : vector<16x32xf32>
      %c0_23 = arith.constant 0 : index
      %c0_24 = arith.constant 0 : index
      %40 = vector.load %arg8[%c0_23, %c0_24] : memref<1x32xf32, #tpu.memory_space<vmem>>, vector<1x32xf32>
      %41 = vector.broadcast %40 : vector<1x32xf32> to vector<16x32xf32>
      %42 = arith.addf %39, %41 : vector<16x32xf32>
      %43 = arith.truncf %42 : vector<16x32xf32> to vector<16x32xbf16>
      %c0_25 = arith.constant 0 : index
      %c0_26 = arith.constant 0 : index
      %44 = vector.load %arg9[%c0_25, %c0_26] : memref<16x32xbf16, #tpu.memory_space<vmem>>, vector<16x32xbf16>
      tpu.vector_store %arg9[%c0_25, %c0_26], %43 {strides = array<i32>} : memref<16x32xbf16, #tpu.memory_space<vmem>>, vector<16x32xbf16>,
    } else {
    }
    return
  }
  func.func @transform_0(%arg0: i32, %arg1: i32, %arg2: i32) -> (i32, i32) {
    %c0_i32 = arith.constant 0 : i32
    return %arg0, %arg2 : i32, i32
  }
  func.func @transform_1(%arg0: i32, %arg1: i32, %arg2: i32) -> (i32, i32) {
    %c0_i32 = arith.constant 0 : i32
    return %arg2, %arg1 : i32, i32
  }
  func.func @transform_2(%arg0: i32, %arg1: i32, %arg2: i32) -> (i32, i32) {
    %c0_i32 = arith.constant 0 : i32
    %c0_i32_0 = arith.constant 0 : i32
    return %c0_i32, %arg1 : i32, i32
  }
  func.func @transform_3(%arg0: i32, %arg1: i32, %arg2: i32) -> (i32, i32) {
    %c0_i32 = arith.constant 0 : i32
    return %arg0, %arg1 : i32, i32
  }
  func.func @transform_4(%arg0: i32, %arg1: i32, %arg2: i32) -> (i32, i32) {
    %c0_i32 = arith.constant 0 : i32
    %c0_i32_0 = arith.constant 0 : i32
    return %c0_i32, %arg1 : i32, i32
  }
  func.func @transform_5(%arg0: i32, %arg1: i32, %arg2: i32) -> (i32, i32) {
    %c0_i32 = arith.constant 0 : i32
    %c0_i32_0 = arith.constant 0 : i32
    return %c0_i32, %arg1 : i32, i32
  }
  func.func @transform_6(%arg0: i32, %arg1: i32, %arg2: i32) -> (i32, i32) {
    %c0_i32 = arith.constant 0 : i32
    return %arg0, %arg1 : i32, i32
  }
}

module attributes {stable_mosaic.version = 11 : i64} {
  func.func @_mha_kernel(%arg0: i32, %arg1: memref<1x8x1x4x8xbf16, #tpu.memory_space<vmem>>, %arg2: memref<1x8x1x4x8xbf16, #tpu.memory_space<vmem>>, %arg3: memref<1x8x1x4x8xbf16, #tpu.memory_space<vmem>>, %arg4: memref<1x8x32xbf16, #tpu.memory_space<vmem>>) attributes {dimension_semantics = [#tpu.dimension_semantics<parallel>], iteration_bounds = array<i64: 2>, scalar_prefetch = 0 : i64, scratch_operands = 0 : i64, tpu.core_type = #tpu.core_type<tc>, window_params = [{transform_indices = @transform_0, window_bounds = array<i64: 1, 8, 1, 4, 8>}, {transform_indices = @transform_1, window_bounds = array<i64: 1, 8, 1, 4, 8>}, {transform_indices = @transform_2, window_bounds = array<i64: 1, 8, 1, 4, 8>}, {transform_indices = @transform_3, window_bounds = array<i64: 1, 8, 32>}]} {
    %c0 = arith.constant 0 : index
    %c0_0 = arith.constant 0 : index
    %c0_1 = arith.constant 0 : index
    %c0_2 = arith.constant 0 : index
    %c0_3 = arith.constant 0 : index
    %0 = vector.load %arg1[%c0, %c0_0, %c0_1, %c0_2, %c0_3] : memref<1x8x1x4x8xbf16, #tpu.memory_space<vmem>>, vector<1x8x1x1x8xbf16>
    %1 = vector.shape_cast %0 : vector<1x8x1x1x8xbf16> to vector<8x8xbf16>
    %2 = arith.extf %1 : vector<8x8xbf16> to vector<8x8xf32>
    %cst = arith.constant 0.353553385 : f32
    %3 = vector.broadcast %cst : f32 to vector<8x8xf32>
    %4 = arith.mulf %2, %3 : vector<8x8xf32>
    %5 = arith.truncf %4 : vector<8x8xf32> to vector<8x8xbf16>
    %c0_4 = arith.constant 0 : index
    %c0_5 = arith.constant 0 : index
    %c0_6 = arith.constant 0 : index
    %c0_7 = arith.constant 0 : index
    %c0_8 = arith.constant 0 : index
    %6 = vector.load %arg2[%c0_4, %c0_5, %c0_6, %c0_7, %c0_8] : memref<1x8x1x4x8xbf16, #tpu.memory_space<vmem>>, vector<1x8x1x1x8xbf16>
    %7 = vector.shape_cast %6 : vector<1x8x1x1x8xbf16> to vector<8x8xbf16>
    %c0_9 = arith.constant 0 : index
    %c0_10 = arith.constant 0 : index
    %c0_11 = arith.constant 0 : index
    %c0_12 = arith.constant 0 : index
    %c0_13 = arith.constant 0 : index
    %8 = vector.load %arg3[%c0_9, %c0_10, %c0_11, %c0_12, %c0_13] : memref<1x8x1x4x8xbf16, #tpu.memory_space<vmem>>, vector<1x8x1x1x8xbf16>
    %9 = vector.shape_cast %8 : vector<1x8x1x1x8xbf16> to vector<8x8xbf16>
    %cst_14 = arith.constant dense<0.000000e+00> : vector<8x8xf32>
    %10 = tpu.matmul %5, %7, %cst_14 {dimension_numbers = #tpu.dot_dimension_numbers<[1], [1], [0], [0], [0, 0, 1, 0], [], []>} : vector<8x8xbf16>, vector<8x8xbf16>, vector<8x8xf32> -> vector<8x8xf32>
    %cst_15 = arith.constant dense<0xFF800000> : vector<8xf32>
    %11 = vector.multi_reduction <maximumf>, %10, %cst_15 [1] : vector<8x8xf32> to vector<8xf32>
    %12 = vector.shape_cast %11 : vector<8xf32> to vector<8x1xf32>
    %13 = vector.broadcast %12 : vector<8x1xf32> to vector<8x8xf32>
    %14 = arith.subf %10, %13 : vector<8x8xf32>
    %15 = math.exp %14 : vector<8x8xf32>
    %cst_16 = arith.constant dense<0.000000e+00> : vector<8xf32>
    %16 = vector.multi_reduction <add>, %15, %cst_16 [1] : vector<8x8xf32> to vector<8xf32>
    %17 = vector.shape_cast %16 : vector<8xf32> to vector<8x1xf32>
    %18 = tpu.reciprocal %17 {approx = true} : vector<8x1xf32> -> vector<8x1xf32>
    %19 = vector.broadcast %18 : vector<8x1xf32> to vector<8x8xf32>
    %20 = arith.mulf %15, %19 : vector<8x8xf32>
    %21 = arith.truncf %20 : vector<8x8xf32> to vector<8x8xbf16>
    %cst_17 = arith.constant dense<0.000000e+00> : vector<8x8xf32>
    %22 = tpu.matmul %21, %9, %cst_17 {dimension_numbers = #tpu.dot_dimension_numbers<[1], [0], [0], [1], [0, 0, 1, 1], [], []>} : vector<8x8xbf16>, vector<8x8xbf16>, vector<8x8xf32> -> vector<8x8xf32>
    %c0_18 = arith.constant 0 : index
    %c0_19 = arith.constant 0 : index
    %c0_20 = arith.constant 0 : index
    %c1 = arith.constant 1 : index
    %c0_21 = arith.constant 0 : index
    %23 = vector.load %arg1[%c0_18, %c0_19, %c0_20, %c1, %c0_21] : memref<1x8x1x4x8xbf16, #tpu.memory_space<vmem>>, vector<1x8x1x1x8xbf16>
    %24 = vector.shape_cast %23 : vector<1x8x1x1x8xbf16> to vector<8x8xbf16>
    %25 = arith.extf %24 : vector<8x8xbf16> to vector<8x8xf32>
    %cst_22 = arith.constant 0.353553385 : f32
    %26 = vector.broadcast %cst_22 : f32 to vector<8x8xf32>
    %27 = arith.mulf %25, %26 : vector<8x8xf32>
    %28 = arith.truncf %27 : vector<8x8xf32> to vector<8x8xbf16>
    %c0_23 = arith.constant 0 : index
    %c0_24 = arith.constant 0 : index
    %c0_25 = arith.constant 0 : index
    %c1_26 = arith.constant 1 : index
    %c0_27 = arith.constant 0 : index
    %29 = vector.load %arg2[%c0_23, %c0_24, %c0_25, %c1_26, %c0_27] : memref<1x8x1x4x8xbf16, #tpu.memory_space<vmem>>, vector<1x8x1x1x8xbf16>
    %30 = vector.shape_cast %29 : vector<1x8x1x1x8xbf16> to vector<8x8xbf16>
    %c0_28 = arith.constant 0 : index
    %c0_29 = arith.constant 0 : index
    %c0_30 = arith.constant 0 : index
    %c1_31 = arith.constant 1 : index
    %c0_32 = arith.constant 0 : index
    %31 = vector.load %arg3[%c0_28, %c0_29, %c0_30, %c1_31, %c0_32] : memref<1x8x1x4x8xbf16, #tpu.memory_space<vmem>>, vector<1x8x1x1x8xbf16>
    %32 = vector.shape_cast %31 : vector<1x8x1x1x8xbf16> to vector<8x8xbf16>
    %cst_33 = arith.constant dense<0.000000e+00> : vector<8x8xf32>
    %33 = tpu.matmul %28, %30, %cst_33 {dimension_numbers = #tpu.dot_dimension_numbers<[1], [1], [0], [0], [0, 0, 1, 0], [], []>} : vector<8x8xbf16>, vector<8x8xbf16>, vector<8x8xf32> -> vector<8x8xf32>
    %cst_34 = arith.constant dense<0xFF800000> : vector<8xf32>
    %34 = vector.multi_reduction <maximumf>, %33, %cst_34 [1] : vector<8x8xf32> to vector<8xf32>
    %35 = vector.shape_cast %34 : vector<8xf32> to vector<8x1xf32>
    %36 = vector.broadcast %35 : vector<8x1xf32> to vector<8x8xf32>
    %37 = arith.subf %33, %36 : vector<8x8xf32>
    %38 = math.exp %37 : vector<8x8xf32>
    %cst_35 = arith.constant dense<0.000000e+00> : vector<8xf32>
    %39 = vector.multi_reduction <add>, %38, %cst_35 [1] : vector<8x8xf32> to vector<8xf32>
    %40 = vector.shape_cast %39 : vector<8xf32> to vector<8x1xf32>
    %41 = tpu.reciprocal %40 {approx = true} : vector<8x1xf32> -> vector<8x1xf32>
    %42 = vector.broadcast %41 : vector<8x1xf32> to vector<8x8xf32>
    %43 = arith.mulf %38, %42 : vector<8x8xf32>
    %44 = arith.truncf %43 : vector<8x8xf32> to vector<8x8xbf16>
    %cst_36 = arith.constant dense<0.000000e+00> : vector<8x8xf32>
    %45 = tpu.matmul %44, %32, %cst_36 {dimension_numbers = #tpu.dot_dimension_numbers<[1], [0], [0], [1], [0, 0, 1, 1], [], []>} : vector<8x8xbf16>, vector<8x8xbf16>, vector<8x8xf32> -> vector<8x8xf32>
    %c0_37 = arith.constant 0 : index
    %c0_38 = arith.constant 0 : index
    %c0_39 = arith.constant 0 : index
    %c2 = arith.constant 2 : index
    %c0_40 = arith.constant 0 : index
    %46 = vector.load %arg1[%c0_37, %c0_38, %c0_39, %c2, %c0_40] : memref<1x8x1x4x8xbf16, #tpu.memory_space<vmem>>, vector<1x8x1x1x8xbf16>
    %47 = vector.shape_cast %46 : vector<1x8x1x1x8xbf16> to vector<8x8xbf16>
    %48 = arith.extf %47 : vector<8x8xbf16> to vector<8x8xf32>
    %cst_41 = arith.constant 0.353553385 : f32
    %49 = vector.broadcast %cst_41 : f32 to vector<8x8xf32>
    %50 = arith.mulf %48, %49 : vector<8x8xf32>
    %51 = arith.truncf %50 : vector<8x8xf32> to vector<8x8xbf16>
    %c0_42 = arith.constant 0 : index
    %c0_43 = arith.constant 0 : index
    %c0_44 = arith.constant 0 : index
    %c2_45 = arith.constant 2 : index
    %c0_46 = arith.constant 0 : index
    %52 = vector.load %arg2[%c0_42, %c0_43, %c0_44, %c2_45, %c0_46] : memref<1x8x1x4x8xbf16, #tpu.memory_space<vmem>>, vector<1x8x1x1x8xbf16>
    %53 = vector.shape_cast %52 : vector<1x8x1x1x8xbf16> to vector<8x8xbf16>
    %c0_47 = arith.constant 0 : index
    %c0_48 = arith.constant 0 : index
    %c0_49 = arith.constant 0 : index
    %c2_50 = arith.constant 2 : index
    %c0_51 = arith.constant 0 : index
    %54 = vector.load %arg3[%c0_47, %c0_48, %c0_49, %c2_50, %c0_51] : memref<1x8x1x4x8xbf16, #tpu.memory_space<vmem>>, vector<1x8x1x1x8xbf16>
    %55 = vector.shape_cast %54 : vector<1x8x1x1x8xbf16> to vector<8x8xbf16>
    %cst_52 = arith.constant dense<0.000000e+00> : vector<8x8xf32>
    %56 = tpu.matmul %51, %53, %cst_52 {dimension_numbers = #tpu.dot_dimension_numbers<[1], [1], [0], [0], [0, 0, 1, 0], [], []>} : vector<8x8xbf16>, vector<8x8xbf16>, vector<8x8xf32> -> vector<8x8xf32>
    %cst_53 = arith.constant dense<0xFF800000> : vector<8xf32>
    %57 = vector.multi_reduction <maximumf>, %56, %cst_53 [1] : vector<8x8xf32> to vector<8xf32>
    %58 = vector.shape_cast %57 : vector<8xf32> to vector<8x1xf32>
    %59 = vector.broadcast %58 : vector<8x1xf32> to vector<8x8xf32>
    %60 = arith.subf %56, %59 : vector<8x8xf32>
    %61 = math.exp %60 : vector<8x8xf32>
    %cst_54 = arith.constant dense<0.000000e+00> : vector<8xf32>
    %62 = vector.multi_reduction <add>, %61, %cst_54 [1] : vector<8x8xf32> to vector<8xf32>
    %63 = vector.shape_cast %62 : vector<8xf32> to vector<8x1xf32>
    %64 = tpu.reciprocal %63 {approx = true} : vector<8x1xf32> -> vector<8x1xf32>
    %65 = vector.broadcast %64 : vector<8x1xf32> to vector<8x8xf32>
    %66 = arith.mulf %61, %65 : vector<8x8xf32>
    %67 = arith.truncf %66 : vector<8x8xf32> to vector<8x8xbf16>
    %cst_55 = arith.constant dense<0.000000e+00> : vector<8x8xf32>
    %68 = tpu.matmul %67, %55, %cst_55 {dimension_numbers = #tpu.dot_dimension_numbers<[1], [0], [0], [1], [0, 0, 1, 1], [], []>} : vector<8x8xbf16>, vector<8x8xbf16>, vector<8x8xf32> -> vector<8x8xf32>
    %c0_56 = arith.constant 0 : index
    %c0_57 = arith.constant 0 : index
    %c0_58 = arith.constant 0 : index
    %c3 = arith.constant 3 : index
    %c0_59 = arith.constant 0 : index
    %69 = vector.load %arg1[%c0_56, %c0_57, %c0_58, %c3, %c0_59] : memref<1x8x1x4x8xbf16, #tpu.memory_space<vmem>>, vector<1x8x1x1x8xbf16>
    %70 = vector.shape_cast %69 : vector<1x8x1x1x8xbf16> to vector<8x8xbf16>
    %71 = arith.extf %70 : vector<8x8xbf16> to vector<8x8xf32>
    %cst_60 = arith.constant 0.353553385 : f32
    %72 = vector.broadcast %cst_60 : f32 to vector<8x8xf32>
    %73 = arith.mulf %71, %72 : vector<8x8xf32>
    %74 = arith.truncf %73 : vector<8x8xf32> to vector<8x8xbf16>
    %c0_61 = arith.constant 0 : index
    %c0_62 = arith.constant 0 : index
    %c0_63 = arith.constant 0 : index
    %c3_64 = arith.constant 3 : index
    %c0_65 = arith.constant 0 : index
    %75 = vector.load %arg2[%c0_61, %c0_62, %c0_63, %c3_64, %c0_65] : memref<1x8x1x4x8xbf16, #tpu.memory_space<vmem>>, vector<1x8x1x1x8xbf16>
    %76 = vector.shape_cast %75 : vector<1x8x1x1x8xbf16> to vector<8x8xbf16>
    %c0_66 = arith.constant 0 : index
    %c0_67 = arith.constant 0 : index
    %c0_68 = arith.constant 0 : index
    %c3_69 = arith.constant 3 : index
    %c0_70 = arith.constant 0 : index
    %77 = vector.load %arg3[%c0_66, %c0_67, %c0_68, %c3_69, %c0_70] : memref<1x8x1x4x8xbf16, #tpu.memory_space<vmem>>, vector<1x8x1x1x8xbf16>
    %78 = vector.shape_cast %77 : vector<1x8x1x1x8xbf16> to vector<8x8xbf16>
    %cst_71 = arith.constant dense<0.000000e+00> : vector<8x8xf32>
    %79 = tpu.matmul %74, %76, %cst_71 {dimension_numbers = #tpu.dot_dimension_numbers<[1], [1], [0], [0], [0, 0, 1, 0], [], []>} : vector<8x8xbf16>, vector<8x8xbf16>, vector<8x8xf32> -> vector<8x8xf32>
    %cst_72 = arith.constant dense<0xFF800000> : vector<8xf32>
    %80 = vector.multi_reduction <maximumf>, %79, %cst_72 [1] : vector<8x8xf32> to vector<8xf32>
    %81 = vector.shape_cast %80 : vector<8xf32> to vector<8x1xf32>
    %82 = vector.broadcast %81 : vector<8x1xf32> to vector<8x8xf32>
    %83 = arith.subf %79, %82 : vector<8x8xf32>
    %84 = math.exp %83 : vector<8x8xf32>
    %cst_73 = arith.constant dense<0.000000e+00> : vector<8xf32>
    %85 = vector.multi_reduction <add>, %84, %cst_73 [1] : vector<8x8xf32> to vector<8xf32>
    %86 = vector.shape_cast %85 : vector<8xf32> to vector<8x1xf32>
    %87 = tpu.reciprocal %86 {approx = true} : vector<8x1xf32> -> vector<8x1xf32>
    %88 = vector.broadcast %87 : vector<8x1xf32> to vector<8x8xf32>
    %89 = arith.mulf %84, %88 : vector<8x8xf32>
    %90 = arith.truncf %89 : vector<8x8xf32> to vector<8x8xbf16>
    %cst_74 = arith.constant dense<0.000000e+00> : vector<8x8xf32>
    %91 = tpu.matmul %90, %78, %cst_74 {dimension_numbers = #tpu.dot_dimension_numbers<[1], [0], [0], [1], [0, 0, 1, 1], [], []>} : vector<8x8xbf16>, vector<8x8xbf16>, vector<8x8xf32> -> vector<8x8xf32>
    %92 = tpu.concatenate %22, %45, %68, %91 in 1 : vector<8x8xf32>, vector<8x8xf32>, vector<8x8xf32>, vector<8x8xf32> -> vector<8x32xf32>
    %93 = arith.truncf %92 : vector<8x32xf32> to vector<8x32xbf16>
    %c0_75 = arith.constant 0 : index
    %c0_76 = arith.constant 0 : index
    %c0_77 = arith.constant 0 : index
    %94 = vector.load %arg4[%c0_75, %c0_76, %c0_77] : memref<1x8x32xbf16, #tpu.memory_space<vmem>>, vector<1x8x32xbf16>
    %95 = vector.shape_cast %94 : vector<1x8x32xbf16> to vector<8x32xbf16>
    %96 = vector.shape_cast %93 : vector<8x32xbf16> to vector<1x8x32xbf16>
    tpu.vector_store %arg4[%c0_75, %c0_76, %c0_77], %96 {strides = array<i32>} : memref<1x8x32xbf16, #tpu.memory_space<vmem>>, vector<1x8x32xbf16>,
    return
  }
  func.func @transform_0(%arg0: i32) -> (i32, i32, i32, i32, i32) {
    %c0_i32 = arith.constant 0 : i32
    %c0_i32_0 = arith.constant 0 : i32
    %c0_i32_1 = arith.constant 0 : i32
    %c0_i32_2 = arith.constant 0 : i32
    %c0_i32_3 = arith.constant 0 : i32
    return %arg0, %c0_i32, %c0_i32_0, %c0_i32_1, %c0_i32_2 : i32, i32, i32, i32, i32
  }
  func.func @transform_1(%arg0: i32) -> (i32, i32, i32, i32, i32) {
    %c0_i32 = arith.constant 0 : i32
    %c1_i32 = arith.constant 1 : i32
    %c0_i32_0 = arith.constant 0 : i32
    %c0_i32_1 = arith.constant 0 : i32
    %c0_i32_2 = arith.constant 0 : i32
    return %arg0, %c0_i32, %c1_i32, %c0_i32_0, %c0_i32_1 : i32, i32, i32, i32, i32
  }
  func.func @transform_2(%arg0: i32) -> (i32, i32, i32, i32, i32) {
    %c0_i32 = arith.constant 0 : i32
    %c2_i32 = arith.constant 2 : i32
    %c0_i32_0 = arith.constant 0 : i32
    %c0_i32_1 = arith.constant 0 : i32
    %c0_i32_2 = arith.constant 0 : i32
    return %arg0, %c0_i32, %c2_i32, %c0_i32_0, %c0_i32_1 : i32, i32, i32, i32, i32
  }
  func.func @transform_3(%arg0: i32) -> (i32, i32, i32) {
    %c0_i32 = arith.constant 0 : i32
    %c0_i32_0 = arith.constant 0 : i32
    %c0_i32_1 = arith.constant 0 : i32
    return %arg0, %c0_i32, %c0_i32_0 : i32, i32, i32
  }
}

module attributes {stable_mosaic.version = 11 : i64} {
  func.func @kernel(%arg0: i32, %arg1: i32, %arg2: i32, %arg3: memref<16x32xbf16, #tpu.memory_space<vmem>>, %arg4: memref<32x128xbf16, #tpu.memory_space<vmem>>, %arg5: memref<1x128xf32, #tpu.memory_space<vmem>>, %arg6: memref<16x128xf32, #tpu.memory_space<vmem>>, %arg7: memref<16x128xf32, #tpu.memory_space<vmem>>) attributes {dimension_semantics = [#tpu.dimension_semantics<parallel>, #tpu.dimension_semantics<parallel>, #tpu.dimension_semantics<arbitrary>], iteration_bounds = array<i64: 1, 1, 1>, scalar_prefetch = 0 : i64, scratch_operands = 1 : i64, tpu.core_type = #tpu.core_type<tc>, window_params = [{transform_indices = @transform_0, window_bounds = array<i64: 16, 32>}, {transform_indices = @transform_1, window_bounds = array<i64: 32, 128>}, {transform_indices = @transform_2, window_bounds = array<i64: 1, 128>}, {transform_indices = @transform_3, window_bounds = array<i64: 16, 128>}]} {
    %c0_i32 = arith.constant 0 : i32
    %0 = arith.cmpi eq, %arg2, %c0_i32 : i32
    %1 = arith.extui %0 : i1 to i32
    %c0_i32_0 = arith.constant 0 : i32
    %2 = arith.cmpi ne, %1, %c0_i32_0 : i32
    scf.if %2 {
      %cst_10 = arith.constant 0.000000e+00 : f32
      %12 = vector.broadcast %cst_10 : f32 to vector<16x128xf32>
      %c0_11 = arith.constant 0 : index
      %c0_12 = arith.constant 0 : index
      %13 = vector.load %arg7[%c0_11, %c0_12] : memref<16x128xf32, #tpu.memory_space<vmem>>, vector<16x128xf32>
      tpu.vector_store %arg7[%c0_11, %c0_12], %12 {strides = array<i32>} : memref<16x128xf32, #tpu.memory_space<vmem>>, vector<16x128xf32>,
    } else {
    }
    %c0 = arith.constant 0 : index
    %c0_1 = arith.constant 0 : index
    %3 = vector.load %arg7[%c0, %c0_1] : memref<16x128xf32, #tpu.memory_space<vmem>>, vector<16x128xf32>
    %c0_2 = arith.constant 0 : index
    %c0_3 = arith.constant 0 : index
    %4 = vector.load %arg3[%c0_2, %c0_3] : memref<16x32xbf16, #tpu.memory_space<vmem>>, vector<16x32xbf16>
    %c0_4 = arith.constant 0 : index
    %c0_5 = arith.constant 0 : index
    %5 = vector.load %arg4[%c0_4, %c0_5] : memref<32x128xbf16, #tpu.memory_space<vmem>>, vector<32x128xbf16>
    %cst = arith.constant dense<0.000000e+00> : vector<16x128xf32>
    %6 = tpu.matmul %4, %5, %cst {dimension_numbers = #tpu.dot_dimension_numbers<[1], [0], [0], [1], [0, 0, 1, 1], [], []>} : vector<16x32xbf16>, vector<32x128xbf16>, vector<16x128xf32> -> vector<16x128xf32>
    %7 = arith.addf %3, %6 : vector<16x128xf32>
    %c0_6 = arith.constant 0 : index
    %c0_7 = arith.constant 0 : index
    %8 = vector.load %arg7[%c0_6, %c0_7] : memref<16x128xf32, #tpu.memory_space<vmem>>, vector<16x128xf32>
    tpu.vector_store %arg7[%c0_6, %c0_7], %7 {strides = array<i32>} : memref<16x128xf32, #tpu.memory_space<vmem>>, vector<16x128xf32>,
    %c0_i32_8 = arith.constant 0 : i32
    %9 = arith.cmpi eq, %arg2, %c0_i32_8 : i32
    %10 = arith.extui %9 : i1 to i32
    %c0_i32_9 = arith.constant 0 : i32
    %11 = arith.cmpi ne, %10, %c0_i32_9 : i32
    scf.if %11 {
      %c0_10 = arith.constant 0 : index
      %c0_11 = arith.constant 0 : index
      %12 = vector.load %arg7[%c0_10, %c0_11] : memref<16x128xf32, #tpu.memory_space<vmem>>, vector<16x128xf32>
      %c0_12 = arith.constant 0 : index
      %c0_13 = arith.constant 0 : index
      %13 = vector.load %arg5[%c0_12, %c0_13] : memref<1x128xf32, #tpu.memory_space<vmem>>, vector<1x128xf32>
      %14 = vector.broadcast %13 : vector<1x128xf32> to vector<16x128xf32>
      %15 = arith.addf %12, %14 : vector<16x128xf32>
      %c0_14 = arith.constant 0 : index
      %c0_15 = arith.constant 0 : index
      %16 = vector.load %arg6[%c0_14, %c0_15] : memref<16x128xf32, #tpu.memory_space<vmem>>, vector<16x128xf32>
      tpu.vector_store %arg6[%c0_14, %c0_15], %15 {strides = array<i32>} : memref<16x128xf32, #tpu.memory_space<vmem>>, vector<16x128xf32>,
    } else {
    }
    return
  }
  func.func @transform_0(%arg0: i32, %arg1: i32, %arg2: i32) -> (i32, i32) {
    %c0_i32 = arith.constant 0 : i32
    return %arg0, %arg2 : i32, i32
  }
  func.func @transform_1(%arg0: i32, %arg1: i32, %arg2: i32) -> (i32, i32) {
    %c0_i32 = arith.constant 0 : i32
    return %arg2, %arg1 : i32, i32
  }
  func.func @transform_2(%arg0: i32, %arg1: i32, %arg2: i32) -> (i32, i32) {
    %c0_i32 = arith.constant 0 : i32
    %c0_i32_0 = arith.constant 0 : i32
    return %c0_i32, %arg1 : i32, i32
  }
  func.func @transform_3(%arg0: i32, %arg1: i32, %arg2: i32) -> (i32, i32) {
    %c0_i32 = arith.constant 0 : i32
    return %arg0, %arg1 : i32, i32
  }
}

module attributes {stable_mosaic.version = 11 : i64} {
  func.func @_ffn_kernel(%arg0: i32, %arg1: i32, %arg2: memref<16x32xbf16, #tpu.memory_space<vmem>>, %arg3: memref<32x512xbf16, #tpu.memory_space<vmem>>, %arg4: memref<1x512xf32, #tpu.memory_space<vmem>>, %arg5: memref<512x32xbf16, #tpu.memory_space<vmem>>, %arg6: memref<1x32xf32, #tpu.memory_space<vmem>>, %arg7: memref<1x32xf32, #tpu.memory_space<vmem>>, %arg8: memref<1x32xf32, #tpu.memory_space<vmem>>, %arg9: memref<16x32xbf16, #tpu.memory_space<vmem>>, %arg10: memref<16x32xf32, #tpu.memory_space<vmem>>) attributes {dimension_semantics = [#tpu.dimension_semantics<parallel>, #tpu.dimension_semantics<arbitrary>], iteration_bounds = array<i64: 1, 4>, scalar_prefetch = 0 : i64, scratch_operands = 1 : i64, tpu.core_type = #tpu.core_type<tc>, window_params = [{transform_indices = @transform_0, window_bounds = array<i64: 16, 32>}, {transform_indices = @transform_1, window_bounds = array<i64: 32, 512>}, {transform_indices = @transform_2, window_bounds = array<i64: 1, 512>}, {transform_indices = @transform_3, window_bounds = array<i64: 512, 32>}, {pipeline_mode = #tpu.pipeline_mode<synchronous>, transform_indices = @transform_4, window_bounds = array<i64: 1, 32>}, {pipeline_mode = #tpu.pipeline_mode<synchronous>, transform_indices = @transform_5, window_bounds = array<i64: 1, 32>}, {pipeline_mode = #tpu.pipeline_mode<synchronous>, transform_indices = @transform_6, window_bounds = array<i64: 1, 32>}, {transform_indices = @transform_7, window_bounds = array<i64: 16, 32>}]} {
    %c0_i32 = arith.constant 0 : i32
    %0 = arith.cmpi eq, %arg1, %c0_i32 : i32
    %1 = arith.extui %0 : i1 to i32
    %c0_i32_0 = arith.constant 0 : i32
    %2 = arith.cmpi ne, %1, %c0_i32_0 : i32
    scf.if %2 {
      %cst_15 = arith.constant 0.000000e+00 : f32
      %20 = vector.broadcast %cst_15 : f32 to vector<16x32xf32>
      %c0_16 = arith.constant 0 : index
      %c0_17 = arith.constant 0 : index
      %21 = vector.load %arg10[%c0_16, %c0_17] : memref<16x32xf32, #tpu.memory_space<vmem>>, vector<16x32xf32>
      tpu.vector_store %arg10[%c0_16, %c0_17], %20 {strides = array<i32>} : memref<16x32xf32, #tpu.memory_space<vmem>>, vector<16x32xf32>,
    } else {
    }
    %c0 = arith.constant 0 : index
    %c0_1 = arith.constant 0 : index
    %3 = vector.load %arg2[%c0, %c0_1] : memref<16x32xbf16, #tpu.memory_space<vmem>>, vector<16x32xbf16>
    %c0_2 = arith.constant 0 : index
    %c0_3 = arith.constant 0 : index
    %4 = vector.load %arg3[%c0_2, %c0_3] : memref<32x512xbf16, #tpu.memory_space<vmem>>, vector<32x512xbf16>
    %cst = arith.constant dense<0.000000e+00> : vector<16x512xf32>
    %5 = tpu.matmul %3, %4, %cst {dimension_numbers = #tpu.dot_dimension_numbers<[1], [0], [0], [1], [0, 0, 1, 1], [], []>} : vector<16x32xbf16>, vector<32x512xbf16>, vector<16x512xf32> -> vector<16x512xf32>
    %c0_4 = arith.constant 0 : index
    %c0_5 = arith.constant 0 : index
    %6 = vector.load %arg4[%c0_4, %c0_5] : memref<1x512xf32, #tpu.memory_space<vmem>>, vector<1x512xf32>
    %7 = vector.broadcast %6 : vector<1x512xf32> to vector<16x512xf32>
    %8 = arith.addf %5, %7 : vector<16x512xf32>
    %cst_6 = arith.constant 0.000000e+00 : f32
    %9 = vector.broadcast %cst_6 : f32 to vector<16x512xf32>
    %10 = arith.maximumf %8, %9 : vector<16x512xf32>
    %c0_7 = arith.constant 0 : index
    %c0_8 = arith.constant 0 : index
    %11 = vector.load %arg10[%c0_7, %c0_8] : memref<16x32xf32, #tpu.memory_space<vmem>>, vector<16x32xf32>
    %12 = arith.truncf %10 : vector<16x512xf32> to vector<16x512xbf16>
    %c0_9 = arith.constant 0 : index
    %c0_10 = arith.constant 0 : index
    %13 = vector.load %arg5[%c0_9, %c0_10] : memref<512x32xbf16, #tpu.memory_space<vmem>>, vector<512x32xbf16>
    %cst_11 = arith.constant dense<0.000000e+00> : vector<16x32xf32>
    %14 = tpu.matmul %12, %13, %cst_11 {dimension_numbers = #tpu.dot_dimension_numbers<[1], [0], [0], [1], [0, 0, 1, 1], [], []>} : vector<16x512xbf16>, vector<512x32xbf16>, vector<16x32xf32> -> vector<16x32xf32>
    %15 = arith.addf %11, %14 : vector<16x32xf32>
    %c0_12 = arith.constant 0 : index
    %c0_13 = arith.constant 0 : index
    %16 = vector.load %arg10[%c0_12, %c0_13] : memref<16x32xf32, #tpu.memory_space<vmem>>, vector<16x32xf32>
    tpu.vector_store %arg10[%c0_12, %c0_13], %15 {strides = array<i32>} : memref<16x32xf32, #tpu.memory_space<vmem>>, vector<16x32xf32>,
    %c3_i32 = arith.constant 3 : i32
    %17 = arith.cmpi eq, %arg1, %c3_i32 : i32
    %18 = arith.extui %17 : i1 to i32
    %c0_i32_14 = arith.constant 0 : i32
    %19 = arith.cmpi ne, %18, %c0_i32_14 : i32
    scf.if %19 {
      %c0_15 = arith.constant 0 : index
      %c0_16 = arith.constant 0 : index
      %20 = vector.load %arg10[%c0_15, %c0_16] : memref<16x32xf32, #tpu.memory_space<vmem>>, vector<16x32xf32>
      %c0_17 = arith.constant 0 : index
      %c0_18 = arith.constant 0 : index
      %21 = vector.load %arg6[%c0_17, %c0_18] : memref<1x32xf32, #tpu.memory_space<vmem>>, vector<1x32xf32>
      %22 = vector.broadcast %21 : vector<1x32xf32> to vector<16x32xf32>
      %23 = arith.addf %20, %22 : vector<16x32xf32>
      %c0_19 = arith.constant 0 : index
      %c0_20 = arith.constant 0 : index
      %24 = vector.load %arg2[%c0_19, %c0_20] : memref<16x32xbf16, #tpu.memory_space<vmem>>, vector<16x32xbf16>
      %25 = arith.extf %24 : vector<16x32xbf16> to vector<16x32xf32>
      %26 = arith.addf %23, %25 : vector<16x32xf32>
      %cst_21 = arith.constant dense<0.000000e+00> : vector<16xf32>
      %27 = vector.multi_reduction <add>, %26, %cst_21 [1] : vector<16x32xf32> to vector<16xf32>
      %28 = vector.shape_cast %27 : vector<16xf32> to vector<16x1xf32>
      %cst_22 = arith.constant 3.200000e+01 : f32
      %29 = vector.broadcast %cst_22 : f32 to vector<16x1xf32>
      %30 = arith.divf %28, %29 : vector<16x1xf32>
      %31 = vector.broadcast %30 : vector<16x1xf32> to vector<16x32xf32>
      %32 = arith.subf %26, %31 : vector<16x32xf32>
      %33 = arith.mulf %32, %32 : vector<16x32xf32>
      %cst_23 = arith.constant dense<0.000000e+00> : vector<16xf32>
      %34 = vector.multi_reduction <add>, %33, %cst_23 [1] : vector<16x32xf32> to vector<16xf32>
      %35 = vector.shape_cast %34 : vector<16xf32> to vector<16x1xf32>
      %cst_24 = arith.constant 3.200000e+01 : f32
      %36 = vector.broadcast %cst_24 : f32 to vector<16x1xf32>
      %37 = arith.divf %35, %36 : vector<16x1xf32>
      %38 = vector.broadcast %30 : vector<16x1xf32> to vector<16x32xf32>
      %39 = arith.subf %26, %38 : vector<16x32xf32>
      %cst_25 = arith.constant 9.99999974E-6 : f32
      %40 = vector.broadcast %cst_25 : f32 to vector<16x1xf32>
      %41 = arith.addf %37, %40 : vector<16x1xf32>
      %42 = math.rsqrt %41 : vector<16x1xf32>
      %43 = vector.broadcast %42 : vector<16x1xf32> to vector<16x32xf32>
      %44 = arith.mulf %39, %43 : vector<16x32xf32>
      %c0_26 = arith.constant 0 : index
      %c0_27 = arith.constant 0 : index
      %45 = vector.load %arg7[%c0_26, %c0_27] : memref<1x32xf32, #tpu.memory_space<vmem>>, vector<1x32xf32>
      %46 = vector.broadcast %45 : vector<1x32xf32> to vector<16x32xf32>
      %47 = arith.mulf %44, %46 : vector<16x32xf32>
      %c0_28 = arith.constant 0 : index
      %c0_29 = arith.constant 0 : index
      %48 = vector.load %arg8[%c0_28, %c0_29] : memref<1x32xf32, #tpu.memory_space<vmem>>, vector<1x32xf32>
      %49 = vector.broadcast %48 : vector<1x32xf32> to vector<16x32xf32>
      %50 = arith.addf %47, %49 : vector<16x32xf32>
      %51 = arith.truncf %50 : vector<16x32xf32> to vector<16x32xbf16>
      %c0_30 = arith.constant 0 : index
      %c0_31 = arith.constant 0 : index
      %52 = vector.load %arg9[%c0_30, %c0_31] : memref<16x32xbf16, #tpu.memory_space<vmem>>, vector<16x32xbf16>
      tpu.vector_store %arg9[%c0_30, %c0_31], %51 {strides = array<i32>} : memref<16x32xbf16, #tpu.memory_space<vmem>>, vector<16x32xbf16>,
    } else {
    }
    return
  }
  func.func @transform_0(%arg0: i32, %arg1: i32) -> (i32, i32) {
    %c0_i32 = arith.constant 0 : i32
    %c0_i32_0 = arith.constant 0 : i32
    return %arg0, %c0_i32 : i32, i32
  }
  func.func @transform_1(%arg0: i32, %arg1: i32) -> (i32, i32) {
    %c0_i32 = arith.constant 0 : i32
    %c0_i32_0 = arith.constant 0 : i32
    return %c0_i32, %arg1 : i32, i32
  }
  func.func @transform_2(%arg0: i32, %arg1: i32) -> (i32, i32) {
    %c0_i32 = arith.constant 0 : i32
    %c0_i32_0 = arith.constant 0 : i32
    return %c0_i32, %arg1 : i32, i32
  }
  func.func @transform_3(%arg0: i32, %arg1: i32) -> (i32, i32) {
    %c0_i32 = arith.constant 0 : i32
    %c0_i32_0 = arith.constant 0 : i32
    return %arg1, %c0_i32 : i32, i32
  }
  func.func @transform_4(%arg0: i32, %arg1: i32) -> (i32, i32) {
    %c0_i32 = arith.constant 0 : i32
    %c0_i32_0 = arith.constant 0 : i32
    %c0_i32_1 = arith.constant 0 : i32
    return %c0_i32, %c0_i32_0 : i32, i32
  }
  func.func @transform_5(%arg0: i32, %arg1: i32) -> (i32, i32) {
    %c0_i32 = arith.constant 0 : i32
    %c0_i32_0 = arith.constant 0 : i32
    %c0_i32_1 = arith.constant 0 : i32
    return %c0_i32, %c0_i32_0 : i32, i32
  }
  func.func @transform_6(%arg0: i32, %arg1: i32) -> (i32, i32) {
    %c0_i32 = arith.constant 0 : i32
    %c0_i32_0 = arith.constant 0 : i32
    %c0_i32_1 = arith.constant 0 : i32
    return %c0_i32, %c0_i32_0 : i32, i32
  }
  func.func @transform_7(%arg0: i32, %arg1: i32) -> (i32, i32) {
    %c0_i32 = arith.constant 0 : i32
    %c0_i32_0 = arith.constant 0 : i32
    return %arg0, %c0_i32 : i32, i32
  }
}

</mosaic_0001>

<llo_original>
// kernel: transformer_forward.11
$region0: #{transformer_forward.11}
  #allocation0 [shape = 'u32[]', space=smem, size = 0x4, offset = 0x4, fixed_abs, tag = 'smem constant byte address 0x4 - core index']
  #allocation1 [shape = 'u32[144,128]{1,0:T(1,128)}', space=vmem, size = 0x12000, scoped, tag = 'internal scratch']
  #allocation2 [shape = 'f32[16,96]{1,0:T(8,128)}', space=vmem, size = 0x2000, scoped, tag = 'scratch operand']
  %s0 = inlined_call_operand.vmem [shape: bf16[16,32], index: 0, kind: input, shape index: {}]
  %s1 = inlined_call_operand.vmem [shape: bf16[32,96], index: 1, kind: input, shape index: {}]
  %s2 = inlined_call_operand.vmem [shape: f32[1,96], index: 2, kind: input, shape index: {}]
  %s3 = inlined_call_operand.vmem [shape: bf16[16,96], index: 3, kind: output, shape index: {}]
  %s4 = sld [smem:[#allocation0]]
  $region30: #{transformer_forward.11} parent=0
    _
  %s6 = ssub.s32 1, %s4
  %s7 = scalar_select 0, %s6, %s4
  // Predicated region
  $region2: #{transformer_forward.11} parent=0 // pred_check
    _
  $region3: #{transformer_forward.11} parent=0 // pred_check_branch
    %9 = sbr.rel (0) target = $region5
  $region4: #{transformer_forward.11} parent=0 // pred_region
    _
  $region5: #{transformer_forward.11} parent=0 // pred_fallthru
    _
  // Predicated region
  $region6: #{transformer_forward.11} parent=0 // pred_check
    _
  $region7: #{transformer_forward.11} parent=0 // pred_check_branch
    %11 = sbr.rel (0) target = $region9
  $region8: #{transformer_forward.11} parent=0 // pred_region
    _
  $region9: #{transformer_forward.11} parent=0 // pred_fallthru
    _
  // Predicated region
  $region10: #{transformer_forward.11} parent=0 // pred_check
    _
  $region11: #{transformer_forward.11} parent=0 // pred_check_branch
    %13 = sbr.rel (0) target = $region13
  $region12: #{transformer_forward.11} parent=0 // pred_region
    _
  $region13: #{transformer_forward.11} parent=0 // pred_fallthru
    _
  %p15 = scmp.eq.s32.totalorder 0, 0
  // Predicated region
  $region14: #{transformer_forward.11} parent=0 // pred_check
    %p16 = pneg %p15
  $region15: #{transformer_forward.11} parent=0 // pred_check_branch
    %18 = sbr.rel (%p16) target = $region17
  $region16: #{transformer_forward.11} parent=0 // pred_region
    %vm19 = vcmask 785408
    %20 = vst.msk [vmem:[#allocation2] sm:$0xff] %vm19, 0.0
    %21 = vst.msk [vmem:[#allocation2 + $0x8] sm:$0xff] %vm19, 0.0
  $region17: #{transformer_forward.11} parent=0 // pred_fallthru
    _
  %v22 = vld [vmem:[#allocation2] sm:$0xff]
  %v23 = vld [vmem:[#allocation2 + $0x8] sm:$0xff]
  %v24 = vld [vmem:[%s0] sm:$0xf]
  %v25 = vld [vmem:[%s0 + $0x4] sm:$0xf]
  %v26 = vld [vmem:[%s1] sm:$0xf]
  %v27 = vld [vmem:[%s1 + $0x4] sm:$0xf]
  %v28 = vld [vmem:[%s1 + $0x8] sm:$0xf]
  %v29 = vld [vmem:[%s1 + $0xc] sm:$0xf]
  %v32 = vunpack.c.l.b16 %v24
  %v33 = vunpack.c.l.b16 %v25
  %v34 = vpack.c.b16 %v33, %v32
  %v39 = vunpack.c.l.b16 %v26
  %v40 = vunpack.c.l.b16 %v27
  %v41 = vunpack.c.l.b16 %v28
  %v42 = vunpack.c.l.b16 %v29
  %v43 = vpack.c.b16 %v40, %v39
  %v44 = vpack.c.b16 %v42, %v41
  %vm47 = vcmask 261120
  %v49 = vsel %vm47, %v34, 0
  %51 = vmatprep.subr.bf16.mxu0 0
  %52 = vmatpush1.bf16.msra.mxu0 %v43
  %53 = vmatprep.subr.bf16.mxu0 0
  %54 = vmatpush1.bf16.msra.mxu0 %v44
  %55 = vmatprep.subr.bf16.mxu0 0
  %56 = vmatpush1.bf16.msra.mxu0 0
  %57 = vmatprep.subr.bf16.mxu0 0
  %58 = vmatpush1.bf16.msra.mxu0 0
  %59 = vmatprep.subr.bf16.mxu0 0
  %60 = vmatpush1.bf16.msra.mxu0 0
  %61 = vmatprep.subr.bf16.mxu0 0
  %62 = vmatpush1.bf16.msra.mxu0 0
  %63 = vmatprep.subr.bf16.mxu0 0
  %64 = vmatpush1.bf16.msra.mxu0 0
  %65 = vmatprep.subr.bf16.mxu0 0
  %66 = vmatpush1.bf16.msra.mxu0 0
  %67 = vmatprep.subr.bf16.mxu0 0
  %68 = vmatpush1.bf16.msra.mxu0 0
  %69 = vmatprep.subr.bf16.mxu0 0
  %70 = vmatpush1.bf16.msra.mxu0 0
  %71 = vmatprep.subr.bf16.mxu0 0
  %72 = vmatpush1.bf16.msra.mxu0 0
  %73 = vmatprep.subr.bf16.mxu0 0
  %74 = vmatpush1.bf16.msra.mxu0 0
  %75 = vmatprep.subr.bf16.mxu0 0
  %76 = vmatpush1.bf16.msra.mxu0 0
  %77 = vmatprep.subr.bf16.mxu0 0
  %78 = vmatpush1.bf16.msra.mxu0 0
  %79 = vmatprep.subr.bf16.mxu0 0
  %80 = vmatpush1.bf16.msra.mxu0 0
  %81 = vmatprep.subr.bf16.mxu0 0
  %82 = vmatpush1.bf16.msra.mxu0 0
  %83 = vmatprep.mubr.bf16.mxu0 0
  %84 = vmatmul.mubr.bf16.gmra.mrb[0].mxu0 %v49
  %v85 = vpop.f32.mrb[0].mxu0
  %v86 = vadd.f32 0.0, %v85
  %v87 = vpop.f32.mrb[0].mxu0
  %v88 = vpop.f32.mrb[0].mxu0
  %v89 = vadd.f32 0.0, %v88
  %v90 = vpop.f32.mrb[0].mxu0
  %91 = vdwg.mxu0
  %v92 = vadd.f32 %v22, %v86
  %v93 = vadd.f32 %v23, %v89
  %vm94 = vcmask 785408
  %95 = vst.msk [vmem:[#allocation2] sm:$0xff] %vm94, %v92
  %96 = vst.msk [vmem:[#allocation2 + $0x8] sm:$0xff] %vm94, %v93
  // Predicated region
  $region18: #{transformer_forward.11} parent=0 // pred_check
    %p97 = pneg %p15
  $region19: #{transformer_forward.11} parent=0 // pred_check_branch
    %99 = sbr.rel (%p97) target = $region21
  $region20: #{transformer_forward.11} parent=0 // pred_region
    %v100 = vld [vmem:[#allocation2] sm:$0xff]
    %v101 = vld [vmem:[#allocation2 + $0x8] sm:$0xff]
    %v102 = vld [vmem:[%s2] sm:$0x1]
    %v104 = vlaneseq
    %v105 = vshrl.u32 %v104, 7
    %v106 = vsub.s32 0, %v105
    %v107 = vrot.slane %v102, %v106
    %v109 = vadd.f32 %v100, %v107
    %v110 = vadd.f32 %v101, %v107
    %v111 = vpack.c.bf16 %v110, %v109
    %v113 = vunpack.c.l.b16 %v111
    %v114 = vunpack.c.h.b16 %v111
    %v115 = vpack.c.b16 %v113, %v113
    %v116 = vpack.c.b16 %v114, %v114
    %vm119 = vcmask 781312
    %120 = vst.msk [vmem:[%s3] sm:$0xf] %vm119, %v115
    %121 = vst.msk [vmem:[%s3 + $0x4] sm:$0xf] %vm119, %v116
  $region21: #{transformer_forward.11} parent=0 // pred_fallthru
    _
  // Predicated region
  $region22: #{transformer_forward.11} parent=0 // pred_check
    _
  $region23: #{transformer_forward.11} parent=0 // pred_check_branch
    %123 = sbr.rel (0) target = $region25
  $region24: #{transformer_forward.11} parent=0 // pred_region
    _
  $region25: #{transformer_forward.11} parent=0 // pred_fallthru
    _
  // Predicated region
  $region26: #{transformer_forward.11} parent=0 // pred_check
    _
  $region27: #{transformer_forward.11} parent=0 // pred_check_branch
    %125 = sbr.rel (0) target = $region29
  $region28: #{transformer_forward.11} parent=0 // pred_region
    _
  $region29: #{transformer_forward.11} parent=0 // pred_fallthru
    _

// kernel: transformer_forward.10
$region0: #{transformer_forward.10}
  #allocation0 [shape = 'u32[]', space=smem, size = 0x4, offset = 0x4, fixed_abs, tag = 'smem constant byte address 0x4 - core index']
  #allocation1 [shape = 'u32[144,128]{1,0:T(1,128)}', space=vmem, size = 0x12000, scoped, tag = 'internal scratch']
  #allocation2 [shape = 'f32[16,32]{1,0:T(8,128)}', space=vmem, size = 0x2000, scoped, tag = 'scratch operand']
  %s0 = inlined_call_operand.vmem [shape: f32[16,16], index: 0, kind: input, shape index: {}]
  %s1 = inlined_call_operand.vmem [shape: bf16[16,32], index: 1, kind: input, shape index: {}]
  %s2 = inlined_call_operand.vmem [shape: f32[1,32], index: 2, kind: input, shape index: {}]
  %s3 = inlined_call_operand.vmem [shape: bf16[16,32], index: 3, kind: output, shape index: {}]
  %s4 = sld [smem:[#allocation0]]
  $region30: #{transformer_forward.10} parent=0
    _
  %s6 = ssub.s32 1, %s4
  %s7 = scalar_select 0, %s6, %s4
  // Predicated region
  $region2: #{transformer_forward.10} parent=0 // pred_check
    _
  $region3: #{transformer_forward.10} parent=0 // pred_check_branch
    %9 = sbr.rel (0) target = $region5
  $region4: #{transformer_forward.10} parent=0 // pred_region
    _
  $region5: #{transformer_forward.10} parent=0 // pred_fallthru
    _
  // Predicated region
  $region6: #{transformer_forward.10} parent=0 // pred_check
    _
  $region7: #{transformer_forward.10} parent=0 // pred_check_branch
    %11 = sbr.rel (0) target = $region9
  $region8: #{transformer_forward.10} parent=0 // pred_region
    _
  $region9: #{transformer_forward.10} parent=0 // pred_fallthru
    _
  // Predicated region
  $region10: #{transformer_forward.10} parent=0 // pred_check
    _
  $region11: #{transformer_forward.10} parent=0 // pred_check_branch
    %13 = sbr.rel (0) target = $region13
  $region12: #{transformer_forward.10} parent=0 // pred_region
    _
  $region13: #{transformer_forward.10} parent=0 // pred_fallthru
    _
  %p15 = scmp.eq.s32.totalorder 0, 0
  // Predicated region
  $region14: #{transformer_forward.10} parent=0 // pred_check
    %p16 = pneg %p15
  $region15: #{transformer_forward.10} parent=0 // pred_check_branch
    %18 = sbr.rel (%p16) target = $region17
  $region16: #{transformer_forward.10} parent=0 // pred_region
    %vm19 = vcmask 261120
    %20 = vst.msk [vmem:[#allocation2] sm:$0xff] %vm19, 0.0
    %21 = vst.msk [vmem:[#allocation2 + $0x8] sm:$0xff] %vm19, 0.0
  $region17: #{transformer_forward.10} parent=0 // pred_fallthru
    _
  %v22 = vld [vmem:[#allocation2] sm:$0xff]
  %v23 = vld [vmem:[#allocation2 + $0x8] sm:$0xff]
  %v24 = vld [vmem:[%s0] sm:$0xff]
  %v25 = vld [vmem:[%s0 + $0x8] sm:$0xff]
  %v26 = vpack.c.bf16 %v25, %v24
  %v27 = vld [vmem:[%s1] sm:$0xf]
  %v28 = vld [vmem:[%s1 + $0x4] sm:$0xf]
  %v31 = vunpack.c.l.b16 %v27
  %v32 = vunpack.c.l.b16 %v28
  %v33 = vpack.c.b16 %v32, %v31
  %vm35 = vcmask 130048
  %v37 = vsel %vm35, %v26, 0
  %39 = vmatprep.subr.bf16.mxu0 0
  %40 = vmatpush1.bf16.msra.mxu0 %v33
  %41 = vmatprep.subr.bf16.mxu0 0
  %42 = vmatpush1.bf16.msra.mxu0 0
  %43 = vmatprep.subr.bf16.mxu0 0
  %44 = vmatpush1.bf16.msra.mxu0 0
  %45 = vmatprep.subr.bf16.mxu0 0
  %46 = vmatpush1.bf16.msra.mxu0 0
  %47 = vmatprep.subr.bf16.mxu0 0
  %48 = vmatpush1.bf16.msra.mxu0 0
  %49 = vmatprep.subr.bf16.mxu0 0
  %50 = vmatpush1.bf16.msra.mxu0 0
  %51 = vmatprep.subr.bf16.mxu0 0
  %52 = vmatpush1.bf16.msra.mxu0 0
  %53 = vmatprep.subr.bf16.mxu0 0
  %54 = vmatpush1.bf16.msra.mxu0 0
  %55 = vmatprep.subr.bf16.mxu0 0
  %56 = vmatpush1.bf16.msra.mxu0 0
  %57 = vmatprep.subr.bf16.mxu0 0
  %58 = vmatpush1.bf16.msra.mxu0 0
  %59 = vmatprep.subr.bf16.mxu0 0
  %60 = vmatpush1.bf16.msra.mxu0 0
  %61 = vmatprep.subr.bf16.mxu0 0
  %62 = vmatpush1.bf16.msra.mxu0 0
  %63 = vmatprep.subr.bf16.mxu0 0
  %64 = vmatpush1.bf16.msra.mxu0 0
  %65 = vmatprep.subr.bf16.mxu0 0
  %66 = vmatpush1.bf16.msra.mxu0 0
  %67 = vmatprep.subr.bf16.mxu0 0
  %68 = vmatpush1.bf16.msra.mxu0 0
  %69 = vmatprep.subr.bf16.mxu0 0
  %70 = vmatpush1.bf16.msra.mxu0 0
  %71 = vmatprep.mubr.bf16.mxu0 0
  %72 = vmatmul.mubr.bf16.gmra.mrb[0].mxu0 %v37
  %v73 = vpop.f32.mrb[0].mxu0
  %v74 = vadd.f32 0.0, %v73
  %v75 = vpop.f32.mrb[0].mxu0
  %v76 = vpop.f32.mrb[0].mxu0
  %v77 = vadd.f32 0.0, %v76
  %v78 = vpop.f32.mrb[0].mxu0
  %79 = vdwg.mxu0
  %v80 = vadd.f32 %v22, %v74
  %v81 = vadd.f32 %v23, %v77
  %vm82 = vcmask 261120
  %83 = vst.msk [vmem:[#allocation2] sm:$0xff] %vm82, %v80
  %84 = vst.msk [vmem:[#allocation2 + $0x8] sm:$0xff] %vm82, %v81
  // Predicated region
  $region18: #{transformer_forward.10} parent=0 // pred_check
    %p85 = pneg %p15
  $region19: #{transformer_forward.10} parent=0 // pred_check_branch
    %87 = sbr.rel (%p85) target = $region21
  $region20: #{transformer_forward.10} parent=0 // pred_region
    %v88 = vld [vmem:[#allocation2] sm:$0xff]
    %v89 = vld [vmem:[#allocation2 + $0x8] sm:$0xff]
    %v90 = vld [vmem:[%s2] sm:$0x1]
    %v92 = vlaneseq
    %v93 = vshrl.u32 %v92, 7
    %v94 = vsub.s32 0, %v93
    %v95 = vrot.slane %v90, %v94
    %v97 = vadd.f32 %v88, %v95
    %v98 = vadd.f32 %v89, %v95
    %v99 = vpack.c.bf16 %v98, %v97
    %v101 = vunpack.c.l.b16 %v99
    %v102 = vunpack.c.h.b16 %v99
    %v103 = vpack.c.b16 %v101, %v101
    %v104 = vpack.c.b16 %v102, %v102
    %vm107 = vcmask 257024
    %108 = vst.msk [vmem:[%s3] sm:$0xf] %vm107, %v103
    %109 = vst.msk [vmem:[%s3 + $0x4] sm:$0xf] %vm107, %v104
  $region21: #{transformer_forward.10} parent=0 // pred_fallthru
    _
  // Predicated region
  $region22: #{transformer_forward.10} parent=0 // pred_check
    _
  $region23: #{transformer_forward.10} parent=0 // pred_check_branch
    %111 = sbr.rel (0) target = $region25
  $region24: #{transformer_forward.10} parent=0 // pred_region
    _
  $region25: #{transformer_forward.10} parent=0 // pred_fallthru
    _
  // Predicated region
  $region26: #{transformer_forward.10} parent=0 // pred_check
    _
  $region27: #{transformer_forward.10} parent=0 // pred_check_branch
    %113 = sbr.rel (0) target = $region29
  $region28: #{transformer_forward.10} parent=0 // pred_region
    _
  $region29: #{transformer_forward.10} parent=0 // pred_fallthru
    _

// kernel: transformer_forward.13
$region0: #{transformer_forward.13}
  #allocation0 [shape = 'u32[]', space=smem, size = 0x4, offset = 0x4, fixed_abs, tag = 'smem constant byte address 0x4 - core index']
  #allocation1 [shape = 'u32[144,128]{1,0:T(1,128)}', space=vmem, size = 0x12000, scoped, tag = 'internal scratch']
  #allocation2 [shape = 'f32[16,32]{1,0:T(8,128)}', space=vmem, size = 0x2000, scoped, tag = 'scratch operand']
  %s0 = inlined_call_operand.vmem [shape: bf16[16,32], index: 0, kind: input, shape index: {}]
  %s1 = inlined_call_operand.vmem [shape: bf16[32,32], index: 1, kind: input, shape index: {}]
  %s2 = inlined_call_operand.vmem [shape: f32[1,32], index: 2, kind: input, shape index: {}]
  %s3 = inlined_call_operand.vmem [shape: bf16[16,32], index: 3, kind: input, shape index: {}]
  %s4 = inlined_call_operand.vmem [shape: f32[1,32], index: 4, kind: input, shape index: {}]
  %s5 = inlined_call_operand.vmem [shape: f32[1,32], index: 5, kind: input, shape index: {}]
  %s6 = inlined_call_operand.vmem [shape: bf16[16,32], index: 6, kind: output, shape index: {}]
  %s7 = sld [smem:[#allocation0]]
  $region42: #{transformer_forward.13} parent=0
    _
  %s9 = ssub.s32 1, %s7
  %s10 = scalar_select 0, %s9, %s7
  // Predicated region
  $region2: #{transformer_forward.13} parent=0 // pred_check
    _
  $region3: #{transformer_forward.13} parent=0 // pred_check_branch
    %12 = sbr.rel (0) target = $region5
  $region4: #{transformer_forward.13} parent=0 // pred_region
    _
  $region5: #{transformer_forward.13} parent=0 // pred_fallthru
    _
  // Predicated region
  $region6: #{transformer_forward.13} parent=0 // pred_check
    _
  $region7: #{transformer_forward.13} parent=0 // pred_check_branch
    %14 = sbr.rel (0) target = $region9
  $region8: #{transformer_forward.13} parent=0 // pred_region
    _
  $region9: #{transformer_forward.13} parent=0 // pred_fallthru
    _
  // Predicated region
  $region10: #{transformer_forward.13} parent=0 // pred_check
    _
  $region11: #{transformer_forward.13} parent=0 // pred_check_branch
    %16 = sbr.rel (0) target = $region13
  $region12: #{transformer_forward.13} parent=0 // pred_region
    _
  $region13: #{transformer_forward.13} parent=0 // pred_fallthru
    _
  // Predicated region
  $region14: #{transformer_forward.13} parent=0 // pred_check
    _
  $region15: #{transformer_forward.13} parent=0 // pred_check_branch
    %18 = sbr.rel (0) target = $region17
  $region16: #{transformer_forward.13} parent=0 // pred_region
    _
  $region17: #{transformer_forward.13} parent=0 // pred_fallthru
    _
  // Predicated region
  $region18: #{transformer_forward.13} parent=0 // pred_check
    _
  $region19: #{transformer_forward.13} parent=0 // pred_check_branch
    %20 = sbr.rel (0) target = $region21
  $region20: #{transformer_forward.13} parent=0 // pred_region
    _
  $region21: #{transformer_forward.13} parent=0 // pred_fallthru
    _
  // Predicated region
  $region22: #{transformer_forward.13} parent=0 // pred_check
    _
  $region23: #{transformer_forward.13} parent=0 // pred_check_branch
    %22 = sbr.rel (0) target = $region25
  $region24: #{transformer_forward.13} parent=0 // pred_region
    _
  $region25: #{transformer_forward.13} parent=0 // pred_fallthru
    _
  %p24 = scmp.eq.s32.totalorder 0, 0
  // Predicated region
  $region26: #{transformer_forward.13} parent=0 // pred_check
    %p25 = pneg %p24
  $region27: #{transformer_forward.13} parent=0 // pred_check_branch
    %27 = sbr.rel (%p25) target = $region29
  $region28: #{transformer_forward.13} parent=0 // pred_region
    %vm28 = vcmask 261120
    %29 = vst.msk [vmem:[#allocation2] sm:$0xff] %vm28, 0.0
    %30 = vst.msk [vmem:[#allocation2 + $0x8] sm:$0xff] %vm28, 0.0
  $region29: #{transformer_forward.13} parent=0 // pred_fallthru
    _
  %v31 = vld [vmem:[#allocation2] sm:$0xff]
  %v32 = vld [vmem:[#allocation2 + $0x8] sm:$0xff]
  %v33 = vld [vmem:[%s0] sm:$0xf]
  %v34 = vld [vmem:[%s0 + $0x4] sm:$0xf]
  %v35 = vld [vmem:[%s1] sm:$0xf]
  %v36 = vld [vmem:[%s1 + $0x4] sm:$0xf]
  %v37 = vld [vmem:[%s1 + $0x8] sm:$0xf]
  %v38 = vld [vmem:[%s1 + $0xc] sm:$0xf]
  %v41 = vunpack.c.l.b16 %v33
  %v42 = vunpack.c.l.b16 %v34
  %v43 = vpack.c.b16 %v42, %v41
  %v48 = vunpack.c.l.b16 %v35
  %v49 = vunpack.c.l.b16 %v36
  %v50 = vunpack.c.l.b16 %v37
  %v51 = vunpack.c.l.b16 %v38
  %v52 = vpack.c.b16 %v49, %v48
  %v53 = vpack.c.b16 %v51, %v50
  %vm56 = vcmask 261120
  %v58 = vsel %vm56, %v43, 0
  %60 = vmatprep.subr.bf16.mxu0 0
  %61 = vmatpush1.bf16.msra.mxu0 %v52
  %62 = vmatprep.subr.bf16.mxu0 0
  %63 = vmatpush1.bf16.msra.mxu0 %v53
  %64 = vmatprep.subr.bf16.mxu0 0
  %65 = vmatpush1.bf16.msra.mxu0 0
  %66 = vmatprep.subr.bf16.mxu0 0
  %67 = vmatpush1.bf16.msra.mxu0 0
  %68 = vmatprep.subr.bf16.mxu0 0
  %69 = vmatpush1.bf16.msra.mxu0 0
  %70 = vmatprep.subr.bf16.mxu0 0
  %71 = vmatpush1.bf16.msra.mxu0 0
  %72 = vmatprep.subr.bf16.mxu0 0
  %73 = vmatpush1.bf16.msra.mxu0 0
  %74 = vmatprep.subr.bf16.mxu0 0
  %75 = vmatpush1.bf16.msra.mxu0 0
  %76 = vmatprep.subr.bf16.mxu0 0
  %77 = vmatpush1.bf16.msra.mxu0 0
  %78 = vmatprep.subr.bf16.mxu0 0
  %79 = vmatpush1.bf16.msra.mxu0 0
  %80 = vmatprep.subr.bf16.mxu0 0
  %81 = vmatpush1.bf16.msra.mxu0 0
  %82 = vmatprep.subr.bf16.mxu0 0
  %83 = vmatpush1.bf16.msra.mxu0 0
  %84 = vmatprep.subr.bf16.mxu0 0
  %85 = vmatpush1.bf16.msra.mxu0 0
  %86 = vmatprep.subr.bf16.mxu0 0
  %87 = vmatpush1.bf16.msra.mxu0 0
  %88 = vmatprep.subr.bf16.mxu0 0
  %89 = vmatpush1.bf16.msra.mxu0 0
  %90 = vmatprep.subr.bf16.mxu0 0
  %91 = vmatpush1.bf16.msra.mxu0 0
  %92 = vmatprep.mubr.bf16.mxu0 0
  %93 = vmatmul.mubr.bf16.gmra.mrb[0].mxu0 %v58
  %v94 = vpop.f32.mrb[0].mxu0
  %v95 = vadd.f32 0.0, %v94
  %v96 = vpop.f32.mrb[0].mxu0
  %v97 = vpop.f32.mrb[0].mxu0
  %v98 = vadd.f32 0.0, %v97
  %v99 = vpop.f32.mrb[0].mxu0
  %100 = vdwg.mxu0
  %v101 = vadd.f32 %v31, %v95
  %v102 = vadd.f32 %v32, %v98
  %103 = vst.msk [vmem:[#allocation2] sm:$0xff] %vm56, %v101
  %104 = vst.msk [vmem:[#allocation2 + $0x8] sm:$0xff] %vm56, %v102
  // Predicated region
  $region30: #{transformer_forward.13} parent=0 // pred_check
    %p105 = pneg %p24
  $region31: #{transformer_forward.13} parent=0 // pred_check_branch
    %107 = sbr.rel (%p105) target = $region33
  $region32: #{transformer_forward.13} parent=0 // pred_region
    %v108 = vld [vmem:[#allocation2] sm:$0xff]
    %v109 = vld [vmem:[#allocation2 + $0x8] sm:$0xff]
    %v110 = vld [vmem:[%s2] sm:$0x1]
    %v112 = vlaneseq
    %v113 = vshrl.u32 %v112, 7
    %v114 = vsub.s32 0, %v113
    %v115 = vrot.slane %v110, %v114
    %v117 = vadd.f32 %v108, %v115
    %v118 = vadd.f32 %v109, %v115
    %v119 = vld [vmem:[%s3] sm:$0xf]
    %v120 = vld [vmem:[%s3 + $0x4] sm:$0xf]
    %v121 = vunpack.c.l.bf16 %v119
    %v122 = vunpack.c.l.bf16 %v120
    %v123 = vadd.f32 %v117, %v121
    %v124 = vadd.f32 %v118, %v122
    %v125 = vsel %vm56, %v123, 0.0
    %126 = vadd.xlane.f32.xlu0 %v125
    %v127 = vpop.xlane.xlu0 %126
    %v128 = vsel %vm56, %v124, 0.0
    %129 = vadd.xlane.f32.xlu0 %v128
    %v130 = vpop.xlane.xlu0 %129
    %v131 = vrcp.pop 32.0
    %v132 = vmul.f32 %v127, %v131
    %v133 = vmul.f32 %v130, %v131
    %v134 = vsub.f32 %v123, %v132
    %v135 = vsub.f32 %v124, %v133
    %v136 = vmul.f32 %v134, %v134
    %v137 = vmul.f32 %v135, %v135
    %v138 = vsel %vm56, %v136, 0.0
    %139 = vadd.xlane.f32.xlu0 %v138
    %v140 = vpop.xlane.xlu0 %139
    %v141 = vsel %vm56, %v137, 0.0
    %142 = vadd.xlane.f32.xlu0 %v141
    %v143 = vpop.xlane.xlu0 %142
    %v144 = vmul.f32 %v140, %v131
    %v145 = vmul.f32 %v143, %v131
    %v146 = vadd.f32 %v144, 1e-05
    %v147 = vadd.f32 %v145, 1e-05
    %v148 = vrsqrt.pop %v146
    %v149 = vrsqrt.pop %v147
    %v150 = vmul.f32 %v134, %v148
    %v151 = vmul.f32 %v135, %v149
    %v152 = vld [vmem:[%s4] sm:$0x1]
    %v154 = vlaneseq
    %v155 = vshrl.u32 %v154, 7
    %v156 = vsub.s32 0, %v155
    %v157 = vrot.slane %v152, %v156
    %v159 = vmul.f32 %v150, %v157
    %v160 = vmul.f32 %v151, %v157
    %v161 = vld [vmem:[%s5] sm:$0x1]
    %v163 = vlaneseq
    %v164 = vshrl.u32 %v163, 7
    %v165 = vsub.s32 0, %v164
    %v166 = vrot.slane %v161, %v165
    %v168 = vadd.f32 %v159, %v166
    %v169 = vadd.f32 %v160, %v166
    %v170 = vpack.c.bf16 %v169, %v168
    %v172 = vunpack.c.l.b16 %v170
    %v173 = vunpack.c.h.b16 %v170
    %v174 = vpack.c.b16 %v172, %v172
    %v175 = vpack.c.b16 %v173, %v173
    %vm178 = vcmask 257024
    %179 = vst.msk [vmem:[%s6] sm:$0xf] %vm178, %v174
    %180 = vst.msk [vmem:[%s6 + $0x4] sm:$0xf] %vm178, %v175
  $region33: #{transformer_forward.13} parent=0 // pred_fallthru
    _
  // Predicated region
  $region34: #{transformer_forward.13} parent=0 // pred_check
    _
  $region35: #{transformer_forward.13} parent=0 // pred_check_branch
    %182 = sbr.rel (0) target = $region37
  $region36: #{transformer_forward.13} parent=0 // pred_region
    _
  $region37: #{transformer_forward.13} parent=0 // pred_fallthru
    _
  // Predicated region
  $region38: #{transformer_forward.13} parent=0 // pred_check
    _
  $region39: #{transformer_forward.13} parent=0 // pred_check_branch
    %184 = sbr.rel (0) target = $region41
  $region40: #{transformer_forward.13} parent=0 // pred_region
    _
  $region41: #{transformer_forward.13} parent=0 // pred_fallthru
    _

// kernel: transformer_forward.19
$region0: #{transformer_forward.19}
  #allocation0 [shape = 'u32[]', space=smem, size = 0x4, offset = 0x4, fixed_abs, tag = 'smem constant byte address 0x4 - core index']
  #allocation1 [shape = 'u32[144,128]{1,0:T(1,128)}', space=vmem, size = 0x12000, scoped, tag = 'internal scratch']
  #allocation2 [shape = 'f32[16,128]{1,0:T(8,128)}', space=vmem, size = 0x2000, scoped, tag = 'scratch operand']
  %s0 = inlined_call_operand.vmem [shape: bf16[16,32], index: 0, kind: input, shape index: {}]
  %s1 = inlined_call_operand.vmem [shape: bf16[32,128], index: 1, kind: input, shape index: {}]
  %s2 = inlined_call_operand.vmem [shape: f32[1,128], index: 2, kind: input, shape index: {}]
  %s3 = inlined_call_operand.vmem [shape: f32[16,128], index: 3, kind: output, shape index: {}]
  %s4 = sld [smem:[#allocation0]]
  $region30: #{transformer_forward.19} parent=0
    _
  %s6 = ssub.s32 1, %s4
  %s7 = scalar_select 0, %s6, %s4
  // Predicated region
  $region2: #{transformer_forward.19} parent=0 // pred_check
    _
  $region3: #{transformer_forward.19} parent=0 // pred_check_branch
    %9 = sbr.rel (0) target = $region5
  $region4: #{transformer_forward.19} parent=0 // pred_region
    _
  $region5: #{transformer_forward.19} parent=0 // pred_fallthru
    _
  // Predicated region
  $region6: #{transformer_forward.19} parent=0 // pred_check
    _
  $region7: #{transformer_forward.19} parent=0 // pred_check_branch
    %11 = sbr.rel (0) target = $region9
  $region8: #{transformer_forward.19} parent=0 // pred_region
    _
  $region9: #{transformer_forward.19} parent=0 // pred_fallthru
    _
  // Predicated region
  $region10: #{transformer_forward.19} parent=0 // pred_check
    _
  $region11: #{transformer_forward.19} parent=0 // pred_check_branch
    %13 = sbr.rel (0) target = $region13
  $region12: #{transformer_forward.19} parent=0 // pred_region
    _
  $region13: #{transformer_forward.19} parent=0 // pred_fallthru
    _
  %p15 = scmp.eq.s32.totalorder 0, 0
  // Predicated region
  $region14: #{transformer_forward.19} parent=0 // pred_check
    %p16 = pneg %p15
  $region15: #{transformer_forward.19} parent=0 // pred_check_branch
    %18 = sbr.rel (%p16) target = $region17
  $region16: #{transformer_forward.19} parent=0 // pred_region
    %19 = vst [vmem:[#allocation2] sm:$0xff] 0.0
    %20 = vst [vmem:[#allocation2 + $0x8] sm:$0xff] 0.0
  $region17: #{transformer_forward.19} parent=0 // pred_fallthru
    _
  %v21 = vld [vmem:[#allocation2] sm:$0xff]
  %v22 = vld [vmem:[#allocation2 + $0x8] sm:$0xff]
  %v23 = vld [vmem:[%s0] sm:$0xf]
  %v24 = vld [vmem:[%s0 + $0x4] sm:$0xf]
  %v25 = vld [vmem:[%s1] sm:$0xf]
  %v26 = vld [vmem:[%s1 + $0x4] sm:$0xf]
  %v27 = vld [vmem:[%s1 + $0x8] sm:$0xf]
  %v28 = vld [vmem:[%s1 + $0xc] sm:$0xf]
  %v31 = vunpack.c.l.b16 %v23
  %v32 = vunpack.c.l.b16 %v24
  %v33 = vpack.c.b16 %v32, %v31
  %v38 = vunpack.c.l.b16 %v25
  %v39 = vunpack.c.l.b16 %v26
  %v40 = vunpack.c.l.b16 %v27
  %v41 = vunpack.c.l.b16 %v28
  %v42 = vpack.c.b16 %v39, %v38
  %v43 = vpack.c.b16 %v41, %v40
  %vm46 = vcmask 261120
  %v48 = vsel %vm46, %v33, 0
  %50 = vmatprep.subr.bf16.mxu0 0
  %51 = vmatpush1.bf16.msra.mxu0 %v42
  %52 = vmatprep.subr.bf16.mxu0 0
  %53 = vmatpush1.bf16.msra.mxu0 %v43
  %54 = vmatprep.subr.bf16.mxu0 0
  %55 = vmatpush1.bf16.msra.mxu0 0
  %56 = vmatprep.subr.bf16.mxu0 0
  %57 = vmatpush1.bf16.msra.mxu0 0
  %58 = vmatprep.subr.bf16.mxu0 0
  %59 = vmatpush1.bf16.msra.mxu0 0
  %60 = vmatprep.subr.bf16.mxu0 0
  %61 = vmatpush1.bf16.msra.mxu0 0
  %62 = vmatprep.subr.bf16.mxu0 0
  %63 = vmatpush1.bf16.msra.mxu0 0
  %64 = vmatprep.subr.bf16.mxu0 0
  %65 = vmatpush1.bf16.msra.mxu0 0
  %66 = vmatprep.subr.bf16.mxu0 0
  %67 = vmatpush1.bf16.msra.mxu0 0
  %68 = vmatprep.subr.bf16.mxu0 0
  %69 = vmatpush1.bf16.msra.mxu0 0
  %70 = vmatprep.subr.bf16.mxu0 0
  %71 = vmatpush1.bf16.msra.mxu0 0
  %72 = vmatprep.subr.bf16.mxu0 0
  %73 = vmatpush1.bf16.msra.mxu0 0
  %74 = vmatprep.subr.bf16.mxu0 0
  %75 = vmatpush1.bf16.msra.mxu0 0
  %76 = vmatprep.subr.bf16.mxu0 0
  %77 = vmatpush1.bf16.msra.mxu0 0
  %78 = vmatprep.subr.bf16.mxu0 0
  %79 = vmatpush1.bf16.msra.mxu0 0
  %80 = vmatprep.subr.bf16.mxu0 0
  %81 = vmatpush1.bf16.msra.mxu0 0
  %82 = vmatprep.mubr.bf16.mxu0 0
  %83 = vmatmul.mubr.bf16.gmra.mrb[0].mxu0 %v48
  %v84 = vpop.f32.mrb[0].mxu0
  %v85 = vadd.f32 0.0, %v84
  %v86 = vpop.f32.mrb[0].mxu0
  %v87 = vpop.f32.mrb[0].mxu0
  %v88 = vadd.f32 0.0, %v87
  %v89 = vpop.f32.mrb[0].mxu0
  %90 = vdwg.mxu0
  %v91 = vadd.f32 %v21, %v85
  %v92 = vadd.f32 %v22, %v88
  %93 = vst [vmem:[#allocation2] sm:$0xff] %v91
  %94 = vst [vmem:[#allocation2 + $0x8] sm:$0xff] %v92
  // Predicated region
  $region18: #{transformer_forward.19} parent=0 // pred_check
    %p95 = pneg %p15
  $region19: #{transformer_forward.19} parent=0 // pred_check_branch
    %97 = sbr.rel (%p95) target = $region21
  $region20: #{transformer_forward.19} parent=0 // pred_region
    %v98 = vld [vmem:[#allocation2] sm:$0xff]
    %v99 = vld [vmem:[#allocation2 + $0x8] sm:$0xff]
    %v100 = vld [vmem:[%s2] sm:$0x1]
    %v102 = vlaneseq
    %v103 = vshrl.u32 %v102, 7
    %v104 = vsub.s32 0, %v103
    %v105 = vrot.slane %v100, %v104
    %v107 = vadd.f32 %v98, %v105
    %v108 = vadd.f32 %v99, %v105
    %109 = vst [vmem:[%s3] sm:$0xff] %v107
    %110 = vst [vmem:[%s3 + $0x8] sm:$0xff] %v108
  $region21: #{transformer_forward.19} parent=0 // pred_fallthru
    _
  // Predicated region
  $region22: #{transformer_forward.19} parent=0 // pred_check
    _
  $region23: #{transformer_forward.19} parent=0 // pred_check_branch
    %112 = sbr.rel (0) target = $region25
  $region24: #{transformer_forward.19} parent=0 // pred_region
    _
  $region25: #{transformer_forward.19} parent=0 // pred_fallthru
    _
  // Predicated region
  $region26: #{transformer_forward.19} parent=0 // pred_check
    _
  $region27: #{transformer_forward.19} parent=0 // pred_check_branch
    %114 = sbr.rel (0) target = $region29
  $region28: #{transformer_forward.19} parent=0 // pred_region
    _
  $region29: #{transformer_forward.19} parent=0 // pred_fallthru
    _

// kernel: transformer_forward.12
$region0: #{transformer_forward.12}
  #allocation0 [shape = 'u32[]', space=smem, size = 0x4, offset = 0x4, fixed_abs, tag = 'smem constant byte address 0x4 - core index']
  #allocation1 [shape = 'u32[144,128]{1,0:T(1,128)}', space=vmem, size = 0x12000, scoped, tag = 'internal scratch']
  %s0 = inlined_call_operand.vmem [shape: bf16[2,8,3,4,8], index: 0, kind: input, shape index: {}, may-alias: {0,1,2}]
  %s1 = inlined_call_operand.vmem [shape: bf16[2,8,3,4,8], index: 1, kind: input, shape index: {}, may-alias: {0,1,2}]
  %s2 = inlined_call_operand.vmem [shape: bf16[2,8,3,4,8], index: 2, kind: input, shape index: {}, may-alias: {0,1,2}]
  %s3 = inlined_call_operand.vmem [shape: bf16[2,8,32], index: 3, kind: output, shape index: {}]
  %s4 = sld [smem:[#allocation0]]
  $region168: #{transformer_forward.12} parent=0
    _
  %s6 = ssub.s32 1, %s4
  %s7 = scalar_select 0, %s6, %s4
  $region1: #{transformer_forward.12} parent=0
    #allocation2 [shape = 'u8[16384]{0}', space=vmem, size = 0x4000, scoped, tag = 'input window, operand 0']
    #allocation3 [shape = 'u8[16384]{0}', space=vmem, size = 0x4000, scoped, tag = 'input window, operand 1']
    #allocation4 [shape = 'u8[16384]{0}', space=vmem, size = 0x4000, scoped, tag = 'input window, operand 2']
    loop: start=0, step=1, limit=4
    $region2: #{transformer_forward.12} parent=1 // loop_pre_header
      _
    $region3: #{transformer_forward.12} parent=1 // loop_header
      %s9 = sphi 0, %s13
      %p10 = scmp.ge.s32.totalorder %s9, 4
      %s19 = sphi 0, %s21
      %s22 = sphi 0, %s19
      %s23 = sphi 0, %s22
      %s39 = sphi 0, %s23
      %s45 = sphi 0, %s47
      %s48 = sphi 0, %s45
      %s49 = sphi 0, %s48
      %s65 = sphi 0, %s49
      %s71 = sphi 0, %s73
      %s74 = sphi 0, %s71
      %s75 = sphi 0, %s74
      %s91 = sphi 0, %s75
      %s97 = sphi 0, %s99
      %s100 = sphi 0, %s97
      %s101 = sphi 0, %s100
      %s117 = sphi 0, %s101
    $region4: #{transformer_forward.12} parent=1 // loop_header_branch
      %12 = sbr.rel (%p10) target = $region8
    $region5: #{transformer_forward.12} parent=1 // loop_body
      %s14 = ssub.s32 %s9, 1
      %s15 = ssub.s32 %s9, 2
      %s16 = sadd.s32 %s9, 1
      %s17 = ssub.s32 %s9, %s16
      %p18 = scmp.eq.s32.totalorder %s17, 0
      %s20 = sadd.s32 %s19, 1
      %s21 = scalar_select %p18, %s19, %s20
      %p24 = pneg %p18
      %p25 = scmp.eq.s32.totalorder %s9, 1
      %p26 = por %p24, %p25
      %p27 = scmp.ne.s32.totalorder %s19, %s22
      %p28 = scmp.eq.s32.totalorder %s9, 0
      %p29 = por %p27, %p28
      %p30 = scmp.ne.s32.totalorder %s19, %s22
      %p31 = scmp.eq.s32.totalorder %s14, 1
      %p32 = por %p30, %p31
      %p33 = scmp.ne.s32.totalorder %s22, %s23
      %p34 = scmp.eq.s32.totalorder %s14, 0
      %p35 = por %p33, %p34
      %p36 = scmp.ne.s32.totalorder %s22, %s23
      %p37 = scmp.eq.s32.totalorder %s15, 1
      %p38 = por %p36, %p37
      %p40 = scmp.ne.s32.totalorder %s23, %s39
      %p41 = scmp.eq.s32.totalorder %s15, 0
      %p42 = por %p40, %p41
      %s43 = ssub.s32 %s9, %s16
      %p44 = scmp.eq.s32.totalorder %s43, 0
      %s46 = sadd.s32 %s45, 1
      %s47 = scalar_select %p44, %s45, %s46
      %p50 = pneg %p44
      %p51 = scmp.eq.s32.totalorder %s9, 1
      %p52 = por %p50, %p51
      %p53 = scmp.ne.s32.totalorder %s45, %s48
      %p54 = scmp.eq.s32.totalorder %s9, 0
      %p55 = por %p53, %p54
      %p56 = scmp.ne.s32.totalorder %s45, %s48
      %p57 = scmp.eq.s32.totalorder %s14, 1
      %p58 = por %p56, %p57
      %p59 = scmp.ne.s32.totalorder %s48, %s49
      %p60 = scmp.eq.s32.totalorder %s14, 0
      %p61 = por %p59, %p60
      %p62 = scmp.ne.s32.totalorder %s48, %s49
      %p63 = scmp.eq.s32.totalorder %s15, 1
      %p64 = por %p62, %p63
      %p66 = scmp.ne.s32.totalorder %s49, %s65
      %p67 = scmp.eq.s32.totalorder %s15, 0
      %p68 = por %p66, %p67
      %s69 = ssub.s32 %s9, %s16
      %p70 = scmp.eq.s32.totalorder %s69, 0
      %s72 = sadd.s32 %s71, 1
      %s73 = scalar_select %p70, %s71, %s72
      %p76 = pneg %p70
      %p77 = scmp.eq.s32.totalorder %s9, 1
      %p78 = por %p76, %p77
      %p79 = scmp.ne.s32.totalorder %s71, %s74
      %p80 = scmp.eq.s32.totalorder %s9, 0
      %p81 = por %p79, %p80
      %p82 = scmp.ne.s32.totalorder %s71, %s74
      %p83 = scmp.eq.s32.totalorder %s14, 1
      %p84 = por %p82, %p83
      %p85 = scmp.ne.s32.totalorder %s74, %s75
      %p86 = scmp.eq.s32.totalorder %s14, 0
      %p87 = por %p85, %p86
      %p88 = scmp.ne.s32.totalorder %s74, %s75
      %p89 = scmp.eq.s32.totalorder %s15, 1
      %p90 = por %p88, %p89
      %p92 = scmp.ne.s32.totalorder %s75, %s91
      %p93 = scmp.eq.s32.totalorder %s15, 0
      %p94 = por %p92, %p93
      %s95 = ssub.s32 %s9, %s16
      %p96 = scmp.eq.s32.totalorder %s95, 0
      %s98 = sadd.s32 %s97, 1
      %s99 = scalar_select %p96, %s97, %s98
      %p102 = pneg %p96
      %p103 = scmp.eq.s32.totalorder %s9, 1
      %p104 = por %p102, %p103
      %p105 = scmp.ne.s32.totalorder %s97, %s100
      %p106 = scmp.eq.s32.totalorder %s9, 0
      %p107 = por %p105, %p106
      %p108 = scmp.ne.s32.totalorder %s97, %s100
      %p109 = scmp.eq.s32.totalorder %s14, 1
      %p110 = por %p108, %p109
      %p111 = scmp.ne.s32.totalorder %s100, %s101
      %p112 = scmp.eq.s32.totalorder %s14, 0
      %p113 = por %p111, %p112
      %p114 = scmp.ne.s32.totalorder %s100, %s101
      %p115 = scmp.eq.s32.totalorder %s15, 1
      %p116 = por %p114, %p115
      %p118 = scmp.ne.s32.totalorder %s101, %s117
      %p119 = scmp.eq.s32.totalorder %s15, 0
      %p120 = por %p118, %p119
      %p121 = scmp.le.s32.totalorder 1, %s9
      %p122 = scmp.lt.s32.totalorder %s9, 3
      %p123 = pnand %p121, %p122
      %p124 = pneg %p123
      // Predicated region
      $region9: #{transformer_forward.12} parent=5 // pred_check
        _
      $region10: #{transformer_forward.12} parent=5 // pred_check_branch
        %126 = sbr.rel (%p123) target = $region12
      $region11: #{transformer_forward.12} parent=5 // pred_region
        %s127 = ssub.s32 %s9, 1
      $region12: #{transformer_forward.12} parent=5 // pred_fallthru
        _
      %p128 = scmp.lt.s32.totalorder %s9, 2
      // Predicated region
      $region13: #{transformer_forward.12} parent=5 // pred_check
        %p129 = pneg %p128
      $region14: #{transformer_forward.12} parent=5 // pred_check_branch
        %131 = sbr.rel (%p129) target = $region16
      $region15: #{transformer_forward.12} parent=5 // pred_region
        // Predicated region
        $region17: #{transformer_forward.12} parent=15 // pred_check
          %p132 = pneg %p29
        $region18: #{transformer_forward.12} parent=15 // pred_check_branch
          %134 = sbr.rel (%p132) target = $region20
        $region19: #{transformer_forward.12} parent=15 // pred_region
          %s135 = sand.u32 %s19, 1
          %s136 = sand.u32 %s19, 1
          %s137 = smul.addr %s136, 16
          %s138 = scalar_lea.vmem [#allocation2], %s137
          %s139 = smul.addr %s9, 24
          %s140 = smul.addr %s139, 2
          %s141 = scalar_lea.vmem %s0, %s140
          // Predicated region
          $region21: #{transformer_forward.12} parent=19 // pred_check
            _
          $region22: #{transformer_forward.12} parent=19 // pred_check_branch
            %143 = sbr.rel (0) target = $region24
          $region23: #{transformer_forward.12} parent=19 // pred_region
            // Predicated region
            $region25: #{transformer_forward.12} parent=23 // pred_check
              _
            $region26: #{transformer_forward.12} parent=23 // pred_check_branch
              %145 = sbr.rel target = $region28
            $region27: #{transformer_forward.12} parent=23 // pred_region
              // Predicated region
              $region40: #{transformer_forward.12} parent=27 // pred_check
                _
              $region41: #{transformer_forward.12} parent=27 // pred_check_branch
                %174 = sbr.rel (0) target = $region43
              $region42: #{transformer_forward.12} parent=27 // pred_region
                loop: start=0, step=1, limit=1
                $region44: #{transformer_forward.12} parent=42 // loop_pre_header
                  _
                $region45: #{transformer_forward.12} parent=42 // loop_header
                  %s176 = sphi 0, %s180
                  %p177 = scmp.ge.s32.totalorder %s176, 1
                  %s181 = sphi %s141, %s141
                  %s182 = sphi %s138, %s138
                $region46: #{transformer_forward.12} parent=42 // loop_header_branch
                  %179 = sbr.rel (%p177) target = $region50
                $region47: #{transformer_forward.12} parent=42 // loop_body
                  _
                $region48: #{transformer_forward.12} parent=42 // loop_footer
                  %s180 = sadd.s32 1, %s176
                $region49: #{transformer_forward.12} parent=42 // loop_footer_branch
                  %175 = sbr.rel target = $region45
                $region50: #{transformer_forward.12} parent=42 // loop_exit
                  _
                loop: start=0, step=1, limit=1
                $region51: #{transformer_forward.12} parent=42 // loop_pre_header
                  _
                $region52: #{transformer_forward.12} parent=42 // loop_header
                  %s185 = sphi 0, %s189
                  %p186 = scmp.ge.s32.totalorder %s185, 1
                  %s190 = sphi %s141, %s141
                  %s191 = sphi %s138, %s138
                $region53: #{transformer_forward.12} parent=42 // loop_header_branch
                  %188 = sbr.rel (%p186) target = $region57
                $region54: #{transformer_forward.12} parent=42 // loop_body
                  %v192 = vld [vmem:[%s190] sm:$0x3]
                  %193 = vst [vmem:[%s191] sm:$0x3] %v192
                  %v194 = vld [vmem:[%s190 + $0x6] sm:$0x3]
                  %195 = vst [vmem:[%s191 + $0x2] sm:$0x3] %v194
                  %v196 = vld [vmem:[%s190 + $0xc] sm:$0x3]
                  %197 = vst [vmem:[%s191 + $0x4] sm:$0x3] %v196
                  %v198 = vld [vmem:[%s190 + $0x12] sm:$0x3]
                  %199 = vst [vmem:[%s191 + $0x6] sm:$0x3] %v198
                  %v200 = vld [vmem:[%s190 + $0x18] sm:$0x3]
                  %201 = vst [vmem:[%s191 + $0x8] sm:$0x3] %v200
                  %v202 = vld [vmem:[%s190 + $0x1e] sm:$0x3]
                  %203 = vst [vmem:[%s191 + $0xa] sm:$0x3] %v202
                  %v204 = vld [vmem:[%s190 + $0x24] sm:$0x3]
                  %205 = vst [vmem:[%s191 + $0xc] sm:$0x3] %v204
                  %v206 = vld [vmem:[%s190 + $0x2a] sm:$0x3]
                  %207 = vst [vmem:[%s191 + $0xe] sm:$0x3] %v206
                $region55: #{transformer_forward.12} parent=42 // loop_footer
                  %s189 = sadd.s32 1, %s185
                $region56: #{transformer_forward.12} parent=42 // loop_footer_branch
                  %184 = sbr.rel target = $region52
                $region57: #{transformer_forward.12} parent=42 // loop_exit
                  _
              $region43: #{transformer_forward.12} parent=27 // pred_fallthru
                _
            $region28: #{transformer_forward.12} parent=23 // pred_fallthru
              _
            // Predicated region
            $region29: #{transformer_forward.12} parent=23 // pred_check
              _
            $region30: #{transformer_forward.12} parent=23 // pred_check_branch
              %147 = sbr.rel (0) target = $region32
            $region31: #{transformer_forward.12} parent=23 // pred_region
              loop: start=0, step=1, limit=1
              $region33: #{transformer_forward.12} parent=31 // loop_pre_header
                _
              $region34: #{transformer_forward.12} parent=31 // loop_header
                %s150 = sphi 0, %s154
                %p151 = scmp.ge.s32.totalorder %s150, 1
                %s155 = sphi %s141, %s141
                %s156 = sphi %s138, %s138
              $region35: #{transformer_forward.12} parent=31 // loop_header_branch
                %153 = sbr.rel (%p151) target = $region39
              $region36: #{transformer_forward.12} parent=31 // loop_body
                %v157 = vld [vmem:[%s155] sm:$0x3]
                %158 = vst [vmem:[%s156] sm:$0x3] %v157
                %v159 = vld [vmem:[%s155 + $0x6] sm:$0x3]
                %160 = vst [vmem:[%s156 + $0x2] sm:$0x3] %v159
                %v161 = vld [vmem:[%s155 + $0xc] sm:$0x3]
                %162 = vst [vmem:[%s156 + $0x4] sm:$0x3] %v161
                %v163 = vld [vmem:[%s155 + $0x12] sm:$0x3]
                %164 = vst [vmem:[%s156 + $0x6] sm:$0x3] %v163
                %v165 = vld [vmem:[%s155 + $0x18] sm:$0x3]
                %166 = vst [vmem:[%s156 + $0x8] sm:$0x3] %v165
                %v167 = vld [vmem:[%s155 + $0x1e] sm:$0x3]
                %168 = vst [vmem:[%s156 + $0xa] sm:$0x3] %v167
                %v169 = vld [vmem:[%s155 + $0x24] sm:$0x3]
                %170 = vst [vmem:[%s156 + $0xc] sm:$0x3] %v169
                %v171 = vld [vmem:[%s155 + $0x2a] sm:$0x3]
                %172 = vst [vmem:[%s156 + $0xe] sm:$0x3] %v171
              $region37: #{transformer_forward.12} parent=31 // loop_footer
                %s154 = sadd.s32 1, %s150
              $region38: #{transformer_forward.12} parent=31 // loop_footer_branch
                %149 = sbr.rel target = $region34
              $region39: #{transformer_forward.12} parent=31 // loop_exit
                _
            $region32: #{transformer_forward.12} parent=23 // pred_fallthru
              _
          $region24: #{transformer_forward.12} parent=19 // pred_fallthru
            _
          %208 = vnop
        $region20: #{transformer_forward.12} parent=15 // pred_fallthru
          _
        // Predicated region
        $region58: #{transformer_forward.12} parent=15 // pred_check
          %p209 = pneg %p55
        $region59: #{transformer_forward.12} parent=15 // pred_check_branch
          %211 = sbr.rel (%p209) target = $region61
        $region60: #{transformer_forward.12} parent=15 // pred_region
          %s212 = sand.u32 %s45, 1
          %s213 = sand.u32 %s45, 1
          %s214 = smul.addr %s213, 16
          %s215 = scalar_lea.vmem [#allocation3], %s214
          %s216 = smul.addr %s9, 24
          %s217 = sadd.s32 1, %s216
          %s218 = smul.addr %s217, 2
          %s219 = scalar_lea.vmem %s1, %s218
          // Predicated region
          $region62: #{transformer_forward.12} parent=60 // pred_check
            _
          $region63: #{transformer_forward.12} parent=60 // pred_check_branch
            %221 = sbr.rel (0) target = $region65
          $region64: #{transformer_forward.12} parent=60 // pred_region
            // Predicated region
            $region66: #{transformer_forward.12} parent=64 // pred_check
              _
            $region67: #{transformer_forward.12} parent=64 // pred_check_branch
              %223 = sbr.rel target = $region69
            $region68: #{transformer_forward.12} parent=64 // pred_region
              // Predicated region
              $region81: #{transformer_forward.12} parent=68 // pred_check
                _
              $region82: #{transformer_forward.12} parent=68 // pred_check_branch
                %252 = sbr.rel (0) target = $region84
              $region83: #{transformer_forward.12} parent=68 // pred_region
                loop: start=0, step=1, limit=1
                $region85: #{transformer_forward.12} parent=83 // loop_pre_header
                  _
                $region86: #{transformer_forward.12} parent=83 // loop_header
                  %s254 = sphi 0, %s258
                  %p255 = scmp.ge.s32.totalorder %s254, 1
                  %s259 = sphi %s219, %s219
                  %s260 = sphi %s215, %s215
                $region87: #{transformer_forward.12} parent=83 // loop_header_branch
                  %257 = sbr.rel (%p255) target = $region91
                $region88: #{transformer_forward.12} parent=83 // loop_body
                  _
                $region89: #{transformer_forward.12} parent=83 // loop_footer
                  %s258 = sadd.s32 1, %s254
                $region90: #{transformer_forward.12} parent=83 // loop_footer_branch
                  %253 = sbr.rel target = $region86
                $region91: #{transformer_forward.12} parent=83 // loop_exit
                  _
                loop: start=0, step=1, limit=1
                $region92: #{transformer_forward.12} parent=83 // loop_pre_header
                  _
                $region93: #{transformer_forward.12} parent=83 // loop_header
                  %s263 = sphi 0, %s267
                  %p264 = scmp.ge.s32.totalorder %s263, 1
                  %s268 = sphi %s219, %s219
                  %s269 = sphi %s215, %s215
                $region94: #{transformer_forward.12} parent=83 // loop_header_branch
                  %266 = sbr.rel (%p264) target = $region98
                $region95: #{transformer_forward.12} parent=83 // loop_body
                  %v270 = vld [vmem:[%s268] sm:$0x3]
                  %271 = vst [vmem:[%s269] sm:$0x3] %v270
                  %v272 = vld [vmem:[%s268 + $0x6] sm:$0x3]
                  %273 = vst [vmem:[%s269 + $0x2] sm:$0x3] %v272
                  %v274 = vld [vmem:[%s268 + $0xc] sm:$0x3]
                  %275 = vst [vmem:[%s269 + $0x4] sm:$0x3] %v274
                  %v276 = vld [vmem:[%s268 + $0x12] sm:$0x3]
                  %277 = vst [vmem:[%s269 + $0x6] sm:$0x3] %v276
                  %v278 = vld [vmem:[%s268 + $0x18] sm:$0x3]
                  %279 = vst [vmem:[%s269 + $0x8] sm:$0x3] %v278
                  %v280 = vld [vmem:[%s268 + $0x1e] sm:$0x3]
                  %281 = vst [vmem:[%s269 + $0xa] sm:$0x3] %v280
                  %v282 = vld [vmem:[%s268 + $0x24] sm:$0x3]
                  %283 = vst [vmem:[%s269 + $0xc] sm:$0x3] %v282
                  %v284 = vld [vmem:[%s268 + $0x2a] sm:$0x3]
                  %285 = vst [vmem:[%s269 + $0xe] sm:$0x3] %v284
                $region96: #{transformer_forward.12} parent=83 // loop_footer
                  %s267 = sadd.s32 1, %s263
                $region97: #{transformer_forward.12} parent=83 // loop_footer_branch
                  %262 = sbr.rel target = $region93
                $region98: #{transformer_forward.12} parent=83 // loop_exit
                  _
              $region84: #{transformer_forward.12} parent=68 // pred_fallthru
                _
            $region69: #{transformer_forward.12} parent=64 // pred_fallthru
              _
            // Predicated region
            $region70: #{transformer_forward.12} parent=64 // pred_check
              _
            $region71: #{transformer_forward.12} parent=64 // pred_check_branch
              %225 = sbr.rel (0) target = $region73
            $region72: #{transformer_forward.12} parent=64 // pred_region
              loop: start=0, step=1, limit=1
              $region74: #{transformer_forward.12} parent=72 // loop_pre_header
                _
              $region75: #{transformer_forward.12} parent=72 // loop_header
                %s228 = sphi 0, %s232
                %p229 = scmp.ge.s32.totalorder %s228, 1
                %s233 = sphi %s219, %s219
                %s234 = sphi %s215, %s215
              $region76: #{transformer_forward.12} parent=72 // loop_header_branch
                %231 = sbr.rel (%p229) target = $region80
              $region77: #{transformer_forward.12} parent=72 // loop_body
                %v235 = vld [vmem:[%s233] sm:$0x3]
                %236 = vst [vmem:[%s234] sm:$0x3] %v235
                %v237 = vld [vmem:[%s233 + $0x6] sm:$0x3]
                %238 = vst [vmem:[%s234 + $0x2] sm:$0x3] %v237
                %v239 = vld [vmem:[%s233 + $0xc] sm:$0x3]
                %240 = vst [vmem:[%s234 + $0x4] sm:$0x3] %v239
                %v241 = vld [vmem:[%s233 + $0x12] sm:$0x3]
                %242 = vst [vmem:[%s234 + $0x6] sm:$0x3] %v241
                %v243 = vld [vmem:[%s233 + $0x18] sm:$0x3]
                %244 = vst [vmem:[%s234 + $0x8] sm:$0x3] %v243
                %v245 = vld [vmem:[%s233 + $0x1e] sm:$0x3]
                %246 = vst [vmem:[%s234 + $0xa] sm:$0x3] %v245
                %v247 = vld [vmem:[%s233 + $0x24] sm:$0x3]
                %248 = vst [vmem:[%s234 + $0xc] sm:$0x3] %v247
                %v249 = vld [vmem:[%s233 + $0x2a] sm:$0x3]
                %250 = vst [vmem:[%s234 + $0xe] sm:$0x3] %v249
              $region78: #{transformer_forward.12} parent=72 // loop_footer
                %s232 = sadd.s32 1, %s228
              $region79: #{transformer_forward.12} parent=72 // loop_footer_branch
                %227 = sbr.rel target = $region75
              $region80: #{transformer_forward.12} parent=72 // loop_exit
                _
            $region73: #{transformer_forward.12} parent=64 // pred_fallthru
              _
          $region65: #{transformer_forward.12} parent=60 // pred_fallthru
            _
          %286 = vnop
        $region61: #{transformer_forward.12} parent=15 // pred_fallthru
          _
        // Predicated region
        $region99: #{transformer_forward.12} parent=15 // pred_check
          %p287 = pneg %p81
        $region100: #{transformer_forward.12} parent=15 // pred_check_branch
          %289 = sbr.rel (%p287) target = $region102
        $region101: #{transformer_forward.12} parent=15 // pred_region
          %s290 = sand.u32 %s71, 1
          %s291 = sand.u32 %s71, 1
          %s292 = smul.addr %s291, 16
          %s293 = scalar_lea.vmem [#allocation4], %s292
          %s294 = smul.addr %s9, 24
          %s295 = sadd.s32 2, %s294
          %s296 = smul.addr %s295, 2
          %s297 = scalar_lea.vmem %s2, %s296
          // Predicated region
          $region103: #{transformer_forward.12} parent=101 // pred_check
            _
          $region104: #{transformer_forward.12} parent=101 // pred_check_branch
            %299 = sbr.rel (0) target = $region106
          $region105: #{transformer_forward.12} parent=101 // pred_region
            // Predicated region
            $region107: #{transformer_forward.12} parent=105 // pred_check
              _
            $region108: #{transformer_forward.12} parent=105 // pred_check_branch
              %301 = sbr.rel target = $region110
            $region109: #{transformer_forward.12} parent=105 // pred_region
              // Predicated region
              $region122: #{transformer_forward.12} parent=109 // pred_check
                _
              $region123: #{transformer_forward.12} parent=109 // pred_check_branch
                %330 = sbr.rel (0) target = $region125
              $region124: #{transformer_forward.12} parent=109 // pred_region
                loop: start=0, step=1, limit=1
                $region126: #{transformer_forward.12} parent=124 // loop_pre_header
                  _
                $region127: #{transformer_forward.12} parent=124 // loop_header
                  %s332 = sphi 0, %s336
                  %p333 = scmp.ge.s32.totalorder %s332, 1
                  %s337 = sphi %s297, %s297
                  %s338 = sphi %s293, %s293
                $region128: #{transformer_forward.12} parent=124 // loop_header_branch
                  %335 = sbr.rel (%p333) target = $region132
                $region129: #{transformer_forward.12} parent=124 // loop_body
                  _
                $region130: #{transformer_forward.12} parent=124 // loop_footer
                  %s336 = sadd.s32 1, %s332
                $region131: #{transformer_forward.12} parent=124 // loop_footer_branch
                  %331 = sbr.rel target = $region127
                $region132: #{transformer_forward.12} parent=124 // loop_exit
                  _
                loop: start=0, step=1, limit=1
                $region133: #{transformer_forward.12} parent=124 // loop_pre_header
                  _
                $region134: #{transformer_forward.12} parent=124 // loop_header
                  %s341 = sphi 0, %s345
                  %p342 = scmp.ge.s32.totalorder %s341, 1
                  %s346 = sphi %s297, %s297
                  %s347 = sphi %s293, %s293
                $region135: #{transformer_forward.12} parent=124 // loop_header_branch
                  %344 = sbr.rel (%p342) target = $region139
                $region136: #{transformer_forward.12} parent=124 // loop_body
                  %v348 = vld [vmem:[%s346] sm:$0x3]
                  %349 = vst [vmem:[%s347] sm:$0x3] %v348
                  %v350 = vld [vmem:[%s346 + $0x6] sm:$0x3]
                  %351 = vst [vmem:[%s347 + $0x2] sm:$0x3] %v350
                  %v352 = vld [vmem:[%s346 + $0xc] sm:$0x3]
                  %353 = vst [vmem:[%s347 + $0x4] sm:$0x3] %v352
                  %v354 = vld [vmem:[%s346 + $0x12] sm:$0x3]
                  %355 = vst [vmem:[%s347 + $0x6] sm:$0x3] %v354
                  %v356 = vld [vmem:[%s346 + $0x18] sm:$0x3]
                  %357 = vst [vmem:[%s347 + $0x8] sm:$0x3] %v356
                  %v358 = vld [vmem:[%s346 + $0x1e] sm:$0x3]
                  %359 = vst [vmem:[%s347 + $0xa] sm:$0x3] %v358
                  %v360 = vld [vmem:[%s346 + $0x24] sm:$0x3]
                  %361 = vst [vmem:[%s347 + $0xc] sm:$0x3] %v360
                  %v362 = vld [vmem:[%s346 + $0x2a] sm:$0x3]
                  %363 = vst [vmem:[%s347 + $0xe] sm:$0x3] %v362
                $region137: #{transformer_forward.12} parent=124 // loop_footer
                  %s345 = sadd.s32 1, %s341
                $region138: #{transformer_forward.12} parent=124 // loop_footer_branch
                  %340 = sbr.rel target = $region134
                $region139: #{transformer_forward.12} parent=124 // loop_exit
                  _
              $region125: #{transformer_forward.12} parent=109 // pred_fallthru
                _
            $region110: #{transformer_forward.12} parent=105 // pred_fallthru
              _
            // Predicated region
            $region111: #{transformer_forward.12} parent=105 // pred_check
              _
            $region112: #{transformer_forward.12} parent=105 // pred_check_branch
              %303 = sbr.rel (0) target = $region114
            $region113: #{transformer_forward.12} parent=105 // pred_region
              loop: start=0, step=1, limit=1
              $region115: #{transformer_forward.12} parent=113 // loop_pre_header
                _
              $region116: #{transformer_forward.12} parent=113 // loop_header
                %s306 = sphi 0, %s310
                %p307 = scmp.ge.s32.totalorder %s306, 1
                %s311 = sphi %s297, %s297
                %s312 = sphi %s293, %s293
              $region117: #{transformer_forward.12} parent=113 // loop_header_branch
                %309 = sbr.rel (%p307) target = $region121
              $region118: #{transformer_forward.12} parent=113 // loop_body
                %v313 = vld [vmem:[%s311] sm:$0x3]
                %314 = vst [vmem:[%s312] sm:$0x3] %v313
                %v315 = vld [vmem:[%s311 + $0x6] sm:$0x3]
                %316 = vst [vmem:[%s312 + $0x2] sm:$0x3] %v315
                %v317 = vld [vmem:[%s311 + $0xc] sm:$0x3]
                %318 = vst [vmem:[%s312 + $0x4] sm:$0x3] %v317
                %v319 = vld [vmem:[%s311 + $0x12] sm:$0x3]
                %320 = vst [vmem:[%s312 + $0x6] sm:$0x3] %v319
                %v321 = vld [vmem:[%s311 + $0x18] sm:$0x3]
                %322 = vst [vmem:[%s312 + $0x8] sm:$0x3] %v321
                %v323 = vld [vmem:[%s311 + $0x1e] sm:$0x3]
                %324 = vst [vmem:[%s312 + $0xa] sm:$0x3] %v323
                %v325 = vld [vmem:[%s311 + $0x24] sm:$0x3]
                %326 = vst [vmem:[%s312 + $0xc] sm:$0x3] %v325
                %v327 = vld [vmem:[%s311 + $0x2a] sm:$0x3]
                %328 = vst [vmem:[%s312 + $0xe] sm:$0x3] %v327
              $region119: #{transformer_forward.12} parent=113 // loop_footer
                %s310 = sadd.s32 1, %s306
              $region120: #{transformer_forward.12} parent=113 // loop_footer_branch
                %305 = sbr.rel target = $region116
              $region121: #{transformer_forward.12} parent=113 // loop_exit
                _
            $region114: #{transformer_forward.12} parent=105 // pred_fallthru
              _
          $region106: #{transformer_forward.12} parent=101 // pred_fallthru
            _
          %364 = vnop
        $region102: #{transformer_forward.12} parent=15 // pred_fallthru
          _
      $region16: #{transformer_forward.12} parent=5 // pred_fallthru
        _
      %p365 = scmp.le.s32.totalorder 1, %s9
      %p366 = scmp.lt.s32.totalorder %s9, 3
      %p367 = pnand %p365, %p366
      %p368 = pneg %p367
      // Predicated region
      $region140: #{transformer_forward.12} parent=5 // pred_check
        _
      $region141: #{transformer_forward.12} parent=5 // pred_check_branch
        %370 = sbr.rel (%p367) target = $region143
      $region142: #{transformer_forward.12} parent=5 // pred_region
        %s371 = ssub.s32 %s9, 1
        %s372 = sand.u32 %s22, 1
        %s373 = sand.u32 %s22, 1
        %s374 = smul.addr %s373, 16
        %s375 = scalar_lea.vmem [#allocation2], %s374
        // Predicated region
        $region144: #{transformer_forward.12} parent=142 // pred_check
          %p376 = pneg %p35
        $region145: #{transformer_forward.12} parent=142 // pred_check_branch
          %378 = sbr.rel (%p376) target = $region147
        $region146: #{transformer_forward.12} parent=142 // pred_region
          _
        $region147: #{transformer_forward.12} parent=142 // pred_fallthru
          _
        %s379 = sand.u32 %s48, 1
        %s380 = sand.u32 %s48, 1
        %s381 = smul.addr %s380, 16
        %s382 = scalar_lea.vmem [#allocation3], %s381
        // Predicated region
        $region148: #{transformer_forward.12} parent=142 // pred_check
          %p383 = pneg %p61
        $region149: #{transformer_forward.12} parent=142 // pred_check_branch
          %385 = sbr.rel (%p383) target = $region151
        $region150: #{transformer_forward.12} parent=142 // pred_region
          _
        $region151: #{transformer_forward.12} parent=142 // pred_fallthru
          _
        %s386 = sand.u32 %s74, 1
        %s387 = sand.u32 %s74, 1
        %s388 = smul.addr %s387, 16
        %s389 = scalar_lea.vmem [#allocation4], %s388
        // Predicated region
        $region152: #{transformer_forward.12} parent=142 // pred_check
          %p390 = pneg %p87
        $region153: #{transformer_forward.12} parent=142 // pred_check_branch
          %392 = sbr.rel (%p390) target = $region155
        $region154: #{transformer_forward.12} parent=142 // pred_region
          _
        $region155: #{transformer_forward.12} parent=142 // pred_fallthru
          _
        %s393 = sand.u32 %s22, 1
        %s394 = sand.u32 %s22, 1
        %s395 = smul.addr %s394, 16
        %s396 = scalar_lea.vmem [#allocation2], %s395
        %p397 = pneg %p35
        %p398 = pneg %p32
        %s399 = sand.u32 %s48, 1
        %s400 = sand.u32 %s48, 1
        %s401 = smul.addr %s400, 16
        %s402 = scalar_lea.vmem [#allocation3], %s401
        %p403 = pneg %p61
        %p404 = pneg %p58
        %s405 = sand.u32 %s74, 1
        %s406 = sand.u32 %s74, 1
        %s407 = smul.addr %s406, 16
        %s408 = scalar_lea.vmem [#allocation4], %s407
        %p409 = pneg %p87
        %p410 = pneg %p84
        %p411 = pneg %p113
        %p412 = pneg %p110
        %p413 = scmp.lt.s32.totalorder %s14, 1
        %s414 = scalar_select %p413, %s14, 1
        %s415 = smul.addr %s414, 4
        %s416 = scalar_lea.vmem %s3, %s415
        %p417 = scmp.lt.s32.totalorder %s14, 1
        %s418 = scalar_select %p417, %s14, 1
        %s419 = smul.addr %s418, 4
        %s420 = scalar_lea.vmem %s3, %s419
        %v422 = vld [vmem:[%s375] sm:$0x1]
        %v423 = vld [vmem:[%s375 + $0x2] sm:$0x1]
        %v424 = vld [vmem:[%s375 + $0x4] sm:$0x1]
        %v425 = vld [vmem:[%s375 + $0x6] sm:$0x1]
        %v426 = vld [vmem:[%s375 + $0x8] sm:$0x1]
        %v427 = vld [vmem:[%s375 + $0xa] sm:$0x1]
        %v428 = vld [vmem:[%s375 + $0xc] sm:$0x1]
        %v429 = vld [vmem:[%s375 + $0xe] sm:$0x1]
        %v430 = vunpack.c.l.bf16 %v422
        %v431 = vunpack.c.l.bf16 %v423
        %v432 = vunpack.c.l.bf16 %v424
        %v433 = vunpack.c.l.bf16 %v425
        %v434 = vunpack.c.l.bf16 %v426
        %v435 = vunpack.c.l.bf16 %v427
        %v436 = vunpack.c.l.bf16 %v428
        %v437 = vunpack.c.l.bf16 %v429
        %v438 = vmul.f32 %v430, 0.35355338
        %v439 = vmul.f32 %v431, 0.35355338
        %v440 = vmul.f32 %v432, 0.35355338
        %v441 = vmul.f32 %v433, 0.35355338
        %v442 = vmul.f32 %v434, 0.35355338
        %v443 = vmul.f32 %v435, 0.35355338
        %v444 = vmul.f32 %v436, 0.35355338
        %v445 = vmul.f32 %v437, 0.35355338
        %v446 = vpack.c.bf16 %v438, %v438
        %v447 = vpack.c.bf16 %v439, %v439
        %v448 = vpack.c.bf16 %v440, %v440
        %v449 = vpack.c.bf16 %v441, %v441
        %v450 = vpack.c.bf16 %v442, %v442
        %v451 = vpack.c.bf16 %v443, %v443
        %v452 = vpack.c.bf16 %v444, %v444
        %v453 = vpack.c.bf16 %v445, %v445
        %v454 = vld [vmem:[%s382] sm:$0x1]
        %v455 = vld [vmem:[%s382 + $0x2] sm:$0x1]
        %v456 = vld [vmem:[%s382 + $0x4] sm:$0x1]
        %v457 = vld [vmem:[%s382 + $0x6] sm:$0x1]
        %v458 = vld [vmem:[%s382 + $0x8] sm:$0x1]
        %v459 = vld [vmem:[%s382 + $0xa] sm:$0x1]
        %v460 = vld [vmem:[%s382 + $0xc] sm:$0x1]
        %v461 = vld [vmem:[%s382 + $0xe] sm:$0x1]
        %v462 = vld [vmem:[%s389] sm:$0x1]
        %v463 = vld [vmem:[%s389 + $0x2] sm:$0x1]
        %v464 = vld [vmem:[%s389 + $0x4] sm:$0x1]
        %v465 = vld [vmem:[%s389 + $0x6] sm:$0x1]
        %v466 = vld [vmem:[%s389 + $0x8] sm:$0x1]
        %v467 = vld [vmem:[%s389 + $0xa] sm:$0x1]
        %v468 = vld [vmem:[%s389 + $0xc] sm:$0x1]
        %v469 = vld [vmem:[%s389 + $0xe] sm:$0x1]
        %v478 = vunpack.c.l.b16 %v446
        %v479 = vunpack.c.l.b16 %v447
        %v480 = vunpack.c.l.b16 %v448
        %v481 = vunpack.c.l.b16 %v449
        %v482 = vunpack.c.l.b16 %v450
        %v483 = vunpack.c.l.b16 %v451
        %v484 = vunpack.c.l.b16 %v452
        %v485 = vunpack.c.l.b16 %v453
        %v486 = vrot.slane %v479, 7
        %vm487 = vcmask 1041409
        %v488 = vsel %vm487, %v486, %v478
        %v489 = vrot.slane %v480, 6
        %vm490 = vcmask 1042434
        %v491 = vsel %vm490, %v489, %v488
        %v492 = vrot.slane %v481, 5
        %vm493 = vcmask 1043459
        %v494 = vsel %vm493, %v492, %v491
        %v495 = vrot.slane %v482, 4
        %vm496 = vcmask 1044484
        %v497 = vsel %vm496, %v495, %v494
        %v498 = vrot.slane %v483, 3
        %vm499 = vcmask 1045509
        %v500 = vsel %vm499, %v498, %v497
        %v501 = vrot.slane %v484, 2
        %vm502 = vcmask 1046534
        %v503 = vsel %vm502, %v501, %v500
        %v504 = vrot.slane %v485, 1
        %vm505 = vcmask 1047559
        %v506 = vsel %vm505, %v504, %v503
        %v507 = vpack.c.b16 %v506, %v506
        %v517 = vunpack.c.l.s4 1983009808
        %v518 = vunpack.c.0.s8 %v517
        %v519 = vlaneseq
        %v520 = vshrl.u32 %v519, 7
        %v521 = vsub.s32 %v518, %v520
        %v522 = vrot.slane %v454, %v521
        %v524 = vunpack.c.l.s4 1983009808
        %v525 = vunpack.c.0.s8 %v524
        %v526 = vlaneseq
        %v527 = vshrl.u32 %v526, 7
        %v528 = vsub.s32 %v525, %v527
        %v529 = vrot.slane %v455, %v528
        %v531 = vunpack.c.l.s4 1983009808
        %v532 = vunpack.c.0.s8 %v531
        %v533 = vlaneseq
        %v534 = vshrl.u32 %v533, 7
        %v535 = vsub.s32 %v532, %v534
        %v536 = vrot.slane %v456, %v535
        %v538 = vunpack.c.l.s4 1983009808
        %v539 = vunpack.c.0.s8 %v538
        %v540 = vlaneseq
        %v541 = vshrl.u32 %v540, 7
        %v542 = vsub.s32 %v539, %v541
        %v543 = vrot.slane %v457, %v542
        %v545 = vunpack.c.l.s4 1983009808
        %v546 = vunpack.c.0.s8 %v545
        %v547 = vlaneseq
        %v548 = vshrl.u32 %v547, 7
        %v549 = vsub.s32 %v546, %v548
        %v550 = vrot.slane %v458, %v549
        %v552 = vunpack.c.l.s4 1983009808
        %v553 = vunpack.c.0.s8 %v552
        %v554 = vlaneseq
        %v555 = vshrl.u32 %v554, 7
        %v556 = vsub.s32 %v553, %v555
        %v557 = vrot.slane %v459, %v556
        %v559 = vunpack.c.l.s4 1983009808
        %v560 = vunpack.c.0.s8 %v559
        %v561 = vlaneseq
        %v562 = vshrl.u32 %v561, 7
        %v563 = vsub.s32 %v560, %v562
        %v564 = vrot.slane %v460, %v563
        %v566 = vunpack.c.l.s4 1983009808
        %v567 = vunpack.c.0.s8 %v566
        %v568 = vlaneseq
        %v569 = vshrl.u32 %v568, 7
        %v570 = vsub.s32 %v567, %v569
        %v571 = vrot.slane %v461, %v570
        %v572 = vunpack.c.l.b16 %v522
        %v573 = vunpack.c.l.b16 %v529
        %v574 = vunpack.c.l.b16 %v536
        %v575 = vunpack.c.l.b16 %v543
        %v576 = vunpack.c.l.b16 %v550
        %v577 = vunpack.c.l.b16 %v557
        %v578 = vunpack.c.l.b16 %v564
        %v579 = vunpack.c.l.b16 %v571
        %v580 = vrot.slane %v573, 7
        %v581 = vsel %vm487, %v580, %v572
        %v582 = vrot.slane %v574, 6
        %v583 = vsel %vm490, %v582, %v581
        %v584 = vrot.slane %v575, 5
        %v585 = vsel %vm493, %v584, %v583
        %v586 = vrot.slane %v576, 4
        %v587 = vsel %vm496, %v586, %v585
        %v588 = vrot.slane %v577, 3
        %v589 = vsel %vm499, %v588, %v587
        %v590 = vrot.slane %v578, 2
        %v591 = vsel %vm502, %v590, %v589
        %v592 = vrot.slane %v579, 1
        %v593 = vsel %vm505, %v592, %v591
        %v594 = vpack.c.b16 %v593, %v593
        %vm595 = vcmask 64512
        %v597 = vsel %vm595, %v507, 0
        %v600 = vsel %vm595, %v594, 0
        %602 = vmatprep.subr.bf16.mxu0 0
        %603 = vmatpush1.bf16.xpose.msra.mxu0 %v600
        %604 = vmatprep.subr.bf16.mxu0 0
        %605 = vmatpush1.bf16.xpose.msra.mxu0 0
        %606 = vmatprep.subr.bf16.mxu0 0
        %607 = vmatpush1.bf16.xpose.msra.mxu0 0
        %608 = vmatprep.subr.bf16.mxu0 0
        %609 = vmatpush1.bf16.xpose.msra.mxu0 0
        %610 = vmatprep.subr.bf16.mxu0 0
        %611 = vmatpush1.bf16.xpose.msra.mxu0 0
        %612 = vmatprep.subr.bf16.mxu0 0
        %613 = vmatpush1.bf16.xpose.msra.mxu0 0
        %614 = vmatprep.subr.bf16.mxu0 0
        %615 = vmatpush1.bf16.xpose.msra.mxu0 0
        %616 = vmatprep.subr.bf16.mxu0 0
        %617 = vmatpush1.bf16.xpose.msra.mxu0 0
        %618 = vmatprep.subr.bf16.mxu0 0
        %619 = vmatpush1.bf16.xpose.msra.mxu0 0
        %620 = vmatprep.subr.bf16.mxu0 0
        %621 = vmatpush1.bf16.xpose.msra.mxu0 0
        %622 = vmatprep.subr.bf16.mxu0 0
        %623 = vmatpush1.bf16.xpose.msra.mxu0 0
        %624 = vmatprep.subr.bf16.mxu0 0
        %625 = vmatpush1.bf16.xpose.msra.mxu0 0
        %626 = vmatprep.subr.bf16.mxu0 0
        %627 = vmatpush1.bf16.xpose.msra.mxu0 0
        %628 = vmatprep.subr.bf16.mxu0 0
        %629 = vmatpush1.bf16.xpose.msra.mxu0 0
        %630 = vmatprep.subr.bf16.mxu0 0
        %631 = vmatpush1.bf16.xpose.msra.mxu0 0
        %632 = vmatprep.subr.bf16.mxu0 0
        %633 = vmatpush1.bf16.xpose.msra.mxu0 0
        %634 = vmatprep.mubr.bf16.mxu0 0
        %635 = vmatmul.mubr.bf16.gmra.mrb[0].mxu0 %v597
        %v636 = vpop.f32.mrb[0].mxu0
        %v637 = vadd.f32 0.0, %v636
        %v638 = vpop.f32.mrb[0].mxu0
        %v639 = vpop.f32.mrb[0].mxu0
        %v640 = vpop.f32.mrb[0].mxu0
        %641 = vdwg.mxu0
        %v642 = vsel %vm595, %v637, -inf
        %643 = vmax.xlane.f32.xlu0 %v642
        %v644 = vpop.xlane.xlu0 %643
        %v645 = vsub.f32 %v637, %v644
        %v646 = vmul.f32 %v645, 1.442695
        %v647 = vpow.pop %v646
        %v648 = vsel %vm595, %v647, 0.0
        %649 = vadd.xlane.f32.xlu0 %v648
        %v650 = vpop.xlane.xlu0 %649
        %v651 = vrcp.pop %v650
        %v652 = vmul.f32 %v647, %v651
        %v653 = vpack.c.bf16 %v652, %v652
        %v663 = vunpack.c.l.s4 1983009808
        %v664 = vunpack.c.0.s8 %v663
        %v665 = vlaneseq
        %v666 = vshrl.u32 %v665, 7
        %v667 = vsub.s32 %v664, %v666
        %v668 = vrot.slane %v462, %v667
        %v670 = vunpack.c.l.s4 1983009808
        %v671 = vunpack.c.0.s8 %v670
        %v672 = vlaneseq
        %v673 = vshrl.u32 %v672, 7
        %v674 = vsub.s32 %v671, %v673
        %v675 = vrot.slane %v463, %v674
        %v677 = vunpack.c.l.s4 1983009808
        %v678 = vunpack.c.0.s8 %v677
        %v679 = vlaneseq
        %v680 = vshrl.u32 %v679, 7
        %v681 = vsub.s32 %v678, %v680
        %v682 = vrot.slane %v464, %v681
        %v684 = vunpack.c.l.s4 1983009808
        %v685 = vunpack.c.0.s8 %v684
        %v686 = vlaneseq
        %v687 = vshrl.u32 %v686, 7
        %v688 = vsub.s32 %v685, %v687
        %v689 = vrot.slane %v465, %v688
        %v691 = vunpack.c.l.s4 1983009808
        %v692 = vunpack.c.0.s8 %v691
        %v693 = vlaneseq
        %v694 = vshrl.u32 %v693, 7
        %v695 = vsub.s32 %v692, %v694
        %v696 = vrot.slane %v466, %v695
        %v698 = vunpack.c.l.s4 1983009808
        %v699 = vunpack.c.0.s8 %v698
        %v700 = vlaneseq
        %v701 = vshrl.u32 %v700, 7
        %v702 = vsub.s32 %v699, %v701
        %v703 = vrot.slane %v467, %v702
        %v705 = vunpack.c.l.s4 1983009808
        %v706 = vunpack.c.0.s8 %v705
        %v707 = vlaneseq
        %v708 = vshrl.u32 %v707, 7
        %v709 = vsub.s32 %v706, %v708
        %v710 = vrot.slane %v468, %v709
        %v712 = vunpack.c.l.s4 1983009808
        %v713 = vunpack.c.0.s8 %v712
        %v714 = vlaneseq
        %v715 = vshrl.u32 %v714, 7
        %v716 = vsub.s32 %v713, %v715
        %v717 = vrot.slane %v469, %v716
        %v718 = vunpack.c.l.b16 %v668
        %v719 = vunpack.c.l.b16 %v675
        %v720 = vunpack.c.l.b16 %v682
        %v721 = vunpack.c.l.b16 %v689
        %v722 = vunpack.c.l.b16 %v696
        %v723 = vunpack.c.l.b16 %v703
        %v724 = vunpack.c.l.b16 %v710
        %v725 = vunpack.c.l.b16 %v717
        %v726 = vrot.slane %v719, 7
        %v727 = vsel %vm487, %v726, %v718
        %v728 = vrot.slane %v720, 6
        %v729 = vsel %vm490, %v728, %v727
        %v730 = vrot.slane %v721, 5
        %v731 = vsel %vm493, %v730, %v729
        %v732 = vrot.slane %v722, 4
        %v733 = vsel %vm496, %v732, %v731
        %v734 = vrot.slane %v723, 3
        %v735 = vsel %vm499, %v734, %v733
        %v736 = vrot.slane %v724, 2
        %v737 = vsel %vm502, %v736, %v735
        %v738 = vrot.slane %v725, 1
        %v739 = vsel %vm505, %v738, %v737
        %v740 = vpack.c.b16 %v739, %v739
        %v742 = vsel %vm595, %v653, 0
        %vm744 = vcmask 1043456
        %v746 = vsel %vm744, %v740, 0
        %748 = vmatprep.subr.bf16.mxu0 0
        %749 = vmatpush1.bf16.msra.mxu0 %v746
        %750 = vmatprep.subr.bf16.mxu0 0
        %751 = vmatpush1.bf16.msra.mxu0 0
        %752 = vmatprep.subr.bf16.mxu0 0
        %753 = vmatpush1.bf16.msra.mxu0 0
        %754 = vmatprep.subr.bf16.mxu0 0
        %755 = vmatpush1.bf16.msra.mxu0 0
        %756 = vmatprep.subr.bf16.mxu0 0
        %757 = vmatpush1.bf16.msra.mxu0 0
        %758 = vmatprep.subr.bf16.mxu0 0
        %759 = vmatpush1.bf16.msra.mxu0 0
        %760 = vmatprep.subr.bf16.mxu0 0
        %761 = vmatpush1.bf16.msra.mxu0 0
        %762 = vmatprep.subr.bf16.mxu0 0
        %763 = vmatpush1.bf16.msra.mxu0 0
        %764 = vmatprep.subr.bf16.mxu0 0
        %765 = vmatpush1.bf16.msra.mxu0 0
        %766 = vmatprep.subr.bf16.mxu0 0
        %767 = vmatpush1.bf16.msra.mxu0 0
        %768 = vmatprep.subr.bf16.mxu0 0
        %769 = vmatpush1.bf16.msra.mxu0 0
        %770 = vmatprep.subr.bf16.mxu0 0
        %771 = vmatpush1.bf16.msra.mxu0 0
        %772 = vmatprep.subr.bf16.mxu0 0
        %773 = vmatpush1.bf16.msra.mxu0 0
        %774 = vmatprep.subr.bf16.mxu0 0
        %775 = vmatpush1.bf16.msra.mxu0 0
        %776 = vmatprep.subr.bf16.mxu0 0
        %777 = vmatpush1.bf16.msra.mxu0 0
        %778 = vmatprep.subr.bf16.mxu0 0
        %779 = vmatpush1.bf16.msra.mxu0 0
        %780 = vmatprep.mubr.bf16.mxu0 0
        %781 = vmatmul.mubr.bf16.gmra.mrb[0].mxu0 %v742
        %v782 = vpop.f32.mrb[0].mxu0
        %v783 = vadd.f32 0.0, %v782
        %v784 = vpop.f32.mrb[0].mxu0
        %v785 = vpop.f32.mrb[0].mxu0
        %v786 = vpop.f32.mrb[0].mxu0
        %787 = vdwg.mxu0
        %v788 = vld [vmem:[%s375] sm:$0x1]
        %v789 = vld [vmem:[%s375 + $0x2] sm:$0x1]
        %v790 = vld [vmem:[%s375 + $0x4] sm:$0x1]
        %v791 = vld [vmem:[%s375 + $0x6] sm:$0x1]
        %v792 = vld [vmem:[%s375 + $0x8] sm:$0x1]
        %v793 = vld [vmem:[%s375 + $0xa] sm:$0x1]
        %v794 = vld [vmem:[%s375 + $0xc] sm:$0x1]
        %v795 = vld [vmem:[%s375 + $0xe] sm:$0x1]
        %v796 = vunpack.c.l.bf16 %v788
        %v797 = vunpack.c.l.bf16 %v789
        %v798 = vunpack.c.l.bf16 %v790
        %v799 = vunpack.c.l.bf16 %v791
        %v800 = vunpack.c.l.bf16 %v792
        %v801 = vunpack.c.l.bf16 %v793
        %v802 = vunpack.c.l.bf16 %v794
        %v803 = vunpack.c.l.bf16 %v795
        %v804 = vmul.f32 %v796, 0.35355338
        %v805 = vmul.f32 %v797, 0.35355338
        %v806 = vmul.f32 %v798, 0.35355338
        %v807 = vmul.f32 %v799, 0.35355338
        %v808 = vmul.f32 %v800, 0.35355338
        %v809 = vmul.f32 %v801, 0.35355338
        %v810 = vmul.f32 %v802, 0.35355338
        %v811 = vmul.f32 %v803, 0.35355338
        %v812 = vpack.c.bf16 %v804, %v804
        %v813 = vpack.c.bf16 %v805, %v805
        %v814 = vpack.c.bf16 %v806, %v806
        %v815 = vpack.c.bf16 %v807, %v807
        %v816 = vpack.c.bf16 %v808, %v808
        %v817 = vpack.c.bf16 %v809, %v809
        %v818 = vpack.c.bf16 %v810, %v810
        %v819 = vpack.c.bf16 %v811, %v811
        %v820 = vld [vmem:[%s382] sm:$0x1]
        %v821 = vld [vmem:[%s382 + $0x2] sm:$0x1]
        %v822 = vld [vmem:[%s382 + $0x4] sm:$0x1]
        %v823 = vld [vmem:[%s382 + $0x6] sm:$0x1]
        %v824 = vld [vmem:[%s382 + $0x8] sm:$0x1]
        %v825 = vld [vmem:[%s382 + $0xa] sm:$0x1]
        %v826 = vld [vmem:[%s382 + $0xc] sm:$0x1]
        %v827 = vld [vmem:[%s382 + $0xe] sm:$0x1]
        %v828 = vld [vmem:[%s389] sm:$0x1]
        %v829 = vld [vmem:[%s389 + $0x2] sm:$0x1]
        %v830 = vld [vmem:[%s389 + $0x4] sm:$0x1]
        %v831 = vld [vmem:[%s389 + $0x6] sm:$0x1]
        %v832 = vld [vmem:[%s389 + $0x8] sm:$0x1]
        %v833 = vld [vmem:[%s389 + $0xa] sm:$0x1]
        %v834 = vld [vmem:[%s389 + $0xc] sm:$0x1]
        %v835 = vld [vmem:[%s389 + $0xe] sm:$0x1]
        %v844 = vunpack.c.l.b16 %v812
        %v845 = vunpack.c.l.b16 %v813
        %v846 = vunpack.c.l.b16 %v814
        %v847 = vunpack.c.l.b16 %v815
        %v848 = vunpack.c.l.b16 %v816
        %v849 = vunpack.c.l.b16 %v817
        %v850 = vunpack.c.l.b16 %v818
        %v851 = vunpack.c.l.b16 %v819
        %v852 = vrot.slane %v844, 1
        %v853 = vsel %vm487, %v845, %v852
        %v854 = vrot.slane %v846, 7
        %v855 = vsel %vm490, %v854, %v853
        %v856 = vrot.slane %v847, 6
        %v857 = vsel %vm493, %v856, %v855
        %v858 = vrot.slane %v848, 5
        %v859 = vsel %vm496, %v858, %v857
        %v860 = vrot.slane %v849, 4
        %v861 = vsel %vm499, %v860, %v859
        %v862 = vrot.slane %v850, 3
        %v863 = vsel %vm502, %v862, %v861
        %v864 = vrot.slane %v851, 2
        %v865 = vsel %vm505, %v864, %v863
        %v866 = vpack.c.b16 %v865, %v865
        %v876 = vunpack.c.l.s4 1983009808
        %v877 = vunpack.c.0.s8 %v876
        %v878 = vlaneseq
        %v879 = vshrl.u32 %v878, 7
        %v880 = vsub.s32 %v877, %v879
        %v881 = vrot.slane %v820, %v880
        %v883 = vunpack.c.l.s4 1983009808
        %v884 = vunpack.c.0.s8 %v883
        %v885 = vlaneseq
        %v886 = vshrl.u32 %v885, 7
        %v887 = vsub.s32 %v884, %v886
        %v888 = vrot.slane %v821, %v887
        %v890 = vunpack.c.l.s4 1983009808
        %v891 = vunpack.c.0.s8 %v890
        %v892 = vlaneseq
        %v893 = vshrl.u32 %v892, 7
        %v894 = vsub.s32 %v891, %v893
        %v895 = vrot.slane %v822, %v894
        %v897 = vunpack.c.l.s4 1983009808
        %v898 = vunpack.c.0.s8 %v897
        %v899 = vlaneseq
        %v900 = vshrl.u32 %v899, 7
        %v901 = vsub.s32 %v898, %v900
        %v902 = vrot.slane %v823, %v901
        %v904 = vunpack.c.l.s4 1983009808
        %v905 = vunpack.c.0.s8 %v904
        %v906 = vlaneseq
        %v907 = vshrl.u32 %v906, 7
        %v908 = vsub.s32 %v905, %v907
        %v909 = vrot.slane %v824, %v908
        %v911 = vunpack.c.l.s4 1983009808
        %v912 = vunpack.c.0.s8 %v911
        %v913 = vlaneseq
        %v914 = vshrl.u32 %v913, 7
        %v915 = vsub.s32 %v912, %v914
        %v916 = vrot.slane %v825, %v915
        %v918 = vunpack.c.l.s4 1983009808
        %v919 = vunpack.c.0.s8 %v918
        %v920 = vlaneseq
        %v921 = vshrl.u32 %v920, 7
        %v922 = vsub.s32 %v919, %v921
        %v923 = vrot.slane %v826, %v922
        %v925 = vunpack.c.l.s4 1983009808
        %v926 = vunpack.c.0.s8 %v925
        %v927 = vlaneseq
        %v928 = vshrl.u32 %v927, 7
        %v929 = vsub.s32 %v926, %v928
        %v930 = vrot.slane %v827, %v929
        %v931 = vunpack.c.l.b16 %v881
        %v932 = vunpack.c.l.b16 %v888
        %v933 = vunpack.c.l.b16 %v895
        %v934 = vunpack.c.l.b16 %v902
        %v935 = vunpack.c.l.b16 %v909
        %v936 = vunpack.c.l.b16 %v916
        %v937 = vunpack.c.l.b16 %v923
        %v938 = vunpack.c.l.b16 %v930
        %v939 = vrot.slane %v931, 1
        %v940 = vsel %vm487, %v932, %v939
        %v941 = vrot.slane %v933, 7
        %v942 = vsel %vm490, %v941, %v940
        %v943 = vrot.slane %v934, 6
        %v944 = vsel %vm493, %v943, %v942
        %v945 = vrot.slane %v935, 5
        %v946 = vsel %vm496, %v945, %v944
        %v947 = vrot.slane %v936, 4
        %v948 = vsel %vm499, %v947, %v946
        %v949 = vrot.slane %v937, 3
        %v950 = vsel %vm502, %v949, %v948
        %v951 = vrot.slane %v938, 2
        %v952 = vsel %vm505, %v951, %v950
        %v953 = vpack.c.b16 %v952, %v952
        %v955 = vsel %vm595, %v866, 0
        %v958 = vsel %vm595, %v953, 0
        %960 = vmatprep.subr.bf16.mxu0 0
        %961 = vmatpush1.bf16.xpose.msra.mxu0 %v958
        %962 = vmatprep.subr.bf16.mxu0 0
        %963 = vmatpush1.bf16.xpose.msra.mxu0 0
        %964 = vmatprep.subr.bf16.mxu0 0
        %965 = vmatpush1.bf16.xpose.msra.mxu0 0
        %966 = vmatprep.subr.bf16.mxu0 0
        %967 = vmatpush1.bf16.xpose.msra.mxu0 0
        %968 = vmatprep.subr.bf16.mxu0 0
        %969 = vmatpush1.bf16.xpose.msra.mxu0 0
        %970 = vmatprep.subr.bf16.mxu0 0
        %971 = vmatpush1.bf16.xpose.msra.mxu0 0
        %972 = vmatprep.subr.bf16.mxu0 0
        %973 = vmatpush1.bf16.xpose.msra.mxu0 0
        %974 = vmatprep.subr.bf16.mxu0 0
        %975 = vmatpush1.bf16.xpose.msra.mxu0 0
        %976 = vmatprep.subr.bf16.mxu0 0
        %977 = vmatpush1.bf16.xpose.msra.mxu0 0
        %978 = vmatprep.subr.bf16.mxu0 0
        %979 = vmatpush1.bf16.xpose.msra.mxu0 0
        %980 = vmatprep.subr.bf16.mxu0 0
        %981 = vmatpush1.bf16.xpose.msra.mxu0 0
        %982 = vmatprep.subr.bf16.mxu0 0
        %983 = vmatpush1.bf16.xpose.msra.mxu0 0
        %984 = vmatprep.subr.bf16.mxu0 0
        %985 = vmatpush1.bf16.xpose.msra.mxu0 0
        %986 = vmatprep.subr.bf16.mxu0 0
        %987 = vmatpush1.bf16.xpose.msra.mxu0 0
        %988 = vmatprep.subr.bf16.mxu0 0
        %989 = vmatpush1.bf16.xpose.msra.mxu0 0
        %990 = vmatprep.subr.bf16.mxu0 0
        %991 = vmatpush1.bf16.xpose.msra.mxu0 0
        %992 = vmatprep.mubr.bf16.mxu0 0
        %993 = vmatmul.mubr.bf16.gmra.mrb[0].mxu0 %v955
        %v994 = vpop.f32.mrb[0].mxu0
        %v995 = vadd.f32 0.0, %v994
        %v996 = vpop.f32.mrb[0].mxu0
        %v997 = vpop.f32.mrb[0].mxu0
        %v998 = vpop.f32.mrb[0].mxu0
        %999 = vdwg.mxu0
        %v1000 = vsel %vm595, %v995, -inf
        %1001 = vmax.xlane.f32.xlu0 %v1000
        %v1002 = vpop.xlane.xlu0 %1001
        %v1003 = vsub.f32 %v995, %v1002
        %v1004 = vmul.f32 %v1003, 1.442695
        %v1005 = vpow.pop %v1004
        %v1006 = vsel %vm595, %v1005, 0.0
        %1007 = vadd.xlane.f32.xlu0 %v1006
        %v1008 = vpop.xlane.xlu0 %1007
        %v1009 = vrcp.pop %v1008
        %v1010 = vmul.f32 %v1005, %v1009
        %v1011 = vpack.c.bf16 %v1010, %v1010
        %v1021 = vunpack.c.l.s4 1983009808
        %v1022 = vunpack.c.0.s8 %v1021
        %v1023 = vlaneseq
        %v1024 = vshrl.u32 %v1023, 7
        %v1025 = vsub.s32 %v1022, %v1024
        %v1026 = vrot.slane %v828, %v1025
        %v1028 = vunpack.c.l.s4 1983009808
        %v1029 = vunpack.c.0.s8 %v1028
        %v1030 = vlaneseq
        %v1031 = vshrl.u32 %v1030, 7
        %v1032 = vsub.s32 %v1029, %v1031
        %v1033 = vrot.slane %v829, %v1032
        %v1035 = vunpack.c.l.s4 1983009808
        %v1036 = vunpack.c.0.s8 %v1035
        %v1037 = vlaneseq
        %v1038 = vshrl.u32 %v1037, 7
        %v1039 = vsub.s32 %v1036, %v1038
        %v1040 = vrot.slane %v830, %v1039
        %v1042 = vunpack.c.l.s4 1983009808
        %v1043 = vunpack.c.0.s8 %v1042
        %v1044 = vlaneseq
        %v1045 = vshrl.u32 %v1044, 7
        %v1046 = vsub.s32 %v1043, %v1045
        %v1047 = vrot.slane %v831, %v1046
        %v1049 = vunpack.c.l.s4 1983009808
        %v1050 = vunpack.c.0.s8 %v1049
        %v1051 = vlaneseq
        %v1052 = vshrl.u32 %v1051, 7
        %v1053 = vsub.s32 %v1050, %v1052
        %v1054 = vrot.slane %v832, %v1053
        %v1056 = vunpack.c.l.s4 1983009808
        %v1057 = vunpack.c.0.s8 %v1056
        %v1058 = vlaneseq
        %v1059 = vshrl.u32 %v1058, 7
        %v1060 = vsub.s32 %v1057, %v1059
        %v1061 = vrot.slane %v833, %v1060
        %v1063 = vunpack.c.l.s4 1983009808
        %v1064 = vunpack.c.0.s8 %v1063
        %v1065 = vlaneseq
        %v1066 = vshrl.u32 %v1065, 7
        %v1067 = vsub.s32 %v1064, %v1066
        %v1068 = vrot.slane %v834, %v1067
        %v1070 = vunpack.c.l.s4 1983009808
        %v1071 = vunpack.c.0.s8 %v1070
        %v1072 = vlaneseq
        %v1073 = vshrl.u32 %v1072, 7
        %v1074 = vsub.s32 %v1071, %v1073
        %v1075 = vrot.slane %v835, %v1074
        %v1076 = vunpack.c.l.b16 %v1026
        %v1077 = vunpack.c.l.b16 %v1033
        %v1078 = vunpack.c.l.b16 %v1040
        %v1079 = vunpack.c.l.b16 %v1047
        %v1080 = vunpack.c.l.b16 %v1054
        %v1081 = vunpack.c.l.b16 %v1061
        %v1082 = vunpack.c.l.b16 %v1068
        %v1083 = vunpack.c.l.b16 %v1075
        %v1084 = vrot.slane %v1076, 1
        %v1085 = vsel %vm487, %v1077, %v1084
        %v1086 = vrot.slane %v1078, 7
        %v1087 = vsel %vm490, %v1086, %v1085
        %v1088 = vrot.slane %v1079, 6
        %v1089 = vsel %vm493, %v1088, %v1087
        %v1090 = vrot.slane %v1080, 5
        %v1091 = vsel %vm496, %v1090, %v1089
        %v1092 = vrot.slane %v1081, 4
        %v1093 = vsel %vm499, %v1092, %v1091
        %v1094 = vrot.slane %v1082, 3
        %v1095 = vsel %vm502, %v1094, %v1093
        %v1096 = vrot.slane %v1083, 2
        %v1097 = vsel %vm505, %v1096, %v1095
        %v1098 = vpack.c.b16 %v1097, %v1097
        %v1100 = vsel %vm595, %v1011, 0
        %v1103 = vsel %vm744, %v1098, 0
        %1105 = vmatprep.subr.bf16.mxu0 0
        %1106 = vmatpush1.bf16.msra.mxu0 %v1103
        %1107 = vmatprep.subr.bf16.mxu0 0
        %1108 = vmatpush1.bf16.msra.mxu0 0
        %1109 = vmatprep.subr.bf16.mxu0 0
        %1110 = vmatpush1.bf16.msra.mxu0 0
        %1111 = vmatprep.subr.bf16.mxu0 0
        %1112 = vmatpush1.bf16.msra.mxu0 0
        %1113 = vmatprep.subr.bf16.mxu0 0
        %1114 = vmatpush1.bf16.msra.mxu0 0
        %1115 = vmatprep.subr.bf16.mxu0 0
        %1116 = vmatpush1.bf16.msra.mxu0 0
        %1117 = vmatprep.subr.bf16.mxu0 0
        %1118 = vmatpush1.bf16.msra.mxu0 0
        %1119 = vmatprep.subr.bf16.mxu0 0
        %1120 = vmatpush1.bf16.msra.mxu0 0
        %1121 = vmatprep.subr.bf16.mxu0 0
        %1122 = vmatpush1.bf16.msra.mxu0 0
        %1123 = vmatprep.subr.bf16.mxu0 0
        %1124 = vmatpush1.bf16.msra.mxu0 0
        %1125 = vmatprep.subr.bf16.mxu0 0
        %1126 = vmatpush1.bf16.msra.mxu0 0
        %1127 = vmatprep.subr.bf16.mxu0 0
        %1128 = vmatpush1.bf16.msra.mxu0 0
        %1129 = vmatprep.subr.bf16.mxu0 0
        %1130 = vmatpush1.bf16.msra.mxu0 0
        %1131 = vmatprep.subr.bf16.mxu0 0
        %1132 = vmatpush1.bf16.msra.mxu0 0
        %1133 = vmatprep.subr.bf16.mxu0 0
        %1134 = vmatpush1.bf16.msra.mxu0 0
        %1135 = vmatprep.subr.bf16.mxu0 0
        %1136 = vmatpush1.bf16.msra.mxu0 0
        %1137 = vmatprep.mubr.bf16.mxu0 0
        %1138 = vmatmul.mubr.bf16.gmra.mrb[0].mxu0 %v1100
        %v1139 = vpop.f32.mrb[0].mxu0
        %v1140 = vadd.f32 0.0, %v1139
        %v1141 = vpop.f32.mrb[0].mxu0
        %v1142 = vpop.f32.mrb[0].mxu0
        %v1143 = vpop.f32.mrb[0].mxu0
        %1144 = vdwg.mxu0
        %v1145 = vld [vmem:[%s375] sm:$0x2]
        %v1146 = vld [vmem:[%s375 + $0x2] sm:$0x2]
        %v1147 = vld [vmem:[%s375 + $0x4] sm:$0x2]
        %v1148 = vld [vmem:[%s375 + $0x6] sm:$0x2]
        %v1149 = vld [vmem:[%s375 + $0x8] sm:$0x2]
        %v1150 = vld [vmem:[%s375 + $0xa] sm:$0x2]
        %v1151 = vld [vmem:[%s375 + $0xc] sm:$0x2]
        %v1152 = vld [vmem:[%s375 + $0xe] sm:$0x2]
        %v1153 = vunpack.c.l.bf16 %v1145
        %v1154 = vunpack.c.l.bf16 %v1146
        %v1155 = vunpack.c.l.bf16 %v1147
        %v1156 = vunpack.c.l.bf16 %v1148
        %v1157 = vunpack.c.l.bf16 %v1149
        %v1158 = vunpack.c.l.bf16 %v1150
        %v1159 = vunpack.c.l.bf16 %v1151
        %v1160 = vunpack.c.l.bf16 %v1152
        %v1161 = vmul.f32 %v1153, 0.35355338
        %v1162 = vmul.f32 %v1154, 0.35355338
        %v1163 = vmul.f32 %v1155, 0.35355338
        %v1164 = vmul.f32 %v1156, 0.35355338
        %v1165 = vmul.f32 %v1157, 0.35355338
        %v1166 = vmul.f32 %v1158, 0.35355338
        %v1167 = vmul.f32 %v1159, 0.35355338
        %v1168 = vmul.f32 %v1160, 0.35355338
        %v1169 = vpack.c.bf16 %v1161, %v1161
        %v1170 = vpack.c.bf16 %v1162, %v1162
        %v1171 = vpack.c.bf16 %v1163, %v1163
        %v1172 = vpack.c.bf16 %v1164, %v1164
        %v1173 = vpack.c.bf16 %v1165, %v1165
        %v1174 = vpack.c.bf16 %v1166, %v1166
        %v1175 = vpack.c.bf16 %v1167, %v1167
        %v1176 = vpack.c.bf16 %v1168, %v1168
        %v1177 = vld [vmem:[%s382] sm:$0x2]
        %v1178 = vld [vmem:[%s382 + $0x2] sm:$0x2]
        %v1179 = vld [vmem:[%s382 + $0x4] sm:$0x2]
        %v1180 = vld [vmem:[%s382 + $0x6] sm:$0x2]
        %v1181 = vld [vmem:[%s382 + $0x8] sm:$0x2]
        %v1182 = vld [vmem:[%s382 + $0xa] sm:$0x2]
        %v1183 = vld [vmem:[%s382 + $0xc] sm:$0x2]
        %v1184 = vld [vmem:[%s382 + $0xe] sm:$0x2]
        %v1185 = vld [vmem:[%s389] sm:$0x2]
        %v1186 = vld [vmem:[%s389 + $0x2] sm:$0x2]
        %v1187 = vld [vmem:[%s389 + $0x4] sm:$0x2]
        %v1188 = vld [vmem:[%s389 + $0x6] sm:$0x2]
        %v1189 = vld [vmem:[%s389 + $0x8] sm:$0x2]
        %v1190 = vld [vmem:[%s389 + $0xa] sm:$0x2]
        %v1191 = vld [vmem:[%s389 + $0xc] sm:$0x2]
        %v1192 = vld [vmem:[%s389 + $0xe] sm:$0x2]
        %v1201 = vunpack.c.l.b16 %v1169
        %v1202 = vunpack.c.l.b16 %v1170
        %v1203 = vunpack.c.l.b16 %v1171
        %v1204 = vunpack.c.l.b16 %v1172
        %v1205 = vunpack.c.l.b16 %v1173
        %v1206 = vunpack.c.l.b16 %v1174
        %v1207 = vunpack.c.l.b16 %v1175
        %v1208 = vunpack.c.l.b16 %v1176
        %v1209 = vrot.slane %v1201, 2
        %v1210 = vrot.slane %v1202, 1
        %v1211 = vsel %vm487, %v1210, %v1209
        %v1212 = vsel %vm490, %v1203, %v1211
        %v1213 = vrot.slane %v1204, 7
        %v1214 = vsel %vm493, %v1213, %v1212
        %v1215 = vrot.slane %v1205, 6
        %v1216 = vsel %vm496, %v1215, %v1214
        %v1217 = vrot.slane %v1206, 5
        %v1218 = vsel %vm499, %v1217, %v1216
        %v1219 = vrot.slane %v1207, 4
        %v1220 = vsel %vm502, %v1219, %v1218
        %v1221 = vrot.slane %v1208, 3
        %v1222 = vsel %vm505, %v1221, %v1220
        %v1223 = vpack.c.b16 %v1222, %v1222
        %v1233 = vunpack.c.l.s4 1983009808
        %v1234 = vunpack.c.0.s8 %v1233
        %v1235 = vlaneseq
        %v1236 = vshrl.u32 %v1235, 7
        %v1237 = vsub.s32 %v1234, %v1236
        %v1238 = vrot.slane %v1177, %v1237
        %v1240 = vunpack.c.l.s4 1983009808
        %v1241 = vunpack.c.0.s8 %v1240
        %v1242 = vlaneseq
        %v1243 = vshrl.u32 %v1242, 7
        %v1244 = vsub.s32 %v1241, %v1243
        %v1245 = vrot.slane %v1178, %v1244
        %v1247 = vunpack.c.l.s4 1983009808
        %v1248 = vunpack.c.0.s8 %v1247
        %v1249 = vlaneseq
        %v1250 = vshrl.u32 %v1249, 7
        %v1251 = vsub.s32 %v1248, %v1250
        %v1252 = vrot.slane %v1179, %v1251
        %v1254 = vunpack.c.l.s4 1983009808
        %v1255 = vunpack.c.0.s8 %v1254
        %v1256 = vlaneseq
        %v1257 = vshrl.u32 %v1256, 7
        %v1258 = vsub.s32 %v1255, %v1257
        %v1259 = vrot.slane %v1180, %v1258
        %v1261 = vunpack.c.l.s4 1983009808
        %v1262 = vunpack.c.0.s8 %v1261
        %v1263 = vlaneseq
        %v1264 = vshrl.u32 %v1263, 7
        %v1265 = vsub.s32 %v1262, %v1264
        %v1266 = vrot.slane %v1181, %v1265
        %v1268 = vunpack.c.l.s4 1983009808
        %v1269 = vunpack.c.0.s8 %v1268
        %v1270 = vlaneseq
        %v1271 = vshrl.u32 %v1270, 7
        %v1272 = vsub.s32 %v1269, %v1271
        %v1273 = vrot.slane %v1182, %v1272
        %v1275 = vunpack.c.l.s4 1983009808
        %v1276 = vunpack.c.0.s8 %v1275
        %v1277 = vlaneseq
        %v1278 = vshrl.u32 %v1277, 7
        %v1279 = vsub.s32 %v1276, %v1278
        %v1280 = vrot.slane %v1183, %v1279
        %v1282 = vunpack.c.l.s4 1983009808
        %v1283 = vunpack.c.0.s8 %v1282
        %v1284 = vlaneseq
        %v1285 = vshrl.u32 %v1284, 7
        %v1286 = vsub.s32 %v1283, %v1285
        %v1287 = vrot.slane %v1184, %v1286
        %v1288 = vunpack.c.l.b16 %v1238
        %v1289 = vunpack.c.l.b16 %v1245
        %v1290 = vunpack.c.l.b16 %v1252
        %v1291 = vunpack.c.l.b16 %v1259
        %v1292 = vunpack.c.l.b16 %v1266
        %v1293 = vunpack.c.l.b16 %v1273
        %v1294 = vunpack.c.l.b16 %v1280
        %v1295 = vunpack.c.l.b16 %v1287
        %v1296 = vrot.slane %v1288, 2
        %v1297 = vrot.slane %v1289, 1
        %v1298 = vsel %vm487, %v1297, %v1296
        %v1299 = vsel %vm490, %v1290, %v1298
        %v1300 = vrot.slane %v1291, 7
        %v1301 = vsel %vm493, %v1300, %v1299
        %v1302 = vrot.slane %v1292, 6
        %v1303 = vsel %vm496, %v1302, %v1301
        %v1304 = vrot.slane %v1293, 5
        %v1305 = vsel %vm499, %v1304, %v1303
        %v1306 = vrot.slane %v1294, 4
        %v1307 = vsel %vm502, %v1306, %v1305
        %v1308 = vrot.slane %v1295, 3
        %v1309 = vsel %vm505, %v1308, %v1307
        %v1310 = vpack.c.b16 %v1309, %v1309
        %v1312 = vsel %vm595, %v1223, 0
        %v1315 = vsel %vm595, %v1310, 0
        %1317 = vmatprep.subr.bf16.mxu0 0
        %1318 = vmatpush1.bf16.xpose.msra.mxu0 %v1315
        %1319 = vmatprep.subr.bf16.mxu0 0
        %1320 = vmatpush1.bf16.xpose.msra.mxu0 0
        %1321 = vmatprep.subr.bf16.mxu0 0
        %1322 = vmatpush1.bf16.xpose.msra.mxu0 0
        %1323 = vmatprep.subr.bf16.mxu0 0
        %1324 = vmatpush1.bf16.xpose.msra.mxu0 0
        %1325 = vmatprep.subr.bf16.mxu0 0
        %1326 = vmatpush1.bf16.xpose.msra.mxu0 0
        %1327 = vmatprep.subr.bf16.mxu0 0
        %1328 = vmatpush1.bf16.xpose.msra.mxu0 0
        %1329 = vmatprep.subr.bf16.mxu0 0
        %1330 = vmatpush1.bf16.xpose.msra.mxu0 0
        %1331 = vmatprep.subr.bf16.mxu0 0
        %1332 = vmatpush1.bf16.xpose.msra.mxu0 0
        %1333 = vmatprep.subr.bf16.mxu0 0
        %1334 = vmatpush1.bf16.xpose.msra.mxu0 0
        %1335 = vmatprep.subr.bf16.mxu0 0
        %1336 = vmatpush1.bf16.xpose.msra.mxu0 0
        %1337 = vmatprep.subr.bf16.mxu0 0
        %1338 = vmatpush1.bf16.xpose.msra.mxu0 0
        %1339 = vmatprep.subr.bf16.mxu0 0
        %1340 = vmatpush1.bf16.xpose.msra.mxu0 0
        %1341 = vmatprep.subr.bf16.mxu0 0
        %1342 = vmatpush1.bf16.xpose.msra.mxu0 0
        %1343 = vmatprep.subr.bf16.mxu0 0
        %1344 = vmatpush1.bf16.xpose.msra.mxu0 0
        %1345 = vmatprep.subr.bf16.mxu0 0
        %1346 = vmatpush1.bf16.xpose.msra.mxu0 0
        %1347 = vmatprep.subr.bf16.mxu0 0
        %1348 = vmatpush1.bf16.xpose.msra.mxu0 0
        %1349 = vmatprep.mubr.bf16.mxu0 0
        %1350 = vmatmul.mubr.bf16.gmra.mrb[0].mxu0 %v1312
        %v1351 = vpop.f32.mrb[0].mxu0
        %v1352 = vadd.f32 0.0, %v1351
        %v1353 = vpop.f32.mrb[0].mxu0
        %v1354 = vpop.f32.mrb[0].mxu0
        %v1355 = vpop.f32.mrb[0].mxu0
        %1356 = vdwg.mxu0
        %v1357 = vsel %vm595, %v1352, -inf
        %1358 = vmax.xlane.f32.xlu0 %v1357
        %v1359 = vpop.xlane.xlu0 %1358
        %v1360 = vsub.f32 %v1352, %v1359
        %v1361 = vmul.f32 %v1360, 1.442695
        %v1362 = vpow.pop %v1361
        %v1363 = vsel %vm595, %v1362, 0.0
        %1364 = vadd.xlane.f32.xlu0 %v1363
        %v1365 = vpop.xlane.xlu0 %1364
        %v1366 = vrcp.pop %v1365
        %v1367 = vmul.f32 %v1362, %v1366
        %v1368 = vpack.c.bf16 %v1367, %v1367
        %v1378 = vunpack.c.l.s4 1983009808
        %v1379 = vunpack.c.0.s8 %v1378
        %v1380 = vlaneseq
        %v1381 = vshrl.u32 %v1380, 7
        %v1382 = vsub.s32 %v1379, %v1381
        %v1383 = vrot.slane %v1185, %v1382
        %v1385 = vunpack.c.l.s4 1983009808
        %v1386 = vunpack.c.0.s8 %v1385
        %v1387 = vlaneseq
        %v1388 = vshrl.u32 %v1387, 7
        %v1389 = vsub.s32 %v1386, %v1388
        %v1390 = vrot.slane %v1186, %v1389
        %v1392 = vunpack.c.l.s4 1983009808
        %v1393 = vunpack.c.0.s8 %v1392
        %v1394 = vlaneseq
        %v1395 = vshrl.u32 %v1394, 7
        %v1396 = vsub.s32 %v1393, %v1395
        %v1397 = vrot.slane %v1187, %v1396
        %v1399 = vunpack.c.l.s4 1983009808
        %v1400 = vunpack.c.0.s8 %v1399
        %v1401 = vlaneseq
        %v1402 = vshrl.u32 %v1401, 7
        %v1403 = vsub.s32 %v1400, %v1402
        %v1404 = vrot.slane %v1188, %v1403
        %v1406 = vunpack.c.l.s4 1983009808
        %v1407 = vunpack.c.0.s8 %v1406
        %v1408 = vlaneseq
        %v1409 = vshrl.u32 %v1408, 7
        %v1410 = vsub.s32 %v1407, %v1409
        %v1411 = vrot.slane %v1189, %v1410
        %v1413 = vunpack.c.l.s4 1983009808
        %v1414 = vunpack.c.0.s8 %v1413
        %v1415 = vlaneseq
        %v1416 = vshrl.u32 %v1415, 7
        %v1417 = vsub.s32 %v1414, %v1416
        %v1418 = vrot.slane %v1190, %v1417
        %v1420 = vunpack.c.l.s4 1983009808
        %v1421 = vunpack.c.0.s8 %v1420
        %v1422 = vlaneseq
        %v1423 = vshrl.u32 %v1422, 7
        %v1424 = vsub.s32 %v1421, %v1423
        %v1425 = vrot.slane %v1191, %v1424
        %v1427 = vunpack.c.l.s4 1983009808
        %v1428 = vunpack.c.0.s8 %v1427
        %v1429 = vlaneseq
        %v1430 = vshrl.u32 %v1429, 7
        %v1431 = vsub.s32 %v1428, %v1430
        %v1432 = vrot.slane %v1192, %v1431
        %v1433 = vunpack.c.l.b16 %v1383
        %v1434 = vunpack.c.l.b16 %v1390
        %v1435 = vunpack.c.l.b16 %v1397
        %v1436 = vunpack.c.l.b16 %v1404
        %v1437 = vunpack.c.l.b16 %v1411
        %v1438 = vunpack.c.l.b16 %v1418
        %v1439 = vunpack.c.l.b16 %v1425
        %v1440 = vunpack.c.l.b16 %v1432
        %v1441 = vrot.slane %v1433, 2
        %v1442 = vrot.slane %v1434, 1
        %v1443 = vsel %vm487, %v1442, %v1441
        %v1444 = vsel %vm490, %v1435, %v1443
        %v1445 = vrot.slane %v1436, 7
        %v1446 = vsel %vm493, %v1445, %v1444
        %v1447 = vrot.slane %v1437, 6
        %v1448 = vsel %vm496, %v1447, %v1446
        %v1449 = vrot.slane %v1438, 5
        %v1450 = vsel %vm499, %v1449, %v1448
        %v1451 = vrot.slane %v1439, 4
        %v1452 = vsel %vm502, %v1451, %v1450
        %v1453 = vrot.slane %v1440, 3
        %v1454 = vsel %vm505, %v1453, %v1452
        %v1455 = vpack.c.b16 %v1454, %v1454
        %v1457 = vsel %vm595, %v1368, 0
        %v1460 = vsel %vm744, %v1455, 0
        %1462 = vmatprep.subr.bf16.mxu0 0
        %1463 = vmatpush1.bf16.msra.mxu0 %v1460
        %1464 = vmatprep.subr.bf16.mxu0 0
        %1465 = vmatpush1.bf16.msra.mxu0 0
        %1466 = vmatprep.subr.bf16.mxu0 0
        %1467 = vmatpush1.bf16.msra.mxu0 0
        %1468 = vmatprep.subr.bf16.mxu0 0
        %1469 = vmatpush1.bf16.msra.mxu0 0
        %1470 = vmatprep.subr.bf16.mxu0 0
        %1471 = vmatpush1.bf16.msra.mxu0 0
        %1472 = vmatprep.subr.bf16.mxu0 0
        %1473 = vmatpush1.bf16.msra.mxu0 0
        %1474 = vmatprep.subr.bf16.mxu0 0
        %1475 = vmatpush1.bf16.msra.mxu0 0
        %1476 = vmatprep.subr.bf16.mxu0 0
        %1477 = vmatpush1.bf16.msra.mxu0 0
        %1478 = vmatprep.subr.bf16.mxu0 0
        %1479 = vmatpush1.bf16.msra.mxu0 0
        %1480 = vmatprep.subr.bf16.mxu0 0
        %1481 = vmatpush1.bf16.msra.mxu0 0
        %1482 = vmatprep.subr.bf16.mxu0 0
        %1483 = vmatpush1.bf16.msra.mxu0 0
        %1484 = vmatprep.subr.bf16.mxu0 0
        %1485 = vmatpush1.bf16.msra.mxu0 0
        %1486 = vmatprep.subr.bf16.mxu0 0
        %1487 = vmatpush1.bf16.msra.mxu0 0
        %1488 = vmatprep.subr.bf16.mxu0 0
        %1489 = vmatpush1.bf16.msra.mxu0 0
        %1490 = vmatprep.subr.bf16.mxu0 0
        %1491 = vmatpush1.bf16.msra.mxu0 0
        %1492 = vmatprep.subr.bf16.mxu0 0
        %1493 = vmatpush1.bf16.msra.mxu0 0
        %1494 = vmatprep.mubr.bf16.mxu0 0
        %1495 = vmatmul.mubr.bf16.gmra.mrb[0].mxu0 %v1457
        %v1496 = vpop.f32.mrb[0].mxu0
        %v1497 = vadd.f32 0.0, %v1496
        %v1498 = vpop.f32.mrb[0].mxu0
        %v1499 = vpop.f32.mrb[0].mxu0
        %v1500 = vpop.f32.mrb[0].mxu0
        %1501 = vdwg.mxu0
        %v1502 = vld [vmem:[%s375] sm:$0x2]
        %v1503 = vld [vmem:[%s375 + $0x2] sm:$0x2]
        %v1504 = vld [vmem:[%s375 + $0x4] sm:$0x2]
        %v1505 = vld [vmem:[%s375 + $0x6] sm:$0x2]
        %v1506 = vld [vmem:[%s375 + $0x8] sm:$0x2]
        %v1507 = vld [vmem:[%s375 + $0xa] sm:$0x2]
        %v1508 = vld [vmem:[%s375 + $0xc] sm:$0x2]
        %v1509 = vld [vmem:[%s375 + $0xe] sm:$0x2]
        %v1510 = vunpack.c.l.bf16 %v1502
        %v1511 = vunpack.c.l.bf16 %v1503
        %v1512 = vunpack.c.l.bf16 %v1504
        %v1513 = vunpack.c.l.bf16 %v1505
        %v1514 = vunpack.c.l.bf16 %v1506
        %v1515 = vunpack.c.l.bf16 %v1507
        %v1516 = vunpack.c.l.bf16 %v1508
        %v1517 = vunpack.c.l.bf16 %v1509
        %v1518 = vmul.f32 %v1510, 0.35355338
        %v1519 = vmul.f32 %v1511, 0.35355338
        %v1520 = vmul.f32 %v1512, 0.35355338
        %v1521 = vmul.f32 %v1513, 0.35355338
        %v1522 = vmul.f32 %v1514, 0.35355338
        %v1523 = vmul.f32 %v1515, 0.35355338
        %v1524 = vmul.f32 %v1516, 0.35355338
        %v1525 = vmul.f32 %v1517, 0.35355338
        %v1526 = vpack.c.bf16 %v1518, %v1518
        %v1527 = vpack.c.bf16 %v1519, %v1519
        %v1528 = vpack.c.bf16 %v1520, %v1520
        %v1529 = vpack.c.bf16 %v1521, %v1521
        %v1530 = vpack.c.bf16 %v1522, %v1522
        %v1531 = vpack.c.bf16 %v1523, %v1523
        %v1532 = vpack.c.bf16 %v1524, %v1524
        %v1533 = vpack.c.bf16 %v1525, %v1525
        %v1534 = vld [vmem:[%s382] sm:$0x2]
        %v1535 = vld [vmem:[%s382 + $0x2] sm:$0x2]
        %v1536 = vld [vmem:[%s382 + $0x4] sm:$0x2]
        %v1537 = vld [vmem:[%s382 + $0x6] sm:$0x2]
        %v1538 = vld [vmem:[%s382 + $0x8] sm:$0x2]
        %v1539 = vld [vmem:[%s382 + $0xa] sm:$0x2]
        %v1540 = vld [vmem:[%s382 + $0xc] sm:$0x2]
        %v1541 = vld [vmem:[%s382 + $0xe] sm:$0x2]
        %v1542 = vld [vmem:[%s389] sm:$0x2]
        %v1543 = vld [vmem:[%s389 + $0x2] sm:$0x2]
        %v1544 = vld [vmem:[%s389 + $0x4] sm:$0x2]
        %v1545 = vld [vmem:[%s389 + $0x6] sm:$0x2]
        %v1546 = vld [vmem:[%s389 + $0x8] sm:$0x2]
        %v1547 = vld [vmem:[%s389 + $0xa] sm:$0x2]
        %v1548 = vld [vmem:[%s389 + $0xc] sm:$0x2]
        %v1549 = vld [vmem:[%s389 + $0xe] sm:$0x2]
        %v1558 = vunpack.c.l.b16 %v1526
        %v1559 = vunpack.c.l.b16 %v1527
        %v1560 = vunpack.c.l.b16 %v1528
        %v1561 = vunpack.c.l.b16 %v1529
        %v1562 = vunpack.c.l.b16 %v1530
        %v1563 = vunpack.c.l.b16 %v1531
        %v1564 = vunpack.c.l.b16 %v1532
        %v1565 = vunpack.c.l.b16 %v1533
        %v1566 = vrot.slane %v1558, 3
        %v1567 = vrot.slane %v1559, 2
        %v1568 = vsel %vm487, %v1567, %v1566
        %v1569 = vrot.slane %v1560, 1
        %v1570 = vsel %vm490, %v1569, %v1568
        %v1571 = vsel %vm493, %v1561, %v1570
        %v1572 = vrot.slane %v1562, 7
        %v1573 = vsel %vm496, %v1572, %v1571
        %v1574 = vrot.slane %v1563, 6
        %v1575 = vsel %vm499, %v1574, %v1573
        %v1576 = vrot.slane %v1564, 5
        %v1577 = vsel %vm502, %v1576, %v1575
        %v1578 = vrot.slane %v1565, 4
        %v1579 = vsel %vm505, %v1578, %v1577
        %v1580 = vpack.c.b16 %v1579, %v1579
        %v1590 = vunpack.c.l.s4 1983009808
        %v1591 = vunpack.c.0.s8 %v1590
        %v1592 = vlaneseq
        %v1593 = vshrl.u32 %v1592, 7
        %v1594 = vsub.s32 %v1591, %v1593
        %v1595 = vrot.slane %v1534, %v1594
        %v1597 = vunpack.c.l.s4 1983009808
        %v1598 = vunpack.c.0.s8 %v1597
        %v1599 = vlaneseq
        %v1600 = vshrl.u32 %v1599, 7
        %v1601 = vsub.s32 %v1598, %v1600
        %v1602 = vrot.slane %v1535, %v1601
        %v1604 = vunpack.c.l.s4 1983009808
        %v1605 = vunpack.c.0.s8 %v1604
        %v1606 = vlaneseq
        %v1607 = vshrl.u32 %v1606, 7
        %v1608 = vsub.s32 %v1605, %v1607
        %v1609 = vrot.slane %v1536, %v1608
        %v1611 = vunpack.c.l.s4 1983009808
        %v1612 = vunpack.c.0.s8 %v1611
        %v1613 = vlaneseq
        %v1614 = vshrl.u32 %v1613, 7
        %v1615 = vsub.s32 %v1612, %v1614
        %v1616 = vrot.slane %v1537, %v1615
        %v1618 = vunpack.c.l.s4 1983009808
        %v1619 = vunpack.c.0.s8 %v1618
        %v1620 = vlaneseq
        %v1621 = vshrl.u32 %v1620, 7
        %v1622 = vsub.s32 %v1619, %v1621
        %v1623 = vrot.slane %v1538, %v1622
        %v1625 = vunpack.c.l.s4 1983009808
        %v1626 = vunpack.c.0.s8 %v1625
        %v1627 = vlaneseq
        %v1628 = vshrl.u32 %v1627, 7
        %v1629 = vsub.s32 %v1626, %v1628
        %v1630 = vrot.slane %v1539, %v1629
        %v1632 = vunpack.c.l.s4 1983009808
        %v1633 = vunpack.c.0.s8 %v1632
        %v1634 = vlaneseq
        %v1635 = vshrl.u32 %v1634, 7
        %v1636 = vsub.s32 %v1633, %v1635
        %v1637 = vrot.slane %v1540, %v1636
        %v1639 = vunpack.c.l.s4 1983009808
        %v1640 = vunpack.c.0.s8 %v1639
        %v1641 = vlaneseq
        %v1642 = vshrl.u32 %v1641, 7
        %v1643 = vsub.s32 %v1640, %v1642
        %v1644 = vrot.slane %v1541, %v1643
        %v1645 = vunpack.c.l.b16 %v1595
        %v1646 = vunpack.c.l.b16 %v1602
        %v1647 = vunpack.c.l.b16 %v1609
        %v1648 = vunpack.c.l.b16 %v1616
        %v1649 = vunpack.c.l.b16 %v1623
        %v1650 = vunpack.c.l.b16 %v1630
        %v1651 = vunpack.c.l.b16 %v1637
        %v1652 = vunpack.c.l.b16 %v1644
        %v1653 = vrot.slane %v1645, 3
        %v1654 = vrot.slane %v1646, 2
        %v1655 = vsel %vm487, %v1654, %v1653
        %v1656 = vrot.slane %v1647, 1
        %v1657 = vsel %vm490, %v1656, %v1655
        %v1658 = vsel %vm493, %v1648, %v1657
        %v1659 = vrot.slane %v1649, 7
        %v1660 = vsel %vm496, %v1659, %v1658
        %v1661 = vrot.slane %v1650, 6
        %v1662 = vsel %vm499, %v1661, %v1660
        %v1663 = vrot.slane %v1651, 5
        %v1664 = vsel %vm502, %v1663, %v1662
        %v1665 = vrot.slane %v1652, 4
        %v1666 = vsel %vm505, %v1665, %v1664
        %v1667 = vpack.c.b16 %v1666, %v1666
        %v1669 = vsel %vm595, %v1580, 0
        %v1672 = vsel %vm595, %v1667, 0
        %1674 = vmatprep.subr.bf16.mxu0 0
        %1675 = vmatpush1.bf16.xpose.msra.mxu0 %v1672
        %1676 = vmatprep.subr.bf16.mxu0 0
        %1677 = vmatpush1.bf16.xpose.msra.mxu0 0
        %1678 = vmatprep.subr.bf16.mxu0 0
        %1679 = vmatpush1.bf16.xpose.msra.mxu0 0
        %1680 = vmatprep.subr.bf16.mxu0 0
        %1681 = vmatpush1.bf16.xpose.msra.mxu0 0
        %1682 = vmatprep.subr.bf16.mxu0 0
        %1683 = vmatpush1.bf16.xpose.msra.mxu0 0
        %1684 = vmatprep.subr.bf16.mxu0 0
        %1685 = vmatpush1.bf16.xpose.msra.mxu0 0
        %1686 = vmatprep.subr.bf16.mxu0 0
        %1687 = vmatpush1.bf16.xpose.msra.mxu0 0
        %1688 = vmatprep.subr.bf16.mxu0 0
        %1689 = vmatpush1.bf16.xpose.msra.mxu0 0
        %1690 = vmatprep.subr.bf16.mxu0 0
        %1691 = vmatpush1.bf16.xpose.msra.mxu0 0
        %1692 = vmatprep.subr.bf16.mxu0 0
        %1693 = vmatpush1.bf16.xpose.msra.mxu0 0
        %1694 = vmatprep.subr.bf16.mxu0 0
        %1695 = vmatpush1.bf16.xpose.msra.mxu0 0
        %1696 = vmatprep.subr.bf16.mxu0 0
        %1697 = vmatpush1.bf16.xpose.msra.mxu0 0
        %1698 = vmatprep.subr.bf16.mxu0 0
        %1699 = vmatpush1.bf16.xpose.msra.mxu0 0
        %1700 = vmatprep.subr.bf16.mxu0 0
        %1701 = vmatpush1.bf16.xpose.msra.mxu0 0
        %1702 = vmatprep.subr.bf16.mxu0 0
        %1703 = vmatpush1.bf16.xpose.msra.mxu0 0
        %1704 = vmatprep.subr.bf16.mxu0 0
        %1705 = vmatpush1.bf16.xpose.msra.mxu0 0
        %1706 = vmatprep.mubr.bf16.mxu0 0
        %1707 = vmatmul.mubr.bf16.gmra.mrb[0].mxu0 %v1669
        %v1708 = vpop.f32.mrb[0].mxu0
        %v1709 = vadd.f32 0.0, %v1708
        %v1710 = vpop.f32.mrb[0].mxu0
        %v1711 = vpop.f32.mrb[0].mxu0
        %v1712 = vpop.f32.mrb[0].mxu0
        %1713 = vdwg.mxu0
        %v1714 = vsel %vm595, %v1709, -inf
        %1715 = vmax.xlane.f32.xlu0 %v1714
        %v1716 = vpop.xlane.xlu0 %1715
        %v1717 = vsub.f32 %v1709, %v1716
        %v1718 = vmul.f32 %v1717, 1.442695
        %v1719 = vpow.pop %v1718
        %v1720 = vsel %vm595, %v1719, 0.0
        %1721 = vadd.xlane.f32.xlu0 %v1720
        %v1722 = vpop.xlane.xlu0 %1721
        %v1723 = vrcp.pop %v1722
        %v1724 = vmul.f32 %v1719, %v1723
        %v1725 = vpack.c.bf16 %v1724, %v1724
        %v1735 = vunpack.c.l.s4 1983009808
        %v1736 = vunpack.c.0.s8 %v1735
        %v1737 = vlaneseq
        %v1738 = vshrl.u32 %v1737, 7
        %v1739 = vsub.s32 %v1736, %v1738
        %v1740 = vrot.slane %v1542, %v1739
        %v1742 = vunpack.c.l.s4 1983009808
        %v1743 = vunpack.c.0.s8 %v1742
        %v1744 = vlaneseq
        %v1745 = vshrl.u32 %v1744, 7
        %v1746 = vsub.s32 %v1743, %v1745
        %v1747 = vrot.slane %v1543, %v1746
        %v1749 = vunpack.c.l.s4 1983009808
        %v1750 = vunpack.c.0.s8 %v1749
        %v1751 = vlaneseq
        %v1752 = vshrl.u32 %v1751, 7
        %v1753 = vsub.s32 %v1750, %v1752
        %v1754 = vrot.slane %v1544, %v1753
        %v1756 = vunpack.c.l.s4 1983009808
        %v1757 = vunpack.c.0.s8 %v1756
        %v1758 = vlaneseq
        %v1759 = vshrl.u32 %v1758, 7
        %v1760 = vsub.s32 %v1757, %v1759
        %v1761 = vrot.slane %v1545, %v1760
        %v1763 = vunpack.c.l.s4 1983009808
        %v1764 = vunpack.c.0.s8 %v1763
        %v1765 = vlaneseq
        %v1766 = vshrl.u32 %v1765, 7
        %v1767 = vsub.s32 %v1764, %v1766
        %v1768 = vrot.slane %v1546, %v1767
        %v1770 = vunpack.c.l.s4 1983009808
        %v1771 = vunpack.c.0.s8 %v1770
        %v1772 = vlaneseq
        %v1773 = vshrl.u32 %v1772, 7
        %v1774 = vsub.s32 %v1771, %v1773
        %v1775 = vrot.slane %v1547, %v1774
        %v1777 = vunpack.c.l.s4 1983009808
        %v1778 = vunpack.c.0.s8 %v1777
        %v1779 = vlaneseq
        %v1780 = vshrl.u32 %v1779, 7
        %v1781 = vsub.s32 %v1778, %v1780
        %v1782 = vrot.slane %v1548, %v1781
        %v1784 = vunpack.c.l.s4 1983009808
        %v1785 = vunpack.c.0.s8 %v1784
        %v1786 = vlaneseq
        %v1787 = vshrl.u32 %v1786, 7
        %v1788 = vsub.s32 %v1785, %v1787
        %v1789 = vrot.slane %v1549, %v1788
        %v1790 = vunpack.c.l.b16 %v1740
        %v1791 = vunpack.c.l.b16 %v1747
        %v1792 = vunpack.c.l.b16 %v1754
        %v1793 = vunpack.c.l.b16 %v1761
        %v1794 = vunpack.c.l.b16 %v1768
        %v1795 = vunpack.c.l.b16 %v1775
        %v1796 = vunpack.c.l.b16 %v1782
        %v1797 = vunpack.c.l.b16 %v1789
        %v1798 = vrot.slane %v1790, 3
        %v1799 = vrot.slane %v1791, 2
        %v1800 = vsel %vm487, %v1799, %v1798
        %v1801 = vrot.slane %v1792, 1
        %v1802 = vsel %vm490, %v1801, %v1800
        %v1803 = vsel %vm493, %v1793, %v1802
        %v1804 = vrot.slane %v1794, 7
        %v1805 = vsel %vm496, %v1804, %v1803
        %v1806 = vrot.slane %v1795, 6
        %v1807 = vsel %vm499, %v1806, %v1805
        %v1808 = vrot.slane %v1796, 5
        %v1809 = vsel %vm502, %v1808, %v1807
        %v1810 = vrot.slane %v1797, 4
        %v1811 = vsel %vm505, %v1810, %v1809
        %v1812 = vpack.c.b16 %v1811, %v1811
        %v1814 = vsel %vm595, %v1725, 0
        %v1817 = vsel %vm744, %v1812, 0
        %1819 = vmatprep.subr.bf16.mxu0 0
        %1820 = vmatpush1.bf16.msra.mxu0 %v1817
        %1821 = vmatprep.subr.bf16.mxu0 0
        %1822 = vmatpush1.bf16.msra.mxu0 0
        %1823 = vmatprep.subr.bf16.mxu0 0
        %1824 = vmatpush1.bf16.msra.mxu0 0
        %1825 = vmatprep.subr.bf16.mxu0 0
        %1826 = vmatpush1.bf16.msra.mxu0 0
        %1827 = vmatprep.subr.bf16.mxu0 0
        %1828 = vmatpush1.bf16.msra.mxu0 0
        %1829 = vmatprep.subr.bf16.mxu0 0
        %1830 = vmatpush1.bf16.msra.mxu0 0
        %1831 = vmatprep.subr.bf16.mxu0 0
        %1832 = vmatpush1.bf16.msra.mxu0 0
        %1833 = vmatprep.subr.bf16.mxu0 0
        %1834 = vmatpush1.bf16.msra.mxu0 0
        %1835 = vmatprep.subr.bf16.mxu0 0
        %1836 = vmatpush1.bf16.msra.mxu0 0
        %1837 = vmatprep.subr.bf16.mxu0 0
        %1838 = vmatpush1.bf16.msra.mxu0 0
        %1839 = vmatprep.subr.bf16.mxu0 0
        %1840 = vmatpush1.bf16.msra.mxu0 0
        %1841 = vmatprep.subr.bf16.mxu0 0
        %1842 = vmatpush1.bf16.msra.mxu0 0
        %1843 = vmatprep.subr.bf16.mxu0 0
        %1844 = vmatpush1.bf16.msra.mxu0 0
        %1845 = vmatprep.subr.bf16.mxu0 0
        %1846 = vmatpush1.bf16.msra.mxu0 0
        %1847 = vmatprep.subr.bf16.mxu0 0
        %1848 = vmatpush1.bf16.msra.mxu0 0
        %1849 = vmatprep.subr.bf16.mxu0 0
        %1850 = vmatpush1.bf16.msra.mxu0 0
        %1851 = vmatprep.mubr.bf16.mxu0 0
        %1852 = vmatmul.mubr.bf16.gmra.mrb[0].mxu0 %v1814
        %v1853 = vpop.f32.mrb[0].mxu0
        %v1854 = vadd.f32 0.0, %v1853
        %v1855 = vpop.f32.mrb[0].mxu0
        %v1856 = vpop.f32.mrb[0].mxu0
        %v1857 = vpop.f32.mrb[0].mxu0
        %1858 = vdwg.mxu0
        %1860 = vrot.lane.b32.xlu0 %v1140, 8
        %v1861 = vpop.permute.xlu0 %1860
        %1864 = vrot.lane.b32.xlu0 %v1497, 16
        %v1865 = vpop.permute.xlu0 %1864
        %1868 = vrot.lane.b32.xlu0 %v1854, 24
        %v1869 = vpop.permute.xlu0 %1868
        %v1871 = vsel %vm595, %v783, %v1861
        %vm1872 = vcmask 130048
        %v1873 = vsel %vm1872, %v1871, %v1865
        %vm1874 = vcmask 195584
        %v1875 = vsel %vm1874, %v1873, %v1869
        %v1876 = vpack.c.bf16 %v1875, %v1875
        %vm1877 = vcmask 257024
        %1878 = vst.msk [vmem:[%s420] sm:$0xf] %vm1877, %v1876
        %p1879 = scmp.lt.s32.totalorder %s14, 1
        %s1880 = scalar_select %p1879, %s14, 1
        %s1881 = smul.addr %s1880, 4
        %s1882 = scalar_lea.vmem %s3, %s1881
        // Predicated region
        $region156: #{transformer_forward.12} parent=142 // pred_check
          %p1883 = pneg %p110
        $region157: #{transformer_forward.12} parent=142 // pred_check_branch
          %1885 = sbr.rel (%p1883) target = $region159
        $region158: #{transformer_forward.12} parent=142 // pred_region
          _
        $region159: #{transformer_forward.12} parent=142 // pred_fallthru
          _
      $region143: #{transformer_forward.12} parent=5 // pred_fallthru
        _
      %p1886 = scmp.le.s32.totalorder 2, %s9
      // Predicated region
      $region160: #{transformer_forward.12} parent=5 // pred_check
        %p1887 = pneg %p1886
      $region161: #{transformer_forward.12} parent=5 // pred_check_branch
        %1889 = sbr.rel (%p1887) target = $region163
      $region162: #{transformer_forward.12} parent=5 // pred_region
        %s1890 = ssub.s32 %s9, 2
        // Predicated region
        $region164: #{transformer_forward.12} parent=162 // pred_check
          %p1891 = pneg %p116
        $region165: #{transformer_forward.12} parent=162 // pred_check_branch
          %1893 = sbr.rel (%p1891) target = $region167
        $region166: #{transformer_forward.12} parent=162 // pred_region
          %p1894 = scmp.lt.s32.totalorder %s15, 1
          %s1895 = scalar_select %p1894, %s15, 1
          %s1896 = smul.addr %s1895, 4
          %s1897 = scalar_lea.vmem %s3, %s1896
        $region167: #{transformer_forward.12} parent=162 // pred_fallthru
          _
      $region163: #{transformer_forward.12} parent=5 // pred_fallthru
        _
    $region6: #{transformer_forward.12} parent=1 // loop_footer
      %s13 = sadd.s32 1, %s9
    $region7: #{transformer_forward.12} parent=1 // loop_footer_branch
      %8 = sbr.rel target = $region3
    $region8: #{transformer_forward.12} parent=1 // loop_exit
      _

// kernel: transformer_forward.14
$region0: #{transformer_forward.14}
  #allocation0 [shape = 'u32[]', space=smem, size = 0x4, offset = 0x4, fixed_abs, tag = 'smem constant byte address 0x4 - core index']
  #allocation1 [shape = 'u32[144,128]{1,0:T(1,128)}', space=vmem, size = 0x12000, scoped, tag = 'internal scratch']
  #allocation2 [shape = 'f32[16,32]{1,0:T(8,128)}', space=vmem, size = 0x2000, scoped, tag = 'scratch operand']
  %s0 = inlined_call_operand.vmem [shape: bf16[16,32], index: 0, kind: input, shape index: {}]
  %s1 = inlined_call_operand.vmem [shape: bf16[32,2048], index: 1, kind: input, shape index: {}]
  %s2 = inlined_call_operand.vmem [shape: f32[1,2048], index: 2, kind: input, shape index: {}]
  %s3 = inlined_call_operand.vmem [shape: bf16[2048,32], index: 3, kind: input, shape index: {}]
  %s4 = inlined_call_operand.vmem [shape: f32[1,32], index: 4, kind: input, shape index: {}]
  %s5 = inlined_call_operand.vmem [shape: f32[1,32], index: 5, kind: input, shape index: {}]
  %s6 = inlined_call_operand.vmem [shape: f32[1,32], index: 6, kind: input, shape index: {}]
  %s7 = inlined_call_operand.vmem [shape: bf16[16,32], index: 7, kind: output, shape index: {}]
  %s8 = sld [smem:[#allocation0]]
  $region92: #{transformer_forward.14} parent=0
    _
  %s10 = ssub.s32 1, %s8
  %s11 = scalar_select 0, %s10, %s8
  $region1: #{transformer_forward.14} parent=0
    #allocation3 [shape = 'u8[65536]{0}', space=vmem, size = 0x10000, scoped, tag = 'input window, operand 1']
    loop: start=0, step=1, limit=6
    $region2: #{transformer_forward.14} parent=1 // loop_pre_header
      _
    $region3: #{transformer_forward.14} parent=1 // loop_header
      %s13 = sphi 0, %s17
      %p14 = scmp.ge.s32.totalorder %s13, 6
      %s20 = sphi 0, %s32
      %s21 = sphi 0, %s28
      %s22 = sphi 0, %s20
      %s23 = sphi 0, %s21
      %s24 = sphi 0, %s22
      %s25 = sphi 0, %s23
      %s35 = sphi 0, %s37
      %s38 = sphi 0, %s35
      %s39 = sphi 0, %s38
      %s55 = sphi 0, %s39
      %s61 = sphi 0, %s63
      %s64 = sphi 0, %s61
      %s65 = sphi 0, %s64
      %s81 = sphi 0, %s65
      %s87 = sphi 0, %s89
      %s90 = sphi 0, %s87
      %s91 = sphi 0, %s90
      %s107 = sphi 0, %s91
      %s113 = sphi 0, %s115
      %s116 = sphi 0, %s113
      %s117 = sphi 0, %s116
      %s133 = sphi 0, %s117
      %s137 = sphi 0, %s137
      %s139 = sphi 0, %s137
      %s140 = sphi 0, %s139
      %s154 = sphi 0, %s140
      %s158 = sphi 0, %s158
      %s160 = sphi 0, %s158
      %s161 = sphi 0, %s160
      %s175 = sphi 0, %s161
      %s179 = sphi 0, %s179
      %s181 = sphi 0, %s179
      %s182 = sphi 0, %s181
      %s196 = sphi 0, %s182
      %s202 = sphi 0, %s204
      %s205 = sphi 0, %s202
      %s206 = sphi 0, %s205
      %s222 = sphi 0, %s206
    $region4: #{transformer_forward.14} parent=1 // loop_header_branch
      %16 = sbr.rel (%p14) target = $region8
    $region5: #{transformer_forward.14} parent=1 // loop_body
      %s18 = ssub.s32 %s13, 1
      %s19 = ssub.s32 %s13, 2
      %s26 = sadd.s32 1, %s21
      %p27 = scmp.ge.s32.totalorder %s26, 4
      %s28 = scalar_select %p27, 0, %s26
      %s29 = sadd.s32 1, %s20
      %s30 = scalar_select %p27, %s29, %s20
      %p31 = scmp.ge.s32.totalorder %s30, 1
      %s32 = scalar_select %p31, 0, %s30
      %s33 = ssub.s32 %s20, %s32
      %p34 = scmp.eq.s32.totalorder %s33, 0
      %s36 = sadd.s32 %s35, 1
      %s37 = scalar_select %p34, %s35, %s36
      %p40 = pneg %p34
      %p41 = scmp.eq.s32.totalorder %s13, 3
      %p42 = por %p40, %p41
      %p43 = scmp.ne.s32.totalorder %s35, %s38
      %p44 = scmp.eq.s32.totalorder %s13, 0
      %p45 = por %p43, %p44
      %p46 = scmp.ne.s32.totalorder %s35, %s38
      %p47 = scmp.eq.s32.totalorder %s18, 3
      %p48 = por %p46, %p47
      %p49 = scmp.ne.s32.totalorder %s38, %s39
      %p50 = scmp.eq.s32.totalorder %s18, 0
      %p51 = por %p49, %p50
      %p52 = scmp.ne.s32.totalorder %s38, %s39
      %p53 = scmp.eq.s32.totalorder %s19, 3
      %p54 = por %p52, %p53
      %p56 = scmp.ne.s32.totalorder %s39, %s55
      %p57 = scmp.eq.s32.totalorder %s19, 0
      %p58 = por %p56, %p57
      %s59 = ssub.s32 %s21, %s28
      %p60 = scmp.eq.s32.totalorder %s59, 0
      %s62 = sadd.s32 %s61, 1
      %s63 = scalar_select %p60, %s61, %s62
      %p66 = pneg %p60
      %p67 = scmp.eq.s32.totalorder %s13, 3
      %p68 = por %p66, %p67
      %p69 = scmp.ne.s32.totalorder %s61, %s64
      %p70 = scmp.eq.s32.totalorder %s13, 0
      %p71 = por %p69, %p70
      %p72 = scmp.ne.s32.totalorder %s61, %s64
      %p73 = scmp.eq.s32.totalorder %s18, 3
      %p74 = por %p72, %p73
      %p75 = scmp.ne.s32.totalorder %s64, %s65
      %p76 = scmp.eq.s32.totalorder %s18, 0
      %p77 = por %p75, %p76
      %p78 = scmp.ne.s32.totalorder %s64, %s65
      %p79 = scmp.eq.s32.totalorder %s19, 3
      %p80 = por %p78, %p79
      %p82 = scmp.ne.s32.totalorder %s65, %s81
      %p83 = scmp.eq.s32.totalorder %s19, 0
      %p84 = por %p82, %p83
      %s85 = ssub.s32 %s21, %s28
      %p86 = scmp.eq.s32.totalorder %s85, 0
      %s88 = sadd.s32 %s87, 1
      %s89 = scalar_select %p86, %s87, %s88
      %p92 = pneg %p86
      %p93 = scmp.eq.s32.totalorder %s13, 3
      %p94 = por %p92, %p93
      %p95 = scmp.ne.s32.totalorder %s87, %s90
      %p96 = scmp.eq.s32.totalorder %s13, 0
      %p97 = por %p95, %p96
      %p98 = scmp.ne.s32.totalorder %s87, %s90
      %p99 = scmp.eq.s32.totalorder %s18, 3
      %p100 = por %p98, %p99
      %p101 = scmp.ne.s32.totalorder %s90, %s91
      %p102 = scmp.eq.s32.totalorder %s18, 0
      %p103 = por %p101, %p102
      %p104 = scmp.ne.s32.totalorder %s90, %s91
      %p105 = scmp.eq.s32.totalorder %s19, 3
      %p106 = por %p104, %p105
      %p108 = scmp.ne.s32.totalorder %s91, %s107
      %p109 = scmp.eq.s32.totalorder %s19, 0
      %p110 = por %p108, %p109
      %s111 = ssub.s32 %s21, %s28
      %p112 = scmp.eq.s32.totalorder %s111, 0
      %s114 = sadd.s32 %s113, 1
      %s115 = scalar_select %p112, %s113, %s114
      %p118 = pneg %p112
      %p119 = scmp.eq.s32.totalorder %s13, 3
      %p120 = por %p118, %p119
      %p121 = scmp.ne.s32.totalorder %s113, %s116
      %p122 = scmp.eq.s32.totalorder %s13, 0
      %p123 = por %p121, %p122
      %p124 = scmp.ne.s32.totalorder %s113, %s116
      %p125 = scmp.eq.s32.totalorder %s18, 3
      %p126 = por %p124, %p125
      %p127 = scmp.ne.s32.totalorder %s116, %s117
      %p128 = scmp.eq.s32.totalorder %s18, 0
      %p129 = por %p127, %p128
      %p130 = scmp.ne.s32.totalorder %s116, %s117
      %p131 = scmp.eq.s32.totalorder %s19, 3
      %p132 = por %p130, %p131
      %p134 = scmp.ne.s32.totalorder %s117, %s133
      %p135 = scmp.eq.s32.totalorder %s19, 0
      %p136 = por %p134, %p135
      %s138 = sadd.s32 %s137, 1
      %p141 = scmp.eq.s32.totalorder %s13, 3
      %p142 = scmp.ne.s32.totalorder %s137, %s139
      %p143 = scmp.eq.s32.totalorder %s13, 0
      %p144 = por %p142, %p143
      %p145 = scmp.ne.s32.totalorder %s137, %s139
      %p146 = scmp.eq.s32.totalorder %s18, 3
      %p147 = por %p145, %p146
      %p148 = scmp.ne.s32.totalorder %s139, %s140
      %p149 = scmp.eq.s32.totalorder %s18, 0
      %p150 = por %p148, %p149
      %p151 = scmp.ne.s32.totalorder %s139, %s140
      %p152 = scmp.eq.s32.totalorder %s19, 3
      %p153 = por %p151, %p152
      %p155 = scmp.ne.s32.totalorder %s140, %s154
      %p156 = scmp.eq.s32.totalorder %s19, 0
      %p157 = por %p155, %p156
      %s159 = sadd.s32 %s158, 1
      %p162 = scmp.eq.s32.totalorder %s13, 3
      %p163 = scmp.ne.s32.totalorder %s158, %s160
      %p164 = scmp.eq.s32.totalorder %s13, 0
      %p165 = por %p163, %p164
      %p166 = scmp.ne.s32.totalorder %s158, %s160
      %p167 = scmp.eq.s32.totalorder %s18, 3
      %p168 = por %p166, %p167
      %p169 = scmp.ne.s32.totalorder %s160, %s161
      %p170 = scmp.eq.s32.totalorder %s18, 0
      %p171 = por %p169, %p170
      %p172 = scmp.ne.s32.totalorder %s160, %s161
      %p173 = scmp.eq.s32.totalorder %s19, 3
      %p174 = por %p172, %p173
      %p176 = scmp.ne.s32.totalorder %s161, %s175
      %p177 = scmp.eq.s32.totalorder %s19, 0
      %p178 = por %p176, %p177
      %s180 = sadd.s32 %s179, 1
      %p183 = scmp.eq.s32.totalorder %s13, 3
      %p184 = scmp.ne.s32.totalorder %s179, %s181
      %p185 = scmp.eq.s32.totalorder %s13, 0
      %p186 = por %p184, %p185
      %p187 = scmp.ne.s32.totalorder %s179, %s181
      %p188 = scmp.eq.s32.totalorder %s18, 3
      %p189 = por %p187, %p188
      %p190 = scmp.ne.s32.totalorder %s181, %s182
      %p191 = scmp.eq.s32.totalorder %s18, 0
      %p192 = por %p190, %p191
      %p193 = scmp.ne.s32.totalorder %s181, %s182
      %p194 = scmp.eq.s32.totalorder %s19, 3
      %p195 = por %p193, %p194
      %p197 = scmp.ne.s32.totalorder %s182, %s196
      %p198 = scmp.eq.s32.totalorder %s19, 0
      %p199 = por %p197, %p198
      %s200 = ssub.s32 %s20, %s32
      %p201 = scmp.eq.s32.totalorder %s200, 0
      %s203 = sadd.s32 %s202, 1
      %s204 = scalar_select %p201, %s202, %s203
      %p207 = pneg %p201
      %p208 = scmp.eq.s32.totalorder %s13, 3
      %p209 = por %p207, %p208
      %p210 = scmp.ne.s32.totalorder %s202, %s205
      %p211 = scmp.eq.s32.totalorder %s13, 0
      %p212 = por %p210, %p211
      %p213 = scmp.ne.s32.totalorder %s202, %s205
      %p214 = scmp.eq.s32.totalorder %s18, 3
      %p215 = por %p213, %p214
      %p216 = scmp.ne.s32.totalorder %s205, %s206
      %p217 = scmp.eq.s32.totalorder %s18, 0
      %p218 = por %p216, %p217
      %p219 = scmp.ne.s32.totalorder %s205, %s206
      %p220 = scmp.eq.s32.totalorder %s19, 3
      %p221 = por %p219, %p220
      %p223 = scmp.ne.s32.totalorder %s206, %s222
      %p224 = scmp.eq.s32.totalorder %s19, 0
      %p225 = por %p223, %p224
      %p226 = scmp.le.s32.totalorder 1, %s13
      %p227 = scmp.lt.s32.totalorder %s13, 5
      %p228 = pnand %p226, %p227
      %p229 = pneg %p228
      // Predicated region
      $region9: #{transformer_forward.14} parent=5 // pred_check
        _
      $region10: #{transformer_forward.14} parent=5 // pred_check_branch
        %231 = sbr.rel (%p228) target = $region12
      $region11: #{transformer_forward.14} parent=5 // pred_region
        %s232 = ssub.s32 %s13, 1
        // Predicated region
        $region13: #{transformer_forward.14} parent=11 // pred_check
          %p233 = pneg %p51
        $region14: #{transformer_forward.14} parent=11 // pred_check_branch
          %235 = sbr.rel (%p233) target = $region16
        $region15: #{transformer_forward.14} parent=11 // pred_region
          %s236 = smul.u32 2, %s22
          %p237 = scmp.lt.s32.totalorder %s236, 1
          %s238 = scalar_select %p237, %s236, 1
          %s239 = smul.addr %s238, 4
          %s240 = scalar_lea.vmem %s0, %s239
          %s241 = smul.u32 2, %s22
        $region16: #{transformer_forward.14} parent=11 // pred_fallthru
          _
        // Predicated region
        $region17: #{transformer_forward.14} parent=11 // pred_check
          %p242 = pneg %p150
        $region18: #{transformer_forward.14} parent=11 // pred_check_branch
          %244 = sbr.rel (%p242) target = $region20
        $region19: #{transformer_forward.14} parent=11 // pred_region
          _
        $region20: #{transformer_forward.14} parent=11 // pred_fallthru
          _
        // Predicated region
        $region21: #{transformer_forward.14} parent=11 // pred_check
          %p245 = pneg %p171
        $region22: #{transformer_forward.14} parent=11 // pred_check_branch
          %247 = sbr.rel (%p245) target = $region24
        $region23: #{transformer_forward.14} parent=11 // pred_region
          _
        $region24: #{transformer_forward.14} parent=11 // pred_fallthru
          _
        // Predicated region
        $region25: #{transformer_forward.14} parent=11 // pred_check
          %p248 = pneg %p192
        $region26: #{transformer_forward.14} parent=11 // pred_check_branch
          %250 = sbr.rel (%p248) target = $region28
        $region27: #{transformer_forward.14} parent=11 // pred_region
          _
        $region28: #{transformer_forward.14} parent=11 // pred_fallthru
          _
      $region12: #{transformer_forward.14} parent=5 // pred_fallthru
        _
      %p251 = scmp.lt.s32.totalorder %s13, 4
      // Predicated region
      $region29: #{transformer_forward.14} parent=5 // pred_check
        %p252 = pneg %p251
      $region30: #{transformer_forward.14} parent=5 // pred_check_branch
        %254 = sbr.rel (%p252) target = $region32
      $region31: #{transformer_forward.14} parent=5 // pred_region
        // Predicated region
        $region33: #{transformer_forward.14} parent=31 // pred_check
          %p255 = pneg %p71
        $region34: #{transformer_forward.14} parent=31 // pred_check_branch
          %257 = sbr.rel (%p255) target = $region36
        $region35: #{transformer_forward.14} parent=31 // pred_region
          %s258 = sand.u32 %s61, 1
          %s259 = sand.u32 %s61, 1
          %s260 = smul.addr %s259, 64
          %s261 = scalar_lea.vmem [#allocation3], %s260
          %s262 = smul.u32 4, %s21
          %s263 = smul.addr %s262, 4
          %s264 = scalar_lea.vmem %s1, %s263
          // Predicated region
          $region37: #{transformer_forward.14} parent=35 // pred_check
            _
          $region38: #{transformer_forward.14} parent=35 // pred_check_branch
            %266 = sbr.rel (0) target = $region40
          $region39: #{transformer_forward.14} parent=35 // pred_region
            // Predicated region
            $region41: #{transformer_forward.14} parent=39 // pred_check
              _
            $region42: #{transformer_forward.14} parent=39 // pred_check_branch
              %268 = sbr.rel (0) target = $region44
            $region43: #{transformer_forward.14} parent=39 // pred_region
              loop: start=0, step=1, limit=1
              $region45: #{transformer_forward.14} parent=43 // loop_pre_header
                _
              $region46: #{transformer_forward.14} parent=43 // loop_header
                %s270 = sphi 0, %s274
                %p271 = scmp.ge.s32.totalorder %s270, 1
                %s275 = sphi %s264, %s264
                %s276 = sphi %s261, %s261
              $region47: #{transformer_forward.14} parent=43 // loop_header_branch
                %273 = sbr.rel (%p271) target = $region51
              $region48: #{transformer_forward.14} parent=43 // loop_body
                %v277 = vld [vmem:[%s275] sm:$0xff]
                %278 = vst [vmem:[%s276] sm:$0xff] %v277
                %v279 = vld [vmem:[%s275 + $0x8] sm:$0xff]
                %280 = vst [vmem:[%s276 + $0x8] sm:$0xff] %v279
                %v281 = vld [vmem:[%s275 + $0x40] sm:$0xff]
                %282 = vst [vmem:[%s276 + $0x10] sm:$0xff] %v281
                %v283 = vld [vmem:[%s275 + $0x48] sm:$0xff]
                %284 = vst [vmem:[%s276 + $0x18] sm:$0xff] %v283
                %v285 = vld [vmem:[%s275 + $0x80] sm:$0xff]
                %286 = vst [vmem:[%s276 + $0x20] sm:$0xff] %v285
                %v287 = vld [vmem:[%s275 + $0x88] sm:$0xff]
                %288 = vst [vmem:[%s276 + $0x28] sm:$0xff] %v287
                %v289 = vld [vmem:[%s275 + $0xc0] sm:$0xff]
                %290 = vst [vmem:[%s276 + $0x30] sm:$0xff] %v289
                %v291 = vld [vmem:[%s275 + $0xc8] sm:$0xff]
                %292 = vst [vmem:[%s276 + $0x38] sm:$0xff] %v291
              $region49: #{transformer_forward.14} parent=43 // loop_footer
                %s274 = sadd.s32 1, %s270
              $region50: #{transformer_forward.14} parent=43 // loop_footer_branch
                %269 = sbr.rel target = $region46
              $region51: #{transformer_forward.14} parent=43 // loop_exit
                _
            $region44: #{transformer_forward.14} parent=39 // pred_fallthru
              _
            // Predicated region
            $region52: #{transformer_forward.14} parent=39 // pred_check
              _
            $region53: #{transformer_forward.14} parent=39 // pred_check_branch
              %294 = sbr.rel target = $region55
            $region54: #{transformer_forward.14} parent=39 // pred_region
              _
            $region55: #{transformer_forward.14} parent=39 // pred_fallthru
              _
          $region40: #{transformer_forward.14} parent=35 // pred_fallthru
            _
          %295 = vnop
        $region36: #{transformer_forward.14} parent=31 // pred_fallthru
          _
        // Predicated region
        $region56: #{transformer_forward.14} parent=31 // pred_check
          %p296 = pneg %p97
        $region57: #{transformer_forward.14} parent=31 // pred_check_branch
          %298 = sbr.rel (%p296) target = $region59
        $region58: #{transformer_forward.14} parent=31 // pred_region
          %s299 = smul.u32 4, %s21
          %p300 = scmp.lt.s32.totalorder %s299, 15
          %s301 = scalar_select %p300, %s299, 15
          %s302 = scalar_lea.vmem %s2, %s301
          %s303 = smul.u32 4, %s21
        $region59: #{transformer_forward.14} parent=31 // pred_fallthru
          _
        // Predicated region
        $region60: #{transformer_forward.14} parent=31 // pred_check
          %p304 = pneg %p123
        $region61: #{transformer_forward.14} parent=31 // pred_check_branch
          %306 = sbr.rel (%p304) target = $region63
        $region62: #{transformer_forward.14} parent=31 // pred_region
          %s307 = smul.u32 64, %s21
          %p308 = scmp.lt.s32.totalorder %s307, 255
          %s309 = scalar_select %p308, %s307, 255
          %s310 = smul.addr %s309, 4
          %s311 = scalar_lea.vmem %s3, %s310
          %s312 = smul.u32 64, %s21
        $region63: #{transformer_forward.14} parent=31 // pred_fallthru
          _
      $region32: #{transformer_forward.14} parent=5 // pred_fallthru
        _
      %p313 = scmp.le.s32.totalorder 1, %s13
      %p314 = scmp.lt.s32.totalorder %s13, 5
      %p315 = pnand %p313, %p314
      %p316 = pneg %p315
      // Predicated region
      $region64: #{transformer_forward.14} parent=5 // pred_check
        _
      $region65: #{transformer_forward.14} parent=5 // pred_check_branch
        %318 = sbr.rel (%p315) target = $region67
      $region66: #{transformer_forward.14} parent=5 // pred_region
        %s319 = ssub.s32 %s13, 1
        %s320 = sand.u32 %s64, 1
        %s321 = sand.u32 %s64, 1
        %s322 = smul.addr %s321, 64
        %s323 = scalar_lea.vmem [#allocation3], %s322
        // Predicated region
        $region68: #{transformer_forward.14} parent=66 // pred_check
          %p324 = pneg %p77
        $region69: #{transformer_forward.14} parent=66 // pred_check_branch
          %326 = sbr.rel (%p324) target = $region71
        $region70: #{transformer_forward.14} parent=66 // pred_region
          _
        $region71: #{transformer_forward.14} parent=66 // pred_fallthru
          _
        %s327 = smul.u32 2, %s22
        %p328 = scmp.lt.s32.totalorder %s327, 1
        %s329 = scalar_select %p328, %s327, 1
        %s330 = smul.addr %s329, 4
        %s331 = scalar_lea.vmem %s0, %s330
        %p332 = pneg %p51
        %p333 = pneg %p48
        %s334 = sand.u32 %s64, 1
        %s335 = sand.u32 %s64, 1
        %s336 = smul.addr %s335, 64
        %s337 = scalar_lea.vmem [#allocation3], %s336
        %p338 = pneg %p77
        %p339 = pneg %p74
        %s340 = smul.u32 4, %s23
        %p341 = scmp.lt.s32.totalorder %s340, 15
        %s342 = scalar_select %p341, %s340, 15
        %s343 = scalar_lea.vmem %s2, %s342
        %p344 = pneg %p103
        %p345 = pneg %p100
        %s346 = smul.u32 64, %s23
        %p347 = scmp.lt.s32.totalorder %s346, 255
        %s348 = scalar_select %p347, %s346, 255
        %s349 = smul.addr %s348, 4
        %s350 = scalar_lea.vmem %s3, %s349
        %p351 = pneg %p129
        %p352 = pneg %p126
        %p353 = pneg %p150
        %p354 = pneg %p147
        %p355 = pneg %p171
        %p356 = pneg %p168
        %p357 = pneg %p192
        %p358 = pneg %p189
        %p359 = pneg %p218
        %p360 = pneg %p215
        %s361 = smul.u32 2, %s22
        %p362 = scmp.lt.s32.totalorder %s361, 1
        %s363 = scalar_select %p362, %s361, 1
        %s364 = smul.addr %s363, 4
        %s365 = scalar_lea.vmem %s7, %s364
        %s366 = smul.u32 2, %s22
        %p367 = scmp.lt.s32.totalorder %s366, 1
        %s368 = scalar_select %p367, %s366, 1
        %s369 = smul.addr %s368, 4
        %s370 = scalar_lea.vmem %s0, %s369
        %s371 = smul.u32 2, %s22
        %s372 = smul.u32 4, %s23
        %s373 = smul.u32 4, %s23
        %p374 = scmp.lt.s32.totalorder %s373, 15
        %s375 = scalar_select %p374, %s373, 15
        %s376 = scalar_lea.vmem %s2, %s375
        %s377 = smul.u32 4, %s23
        %s378 = smul.u32 64, %s23
        %p379 = scmp.lt.s32.totalorder %s378, 255
        %s380 = scalar_select %p379, %s378, 255
        %s381 = smul.addr %s380, 4
        %s382 = scalar_lea.vmem %s3, %s381
        %s383 = smul.u32 64, %s23
        %s384 = smul.u32 2, %s22
        %p385 = scmp.lt.s32.totalorder %s384, 1
        %s386 = scalar_select %p385, %s384, 1
        %s387 = smul.addr %s386, 4
        %s388 = scalar_lea.vmem %s7, %s387
        %s389 = smul.u32 2, %s22
        %p391 = scmp.eq.s32.totalorder %s23, 0
        // Predicated region
        $region72: #{transformer_forward.14} parent=66 // pred_check
          %p392 = pneg %p391
        $region73: #{transformer_forward.14} parent=66 // pred_check_branch
          %394 = sbr.rel (%p392) target = $region75
        $region74: #{transformer_forward.14} parent=66 // pred_region
          %vm395 = vcmask 261120
          %396 = vst.msk [vmem:[#allocation2] sm:$0xff] %vm395, 0.0
          %397 = vst.msk [vmem:[#allocation2 + $0x8] sm:$0xff] %vm395, 0.0
        $region75: #{transformer_forward.14} parent=66 // pred_fallthru
          _
        %v398 = vld [vmem:[%s370] sm:$0xf]
        %v399 = vld [vmem:[%s370 + $0x4] sm:$0xf]
        %v400 = vld [vmem:[%s323] sm:$0xff]
        %v401 = vld [vmem:[%s323 + $0x8] sm:$0xff]
        %v402 = vld [vmem:[%s323 + $0x10] sm:$0xff]
        %v403 = vld [vmem:[%s323 + $0x18] sm:$0xff]
        %v404 = vld [vmem:[%s323 + $0x20] sm:$0xff]
        %v405 = vld [vmem:[%s323 + $0x28] sm:$0xff]
        %v406 = vld [vmem:[%s323 + $0x30] sm:$0xff]
        %v407 = vld [vmem:[%s323 + $0x38] sm:$0xff]
        %v408 = vld [vmem:[%s376] sm:$0xf]
        %v410 = vlaneseq
        %v411 = vshrl.u32 %v410, 7
        %v412 = vsub.s32 0, %v411
        %v413 = vrot.slane %v408, %v412
        %v414 = vlaneseq
        %v415 = vshrl.u32 %v414, 7
        %v416 = vsub.s32 1, %v415
        %v417 = vrot.slane %v408, %v416
        %v418 = vlaneseq
        %v419 = vshrl.u32 %v418, 7
        %v420 = vsub.s32 2, %v419
        %v421 = vrot.slane %v408, %v420
        %v422 = vlaneseq
        %v423 = vshrl.u32 %v422, 7
        %v424 = vsub.s32 3, %v423
        %v425 = vrot.slane %v408, %v424
        %v432 = vunpack.c.l.b16 %v398
        %v433 = vunpack.c.l.b16 %v399
        %v434 = vpack.c.b16 %v433, %v432
        %v443 = vunpack.c.l.b16 %v400
        %v444 = vunpack.c.h.b16 %v400
        %v445 = vunpack.c.l.b16 %v401
        %v446 = vunpack.c.h.b16 %v401
        %v447 = vunpack.c.l.b16 %v402
        %v448 = vunpack.c.h.b16 %v402
        %v449 = vunpack.c.l.b16 %v403
        %v450 = vunpack.c.h.b16 %v403
        %v451 = vunpack.c.l.b16 %v404
        %v452 = vunpack.c.h.b16 %v404
        %v453 = vunpack.c.l.b16 %v405
        %v454 = vunpack.c.h.b16 %v405
        %v455 = vunpack.c.l.b16 %v406
        %v456 = vunpack.c.h.b16 %v406
        %v457 = vunpack.c.l.b16 %v407
        %v458 = vunpack.c.h.b16 %v407
        %v459 = vpack.c.b16 %v447, %v443
        %v460 = vpack.c.b16 %v448, %v444
        %v461 = vpack.c.b16 %v449, %v445
        %v462 = vpack.c.b16 %v450, %v446
        %v463 = vpack.c.b16 %v455, %v451
        %v464 = vpack.c.b16 %v456, %v452
        %v465 = vpack.c.b16 %v457, %v453
        %v466 = vpack.c.b16 %v458, %v454
        %vm475 = vcmask 261120
        %v477 = vsel %vm475, %v434, 0
        %479 = vmatprep.subr.bf16.mxu0 %v460
        %480 = vmatpush1.bf16.msra.mxu0 %v459
        %481 = vmatprep.subr.bf16.mxu0 %v464
        %482 = vmatpush1.bf16.msra.mxu0 %v463
        %483 = vmatprep.subr.bf16.mxu0 0
        %484 = vmatpush1.bf16.msra.mxu0 0
        %485 = vmatprep.subr.bf16.mxu0 0
        %486 = vmatpush1.bf16.msra.mxu0 0
        %487 = vmatprep.subr.bf16.mxu0 0
        %488 = vmatpush1.bf16.msra.mxu0 0
        %489 = vmatprep.subr.bf16.mxu0 0
        %490 = vmatpush1.bf16.msra.mxu0 0
        %491 = vmatprep.subr.bf16.mxu0 0
        %492 = vmatpush1.bf16.msra.mxu0 0
        %493 = vmatprep.subr.bf16.mxu0 0
        %494 = vmatpush1.bf16.msra.mxu0 0
        %495 = vmatprep.subr.bf16.mxu0 0
        %496 = vmatpush1.bf16.msra.mxu0 0
        %497 = vmatprep.subr.bf16.mxu0 0
        %498 = vmatpush1.bf16.msra.mxu0 0
        %499 = vmatprep.subr.bf16.mxu0 0
        %500 = vmatpush1.bf16.msra.mxu0 0
        %501 = vmatprep.subr.bf16.mxu0 0
        %502 = vmatpush1.bf16.msra.mxu0 0
        %503 = vmatprep.subr.bf16.mxu0 0
        %504 = vmatpush1.bf16.msra.mxu0 0
        %505 = vmatprep.subr.bf16.mxu0 0
        %506 = vmatpush1.bf16.msra.mxu0 0
        %507 = vmatprep.subr.bf16.mxu0 0
        %508 = vmatpush1.bf16.msra.mxu0 0
        %509 = vmatprep.subr.bf16.mxu0 0
        %510 = vmatpush1.bf16.msra.mxu0 0
        %511 = vmatprep.mubr.bf16.mxu0 0
        %512 = vmatmul.mubr.bf16.gmra.mrb[0].mxu0 %v477
        %v513 = vpop.f32.mrb[0].mxu0
        %v514 = vadd.f32 %v413, %v513
        %v515 = vpop.f32.mrb[0].mxu0
        %v516 = vadd.f32 %v417, %v515
        %v517 = vpop.f32.mrb[0].mxu0
        %v518 = vadd.f32 %v413, %v517
        %v519 = vpop.f32.mrb[0].mxu0
        %v520 = vadd.f32 %v417, %v519
        %521 = vdwg.mxu0
        %522 = vmatprep.subr.bf16.mxu0 %v462
        %523 = vmatpush1.bf16.msra.mxu0 %v461
        %524 = vmatprep.subr.bf16.mxu0 %v466
        %525 = vmatpush1.bf16.msra.mxu0 %v465
        %526 = vmatprep.subr.bf16.mxu0 0
        %527 = vmatpush1.bf16.msra.mxu0 0
        %528 = vmatprep.subr.bf16.mxu0 0
        %529 = vmatpush1.bf16.msra.mxu0 0
        %530 = vmatprep.subr.bf16.mxu0 0
        %531 = vmatpush1.bf16.msra.mxu0 0
        %532 = vmatprep.subr.bf16.mxu0 0
        %533 = vmatpush1.bf16.msra.mxu0 0
        %534 = vmatprep.subr.bf16.mxu0 0
        %535 = vmatpush1.bf16.msra.mxu0 0
        %536 = vmatprep.subr.bf16.mxu0 0
        %537 = vmatpush1.bf16.msra.mxu0 0
        %538 = vmatprep.subr.bf16.mxu0 0
        %539 = vmatpush1.bf16.msra.mxu0 0
        %540 = vmatprep.subr.bf16.mxu0 0
        %541 = vmatpush1.bf16.msra.mxu0 0
        %542 = vmatprep.subr.bf16.mxu0 0
        %543 = vmatpush1.bf16.msra.mxu0 0
        %544 = vmatprep.subr.bf16.mxu0 0
        %545 = vmatpush1.bf16.msra.mxu0 0
        %546 = vmatprep.subr.bf16.mxu0 0
        %547 = vmatpush1.bf16.msra.mxu0 0
        %548 = vmatprep.subr.bf16.mxu0 0
        %549 = vmatpush1.bf16.msra.mxu0 0
        %550 = vmatprep.subr.bf16.mxu0 0
        %551 = vmatpush1.bf16.msra.mxu0 0
        %552 = vmatprep.subr.bf16.mxu0 0
        %553 = vmatpush1.bf16.msra.mxu0 0
        %554 = vmatprep.mubr.bf16.mxu0 0
        %555 = vmatmul.mubr.bf16.gmra.mrb[0].mxu0 %v477
        %v556 = vpop.f32.mrb[0].mxu0
        %v557 = vadd.f32 %v421, %v556
        %v558 = vpop.f32.mrb[0].mxu0
        %v559 = vadd.f32 %v425, %v558
        %v560 = vpop.f32.mrb[0].mxu0
        %v561 = vadd.f32 %v421, %v560
        %v562 = vpop.f32.mrb[0].mxu0
        %v563 = vadd.f32 %v425, %v562
        %564 = vdwg.mxu0
        %v565 = vmax.f32 %v514, 0.0
        %v566 = vmax.f32 %v516, 0.0
        %v567 = vmax.f32 %v557, 0.0
        %v568 = vmax.f32 %v559, 0.0
        %v569 = vmax.f32 %v518, 0.0
        %v570 = vmax.f32 %v520, 0.0
        %v571 = vmax.f32 %v561, 0.0
        %v572 = vmax.f32 %v563, 0.0
        %v573 = vld [vmem:[#allocation2] sm:$0xff]
        %v574 = vld [vmem:[#allocation2 + $0x8] sm:$0xff]
        %v575 = vpack.c.bf16 %v569, %v565
        %v576 = vpack.c.bf16 %v570, %v566
        %v577 = vpack.c.bf16 %v571, %v567
        %v578 = vpack.c.bf16 %v572, %v568
        %v579 = vld [vmem:[%s382] sm:$0xf]
        %v580 = vld [vmem:[%s382 + $0x4] sm:$0xf]
        %v581 = vld [vmem:[%s382 + $0x8] sm:$0xf]
        %v582 = vld [vmem:[%s382 + $0xc] sm:$0xf]
        %v583 = vld [vmem:[%s382 + $0x10] sm:$0xf]
        %v584 = vld [vmem:[%s382 + $0x14] sm:$0xf]
        %v585 = vld [vmem:[%s382 + $0x18] sm:$0xf]
        %v586 = vld [vmem:[%s382 + $0x1c] sm:$0xf]
        %v587 = vld [vmem:[%s382 + $0x20] sm:$0xf]
        %v588 = vld [vmem:[%s382 + $0x24] sm:$0xf]
        %v589 = vld [vmem:[%s382 + $0x28] sm:$0xf]
        %v590 = vld [vmem:[%s382 + $0x2c] sm:$0xf]
        %v591 = vld [vmem:[%s382 + $0x30] sm:$0xf]
        %v592 = vld [vmem:[%s382 + $0x34] sm:$0xf]
        %v593 = vld [vmem:[%s382 + $0x38] sm:$0xf]
        %v594 = vld [vmem:[%s382 + $0x3c] sm:$0xf]
        %v595 = vld [vmem:[%s382 + $0x40] sm:$0xf]
        %v596 = vld [vmem:[%s382 + $0x44] sm:$0xf]
        %v597 = vld [vmem:[%s382 + $0x48] sm:$0xf]
        %v598 = vld [vmem:[%s382 + $0x4c] sm:$0xf]
        %v599 = vld [vmem:[%s382 + $0x50] sm:$0xf]
        %v600 = vld [vmem:[%s382 + $0x54] sm:$0xf]
        %v601 = vld [vmem:[%s382 + $0x58] sm:$0xf]
        %v602 = vld [vmem:[%s382 + $0x5c] sm:$0xf]
        %v603 = vld [vmem:[%s382 + $0x60] sm:$0xf]
        %v604 = vld [vmem:[%s382 + $0x64] sm:$0xf]
        %v605 = vld [vmem:[%s382 + $0x68] sm:$0xf]
        %v606 = vld [vmem:[%s382 + $0x6c] sm:$0xf]
        %v607 = vld [vmem:[%s382 + $0x70] sm:$0xf]
        %v608 = vld [vmem:[%s382 + $0x74] sm:$0xf]
        %v609 = vld [vmem:[%s382 + $0x78] sm:$0xf]
        %v610 = vld [vmem:[%s382 + $0x7c] sm:$0xf]
        %v611 = vld [vmem:[%s382 + $0x80] sm:$0xf]
        %v612 = vld [vmem:[%s382 + $0x84] sm:$0xf]
        %v613 = vld [vmem:[%s382 + $0x88] sm:$0xf]
        %v614 = vld [vmem:[%s382 + $0x8c] sm:$0xf]
        %v615 = vld [vmem:[%s382 + $0x90] sm:$0xf]
        %v616 = vld [vmem:[%s382 + $0x94] sm:$0xf]
        %v617 = vld [vmem:[%s382 + $0x98] sm:$0xf]
        %v618 = vld [vmem:[%s382 + $0x9c] sm:$0xf]
        %v619 = vld [vmem:[%s382 + $0xa0] sm:$0xf]
        %v620 = vld [vmem:[%s382 + $0xa4] sm:$0xf]
        %v621 = vld [vmem:[%s382 + $0xa8] sm:$0xf]
        %v622 = vld [vmem:[%s382 + $0xac] sm:$0xf]
        %v623 = vld [vmem:[%s382 + $0xb0] sm:$0xf]
        %v624 = vld [vmem:[%s382 + $0xb4] sm:$0xf]
        %v625 = vld [vmem:[%s382 + $0xb8] sm:$0xf]
        %v626 = vld [vmem:[%s382 + $0xbc] sm:$0xf]
        %v627 = vld [vmem:[%s382 + $0xc0] sm:$0xf]
        %v628 = vld [vmem:[%s382 + $0xc4] sm:$0xf]
        %v629 = vld [vmem:[%s382 + $0xc8] sm:$0xf]
        %v630 = vld [vmem:[%s382 + $0xcc] sm:$0xf]
        %v631 = vld [vmem:[%s382 + $0xd0] sm:$0xf]
        %v632 = vld [vmem:[%s382 + $0xd4] sm:$0xf]
        %v633 = vld [vmem:[%s382 + $0xd8] sm:$0xf]
        %v634 = vld [vmem:[%s382 + $0xdc] sm:$0xf]
        %v635 = vld [vmem:[%s382 + $0xe0] sm:$0xf]
        %v636 = vld [vmem:[%s382 + $0xe4] sm:$0xf]
        %v637 = vld [vmem:[%s382 + $0xe8] sm:$0xf]
        %v638 = vld [vmem:[%s382 + $0xec] sm:$0xf]
        %v639 = vld [vmem:[%s382 + $0xf0] sm:$0xf]
        %v640 = vld [vmem:[%s382 + $0xf4] sm:$0xf]
        %v641 = vld [vmem:[%s382 + $0xf8] sm:$0xf]
        %v642 = vld [vmem:[%s382 + $0xfc] sm:$0xf]
        %v707 = vunpack.c.l.b16 %v579
        %v708 = vunpack.c.l.b16 %v580
        %v709 = vunpack.c.l.b16 %v581
        %v710 = vunpack.c.l.b16 %v582
        %v711 = vunpack.c.l.b16 %v583
        %v712 = vunpack.c.l.b16 %v584
        %v713 = vunpack.c.l.b16 %v585
        %v714 = vunpack.c.l.b16 %v586
        %v715 = vunpack.c.l.b16 %v587
        %v716 = vunpack.c.l.b16 %v588
        %v717 = vunpack.c.l.b16 %v589
        %v718 = vunpack.c.l.b16 %v590
        %v719 = vunpack.c.l.b16 %v591
        %v720 = vunpack.c.l.b16 %v592
        %v721 = vunpack.c.l.b16 %v593
        %v722 = vunpack.c.l.b16 %v594
        %v723 = vunpack.c.l.b16 %v595
        %v724 = vunpack.c.l.b16 %v596
        %v725 = vunpack.c.l.b16 %v597
        %v726 = vunpack.c.l.b16 %v598
        %v727 = vunpack.c.l.b16 %v599
        %v728 = vunpack.c.l.b16 %v600
        %v729 = vunpack.c.l.b16 %v601
        %v730 = vunpack.c.l.b16 %v602
        %v731 = vunpack.c.l.b16 %v603
        %v732 = vunpack.c.l.b16 %v604
        %v733 = vunpack.c.l.b16 %v605
        %v734 = vunpack.c.l.b16 %v606
        %v735 = vunpack.c.l.b16 %v607
        %v736 = vunpack.c.l.b16 %v608
        %v737 = vunpack.c.l.b16 %v609
        %v738 = vunpack.c.l.b16 %v610
        %v739 = vunpack.c.l.b16 %v611
        %v740 = vunpack.c.l.b16 %v612
        %v741 = vunpack.c.l.b16 %v613
        %v742 = vunpack.c.l.b16 %v614
        %v743 = vunpack.c.l.b16 %v615
        %v744 = vunpack.c.l.b16 %v616
        %v745 = vunpack.c.l.b16 %v617
        %v746 = vunpack.c.l.b16 %v618
        %v747 = vunpack.c.l.b16 %v619
        %v748 = vunpack.c.l.b16 %v620
        %v749 = vunpack.c.l.b16 %v621
        %v750 = vunpack.c.l.b16 %v622
        %v751 = vunpack.c.l.b16 %v623
        %v752 = vunpack.c.l.b16 %v624
        %v753 = vunpack.c.l.b16 %v625
        %v754 = vunpack.c.l.b16 %v626
        %v755 = vunpack.c.l.b16 %v627
        %v756 = vunpack.c.l.b16 %v628
        %v757 = vunpack.c.l.b16 %v629
        %v758 = vunpack.c.l.b16 %v630
        %v759 = vunpack.c.l.b16 %v631
        %v760 = vunpack.c.l.b16 %v632
        %v761 = vunpack.c.l.b16 %v633
        %v762 = vunpack.c.l.b16 %v634
        %v763 = vunpack.c.l.b16 %v635
        %v764 = vunpack.c.l.b16 %v636
        %v765 = vunpack.c.l.b16 %v637
        %v766 = vunpack.c.l.b16 %v638
        %v767 = vunpack.c.l.b16 %v639
        %v768 = vunpack.c.l.b16 %v640
        %v769 = vunpack.c.l.b16 %v641
        %v770 = vunpack.c.l.b16 %v642
        %v771 = vpack.c.b16 %v708, %v707
        %v772 = vpack.c.b16 %v710, %v709
        %v773 = vpack.c.b16 %v712, %v711
        %v774 = vpack.c.b16 %v714, %v713
        %v775 = vpack.c.b16 %v716, %v715
        %v776 = vpack.c.b16 %v718, %v717
        %v777 = vpack.c.b16 %v720, %v719
        %v778 = vpack.c.b16 %v722, %v721
        %v779 = vpack.c.b16 %v724, %v723
        %v780 = vpack.c.b16 %v726, %v725
        %v781 = vpack.c.b16 %v728, %v727
        %v782 = vpack.c.b16 %v730, %v729
        %v783 = vpack.c.b16 %v732, %v731
        %v784 = vpack.c.b16 %v734, %v733
        %v785 = vpack.c.b16 %v736, %v735
        %v786 = vpack.c.b16 %v738, %v737
        %v787 = vpack.c.b16 %v740, %v739
        %v788 = vpack.c.b16 %v742, %v741
        %v789 = vpack.c.b16 %v744, %v743
        %v790 = vpack.c.b16 %v746, %v745
        %v791 = vpack.c.b16 %v748, %v747
        %v792 = vpack.c.b16 %v750, %v749
        %v793 = vpack.c.b16 %v752, %v751
        %v794 = vpack.c.b16 %v754, %v753
        %v795 = vpack.c.b16 %v756, %v755
        %v796 = vpack.c.b16 %v758, %v757
        %v797 = vpack.c.b16 %v760, %v759
        %v798 = vpack.c.b16 %v762, %v761
        %v799 = vpack.c.b16 %v764, %v763
        %v800 = vpack.c.b16 %v766, %v765
        %v801 = vpack.c.b16 %v768, %v767
        %v802 = vpack.c.b16 %v770, %v769
        %835 = vmatprep.subr.bf16.mxu0 0
        %836 = vmatpush1.bf16.msra.mxu0 %v771
        %837 = vmatprep.subr.bf16.mxu0 0
        %838 = vmatpush1.bf16.msra.mxu0 %v772
        %839 = vmatprep.subr.bf16.mxu0 0
        %840 = vmatpush1.bf16.msra.mxu0 %v773
        %841 = vmatprep.subr.bf16.mxu0 0
        %842 = vmatpush1.bf16.msra.mxu0 %v774
        %843 = vmatprep.subr.bf16.mxu0 0
        %844 = vmatpush1.bf16.msra.mxu0 %v775
        %845 = vmatprep.subr.bf16.mxu0 0
        %846 = vmatpush1.bf16.msra.mxu0 %v776
        %847 = vmatprep.subr.bf16.mxu0 0
        %848 = vmatpush1.bf16.msra.mxu0 %v777
        %849 = vmatprep.subr.bf16.mxu0 0
        %850 = vmatpush1.bf16.msra.mxu0 %v778
        %851 = vmatprep.subr.bf16.mxu0 0
        %852 = vmatpush1.bf16.msra.mxu0 %v779
        %853 = vmatprep.subr.bf16.mxu0 0
        %854 = vmatpush1.bf16.msra.mxu0 %v780
        %855 = vmatprep.subr.bf16.mxu0 0
        %856 = vmatpush1.bf16.msra.mxu0 %v781
        %857 = vmatprep.subr.bf16.mxu0 0
        %858 = vmatpush1.bf16.msra.mxu0 %v782
        %859 = vmatprep.subr.bf16.mxu0 0
        %860 = vmatpush1.bf16.msra.mxu0 %v783
        %861 = vmatprep.subr.bf16.mxu0 0
        %862 = vmatpush1.bf16.msra.mxu0 %v784
        %863 = vmatprep.subr.bf16.mxu0 0
        %864 = vmatpush1.bf16.msra.mxu0 %v785
        %865 = vmatprep.subr.bf16.mxu0 0
        %866 = vmatpush1.bf16.msra.mxu0 %v786
        %867 = vmatprep.mubr.bf16.mxu0 %v576
        %868 = vmatmul.mubr.bf16.gmra.mrb[0].mxu0 %v575
        %v869 = vpop.f32.mrb[0].mxu0
        %v870 = vadd.f32 0.0, %v869
        %v871 = vpop.f32.mrb[0].mxu0
        %v872 = vpop.f32.mrb[0].mxu0
        %v873 = vadd.f32 0.0, %v872
        %v874 = vpop.f32.mrb[0].mxu0
        %875 = vdwg.mxu0
        %876 = vmatprep.subr.bf16.mxu0 0
        %877 = vmatpush1.bf16.msra.mxu0 %v787
        %878 = vmatprep.subr.bf16.mxu0 0
        %879 = vmatpush1.bf16.msra.mxu0 %v788
        %880 = vmatprep.subr.bf16.mxu0 0
        %881 = vmatpush1.bf16.msra.mxu0 %v789
        %882 = vmatprep.subr.bf16.mxu0 0
        %883 = vmatpush1.bf16.msra.mxu0 %v790
        %884 = vmatprep.subr.bf16.mxu0 0
        %885 = vmatpush1.bf16.msra.mxu0 %v791
        %886 = vmatprep.subr.bf16.mxu0 0
        %887 = vmatpush1.bf16.msra.mxu0 %v792
        %888 = vmatprep.subr.bf16.mxu0 0
        %889 = vmatpush1.bf16.msra.mxu0 %v793
        %890 = vmatprep.subr.bf16.mxu0 0
        %891 = vmatpush1.bf16.msra.mxu0 %v794
        %892 = vmatprep.subr.bf16.mxu0 0
        %893 = vmatpush1.bf16.msra.mxu0 %v795
        %894 = vmatprep.subr.bf16.mxu0 0
        %895 = vmatpush1.bf16.msra.mxu0 %v796
        %896 = vmatprep.subr.bf16.mxu0 0
        %897 = vmatpush1.bf16.msra.mxu0 %v797
        %898 = vmatprep.subr.bf16.mxu0 0
        %899 = vmatpush1.bf16.msra.mxu0 %v798
        %900 = vmatprep.subr.bf16.mxu0 0
        %901 = vmatpush1.bf16.msra.mxu0 %v799
        %902 = vmatprep.subr.bf16.mxu0 0
        %903 = vmatpush1.bf16.msra.mxu0 %v800
        %904 = vmatprep.subr.bf16.mxu0 0
        %905 = vmatpush1.bf16.msra.mxu0 %v801
        %906 = vmatprep.subr.bf16.mxu0 0
        %907 = vmatpush1.bf16.msra.mxu0 %v802
        %908 = vmatprep.mubr.bf16.mxu0 %v578
        %909 = vmatmul.mubr.bf16.gmra.mrb[0].mxu0 %v577
        %v910 = vpop.f32.mrb[0].mxu0
        %v911 = vadd.f32 %v870, %v910
        %v912 = vpop.f32.mrb[0].mxu0
        %v913 = vpop.f32.mrb[0].mxu0
        %v914 = vadd.f32 %v873, %v913
        %v915 = vpop.f32.mrb[0].mxu0
        %916 = vdwg.mxu0
        %v917 = vadd.f32 %v573, %v911
        %v918 = vadd.f32 %v574, %v914
        %919 = vst.msk [vmem:[#allocation2] sm:$0xff] %vm475, %v917
        %920 = vst.msk [vmem:[#allocation2 + $0x8] sm:$0xff] %vm475, %v918
        %p921 = scmp.eq.s32.totalorder %s23, 3
        // Predicated region
        $region76: #{transformer_forward.14} parent=66 // pred_check
          %p922 = pneg %p921
        $region77: #{transformer_forward.14} parent=66 // pred_check_branch
          %924 = sbr.rel (%p922) target = $region79
        $region78: #{transformer_forward.14} parent=66 // pred_region
          %v925 = vld [vmem:[#allocation2] sm:$0xff]
          %v926 = vld [vmem:[#allocation2 + $0x8] sm:$0xff]
          %v927 = vld [vmem:[%s4] sm:$0x1]
          %v929 = vlaneseq
          %v930 = vshrl.u32 %v929, 7
          %v931 = vsub.s32 0, %v930
          %v932 = vrot.slane %v927, %v931
          %v934 = vadd.f32 %v925, %v932
          %v935 = vadd.f32 %v926, %v932
          %v936 = vld [vmem:[%s370] sm:$0xf]
          %v937 = vld [vmem:[%s370 + $0x4] sm:$0xf]
          %v938 = vunpack.c.l.bf16 %v936
          %v939 = vunpack.c.l.bf16 %v937
          %v940 = vadd.f32 %v934, %v938
          %v941 = vadd.f32 %v935, %v939
          %v942 = vsel %vm475, %v940, 0.0
          %943 = vadd.xlane.f32.xlu0 %v942
          %v944 = vpop.xlane.xlu0 %943
          %v945 = vsel %vm475, %v941, 0.0
          %946 = vadd.xlane.f32.xlu0 %v945
          %v947 = vpop.xlane.xlu0 %946
          %v948 = vrcp.pop 32.0
          %v949 = vmul.f32 %v944, %v948
          %v950 = vmul.f32 %v947, %v948
          %v951 = vsub.f32 %v940, %v949
          %v952 = vsub.f32 %v941, %v950
          %v953 = vmul.f32 %v951, %v951
          %v954 = vmul.f32 %v952, %v952
          %v955 = vsel %vm475, %v953, 0.0
          %956 = vadd.xlane.f32.xlu0 %v955
          %v957 = vpop.xlane.xlu0 %956
          %v958 = vsel %vm475, %v954, 0.0
          %959 = vadd.xlane.f32.xlu0 %v958
          %v960 = vpop.xlane.xlu0 %959
          %v961 = vmul.f32 %v957, %v948
          %v962 = vmul.f32 %v960, %v948
          %v963 = vadd.f32 %v961, 1e-05
          %v964 = vadd.f32 %v962, 1e-05
          %v965 = vrsqrt.pop %v963
          %v966 = vrsqrt.pop %v964
          %v967 = vmul.f32 %v951, %v965
          %v968 = vmul.f32 %v952, %v966
          %v969 = vld [vmem:[%s5] sm:$0x1]
          %v971 = vlaneseq
          %v972 = vshrl.u32 %v971, 7
          %v973 = vsub.s32 0, %v972
          %v974 = vrot.slane %v969, %v973
          %v976 = vmul.f32 %v967, %v974
          %v977 = vmul.f32 %v968, %v974
          %v978 = vld [vmem:[%s6] sm:$0x1]
          %v980 = vlaneseq
          %v981 = vshrl.u32 %v980, 7
          %v982 = vsub.s32 0, %v981
          %v983 = vrot.slane %v978, %v982
          %v985 = vadd.f32 %v976, %v983
          %v986 = vadd.f32 %v977, %v983
          %v987 = vpack.c.bf16 %v986, %v985
          %v989 = vunpack.c.l.b16 %v987
          %v990 = vunpack.c.h.b16 %v987
          %v991 = vpack.c.b16 %v989, %v989
          %v992 = vpack.c.b16 %v990, %v990
          %vm995 = vcmask 257024
          %996 = vst.msk [vmem:[%s388] sm:$0xf] %vm995, %v991
          %997 = vst.msk [vmem:[%s388 + $0x4] sm:$0xf] %vm995, %v992
        $region79: #{transformer_forward.14} parent=66 // pred_fallthru
          _
        %s998 = smul.u32 2, %s22
        %p999 = scmp.lt.s32.totalorder %s998, 1
        %s1000 = scalar_select %p999, %s998, 1
        %s1001 = smul.addr %s1000, 4
        %s1002 = scalar_lea.vmem %s7, %s1001
        // Predicated region
        $region80: #{transformer_forward.14} parent=66 // pred_check
          %p1003 = pneg %p215
        $region81: #{transformer_forward.14} parent=66 // pred_check_branch
          %1005 = sbr.rel (%p1003) target = $region83
        $region82: #{transformer_forward.14} parent=66 // pred_region
          %s1006 = smul.u32 2, %s22
        $region83: #{transformer_forward.14} parent=66 // pred_fallthru
          _
        // Predicated region
        $region84: #{transformer_forward.14} parent=66 // pred_check
          %p1007 = pneg %p215
        $region85: #{transformer_forward.14} parent=66 // pred_check_branch
          %1009 = sbr.rel (%p1007) target = $region87
        $region86: #{transformer_forward.14} parent=66 // pred_region
          %s1010 = smul.u32 2, %s22
          %p1011 = scmp.lt.s32.totalorder %s1010, 1
          %s1012 = scalar_select %p1011, %s1010, 1
          %s1013 = smul.addr %s1012, 4
          %s1014 = scalar_lea.vmem %s7, %s1013
        $region87: #{transformer_forward.14} parent=66 // pred_fallthru
          _
      $region67: #{transformer_forward.14} parent=5 // pred_fallthru
        _
      %p1015 = scmp.le.s32.totalorder 2, %s13
      // Predicated region
      $region88: #{transformer_forward.14} parent=5 // pred_check
        %p1016 = pneg %p1015
      $region89: #{transformer_forward.14} parent=5 // pred_check_branch
        %1018 = sbr.rel (%p1016) target = $region91
      $region90: #{transformer_forward.14} parent=5 // pred_region
        %s1019 = ssub.s32 %s13, 2
      $region91: #{transformer_forward.14} parent=5 // pred_fallthru
        _
    $region6: #{transformer_forward.14} parent=1 // loop_footer
      %s17 = sadd.s32 1, %s13
    $region7: #{transformer_forward.14} parent=1 // loop_footer_branch
      %12 = sbr.rel target = $region3
    $region8: #{transformer_forward.14} parent=1 // loop_exit
      _

</llo_original>
